<compile_context>
chip_gen: v6e
topology: v6e:2x2x1
jax: 0.10.0
libtpu: 0.0.40
codegen_flags: <defaults>
</compile_context>

<pallas_src>
import functools

import jax
import jax.numpy as jnp
from jax.experimental import pallas as pl
from jax.experimental.pallas import tpu as pltpu


def _round_up(x, m):
    return ((x + m - 1) // m) * m


def _safe_vmem_limit():
    # v5e/v6e: 128 MiB VMEM, v7x: 64 MiB per TensorCore -> never request >48 MiB.
    try:
        cap = int(pltpu.get_tpu_info().vmem_capacity_bytes)
    except Exception:  # conservative fallback if the query is unavailable
        cap = 64 * 1024 * 1024
    return int(min(cap * 3 // 4, 48 * 1024 * 1024))


_VMEM_LIMIT = _safe_vmem_limit()


# ---------------------------------------------------------------------------
# Fused matmul + bias + LeakyReLU (used by the conv layers via im2col)
# ---------------------------------------------------------------------------
def _mm_bias_act_kernel(x_ref, w_ref, b_ref, o_ref, *, apply_lrelu, slope):
    acc = jnp.dot(x_ref[...], w_ref[...], preferred_element_type=jnp.float32)
    acc = acc + b_ref[...]                      # (tm, N) + (1, N)
    if apply_lrelu:
        acc = jnp.where(acc >= 0, acc, slope * acc)
    o_ref[...] = acc.astype(o_ref.dtype)


def matmul_bias_act(x, w, b, *, apply_lrelu, slope=0.2, tm=512,
                    out_dtype=jnp.bfloat16):
    """y = [leaky_relu](x @ w + b), tiled over M on the MXU.

    M is padded only to a multiple of 8 (sublane granularity) when small;
    K is padded to a multiple of 32 so the weight's sublane layout is clean.
    """
    M, K = x.shape
    K2, N = w.shape
    assert K == K2, (K, K2)
    tm_eff = min(tm, _round_up(M, 8))
    Mp = _round_up(M, tm_eff)
    Kp = _round_up(K, 32)
    xp = jnp.pad(x, ((0, Mp - M), (0, Kp - K))) if (Mp != M or Kp != K) else x
    wp = jnp.pad(w, ((0, Kp - K), (0, 0))) if Kp != K else w
    out = pl.pallas_call(
        functools.partial(_mm_bias_act_kernel, apply_lrelu=apply_lrelu, slope=slope),
        out_shape=jax.ShapeDtypeStruct((Mp, N), out_dtype),
        grid=(Mp // tm_eff,),
        in_specs=[
            pl.BlockSpec((tm_eff, Kp), lambda i: (i, 0)),
            pl.BlockSpec((Kp, N), lambda i: (0, 0)),
            pl.BlockSpec((1, N), lambda i: (0, 0)),
        ],
        out_specs=pl.BlockSpec((tm_eff, N), lambda i: (i, 0)),
        compiler_params=pltpu.CompilerParams(
            dimension_semantics=("parallel",),
            vmem_limit_bytes=_VMEM_LIMIT,
        ),
    )(xp, wp, b.reshape(1, N))
    return out[:M] if Mp != M else out


# ---------------------------------------------------------------------------
# Fused FC head: leaky_relu(x @ w1 + b1) @ w2 + b2 in one kernel
# ---------------------------------------------------------------------------
def _fc_fused_kernel(x_ref, w1_ref, b1_ref, w2_ref, b2_ref, o_ref, acc_ref, *, slope):
    k = pl.program_id(1)

    @pl.when(k == 0)
    def _():
        acc_ref[...] = jnp.zeros_like(acc_ref)

    acc_ref[...] += jnp.dot(x_ref[...], w1_ref[...],
                            preferred_element_type=jnp.float32)

    @pl.when(k == pl.num_programs(1) - 1)
    def _():
        h = acc_ref[...] + b1_ref[...]                  # fc1 bias
        h = jnp.where(h >= 0, h, slope * h)             # LeakyReLU(0.2)
        logits = jnp.dot(h.astype(w2_ref.dtype), w2_ref[...],
                         preferred_element_type=jnp.float32)
        o_ref[...] = (logits + b2_ref[...]).astype(o_ref.dtype)


def fc_fused(x, w1, b1, w2, b2, *, slope=0.2, tm=128, tk=2048):
    """Fused fc1 (K-tiled with VMEM f32 accumulator) + LeakyReLU + fc2."""
    M, K = x.shape
    K1, H = w1.shape
    H2, N = w2.shape
    assert K == K1 and H == H2
    tm_eff = min(tm, _round_up(M, 8))
    Mp = _round_up(M, tm_eff)
    tk_eff = min(tk, _round_up(K, 256))
    Kp = _round_up(K, tk_eff)
    Np = _round_up(N, 128)                              # lane-dense output store
    xp = jnp.pad(x, ((0, Mp - M), (0, Kp - K))) if (Mp != M or Kp != K) else x
    w1p = jnp.pad(w1, ((0, Kp - K), (0, 0))) if Kp != K else w1
    w2p = jnp.pad(w2, ((0, 0), (0, Np - N))) if Np != N else w2
    b2p = jnp.pad(b2, (0, Np - N)) if Np != N else b2
    out = pl.pallas_call(
        functools.partial(_fc_fused_kernel, slope=slope),
        out_shape=jax.ShapeDtypeStruct((Mp, Np), jnp.float32),
        grid=(Mp // tm_eff, Kp // tk_eff),
        in_specs=[
            pl.BlockSpec((tm_eff, tk_eff), lambda i, k: (i, k)),
            pl.BlockSpec((tk_eff, H), lambda i, k: (k, 0)),
            pl.BlockSpec((1, H), lambda i, k: (0, 0)),
            pl.BlockSpec((H, Np), lambda i, k: (0, 0)),
            pl.BlockSpec((1, Np), lambda i, k: (0, 0)),
        ],
        out_specs=pl.BlockSpec((tm_eff, Np), lambda i, k: (i, 0)),
        scratch_shapes=[pltpu.VMEM((tm_eff, H), jnp.float32)],
        compiler_params=pltpu.CompilerParams(
            dimension_semantics=("parallel", "arbitrary"),
            vmem_limit_bytes=_VMEM_LIMIT,
        ),
    )(xp, w1p, b1.reshape(1, H), w2p, b2p.reshape(1, Np))
    return out[:M, :N]


# ---------------------------------------------------------------------------
# Conv layer = im2col (XLA glue) + fused Pallas matmul
# ---------------------------------------------------------------------------
def _im2col(x_nhwc, ksize=3, stride=2, pad=1):
    """Patch extraction (pure data movement, stays in XLA).

    # TODO(synk): for large batches, replace with an in-kernel gather
    # (pl.Element / scalar-prefetch row indexing) to avoid the 9x-inflated
    # HBM round-trip of the im2col matrix.
    """
    B, H, W, C = x_nhwc.shape
    xp = jnp.pad(x_nhwc, ((0, 0), (pad, pad), (pad, pad), (0, 0)))
    Ho = (H + 2 * pad - ksize) // stride + 1
    Wo = (W + 2 * pad - ksize) // stride + 1
    patches = []
    for kh in range(ksize):
        for kw in range(ksize):
            patches.append(
                xp[:, kh:kh + stride * Ho:stride, kw:kw + stride * Wo:stride, :]
            )
    cols = jnp.stack(patches, axis=3)            # (B, Ho, Wo, kh*kw, C)
    return cols.reshape(B * Ho * Wo, ksize * ksize * C), (B, Ho, Wo)


def conv2d_lrelu(x_nhwc, w_mat, b, *, ksize=3, stride=2, pad=1, slope=0.2):
    """Conv2d(kernel=3, stride=2, pad=1) + LeakyReLU(0.2).

    w_mat is pre-laid-out as (kh*kw*cin, cout) in (kh, kw, cin) column order.
    """
    cols, (B, Ho, Wo) = _im2col(x_nhwc, ksize=ksize, stride=stride, pad=pad)
    Cout = w_mat.shape[1]
    y = matmul_bias_act(cols, w_mat, b, apply_lrelu=True, slope=slope,
                        tm=512, out_dtype=jnp.bfloat16)
    return y.reshape(B, Ho, Wo, Cout)


# ---------------------------------------------------------------------------
# Parameters
# ---------------------------------------------------------------------------
def init_params(key, num_classes=4):
    """Random parameters in PyTorch-equivalent layout (Conv OIHW, Linear (in,out))."""
    ks = jax.random.split(key, 5)

    def w(k, shape, fan_in):
        return jax.random.normal(k, shape, jnp.float32) / jnp.sqrt(
            jnp.asarray(fan_in, jnp.float32))

    return {
        "c1_w": w(ks[0], (32, 3, 3, 3), 3 * 9),            # Conv2d(3, 32, 3, 2, 1)
        "c1_b": jnp.zeros((32,), jnp.float32),
        "c2_w": w(ks[1], (64, 32, 3, 3), 32 * 9),          # Conv2d(32, 64, 3, 2, 1)
        "c2_b": jnp.zeros((64,), jnp.float32),
        "c3_w": w(ks[2], (128, 64, 3, 3), 64 * 9),         # Conv2d(64, 128, 3, 2, 1)
        "c3_b": jnp.zeros((128,), jnp.float32),
        "fc1_w": w(ks[3], (128 * 8 * 8, 256), 128 * 8 * 8),  # Linear(8192, 256)
        "fc1_b": jnp.zeros((256,), jnp.float32),
        "fc2_w": w(ks[4], (256, num_classes), 256),          # Linear(256, num_classes)
        "fc2_b": jnp.zeros((num_classes,), jnp.float32),
    }


def prepare_params(params):
    """One-time layout prep: conv weights -> (kh*kw*cin, cout) matmul form,
    fc1 rows permuted from NCHW-flatten order to NHWC-flatten order (so the
    runtime NHWC->NCHW transpose before view(B,-1) disappears), bf16 MXU
    operands with f32 biases."""

    def conv_mat(w_oihw):
        cout, cin, kh, kw = w_oihw.shape
        return (jnp.transpose(w_oihw, (2, 3, 1, 0))
                .reshape(kh * kw * cin, cout).astype(jnp.bfloat16))

    c, h, w = 128, 8, 8
    hid = params["fc1_w"].shape[1]
    # W_new[(h*8 + w)*128 + c, :] = W_old[c*64 + h*8 + w, :]
    fc1_w = (params["fc1_w"].reshape(c, h, w, hid)
             .transpose(1, 2, 0, 3).reshape(c * h * w, hid))
    return {
        "c1_w": conv_mat(params["c1_w"]), "c1_b": params["c1_b"],
        "c2_w": conv_mat(params["c2_w"]), "c2_b": params["c2_b"],
        "c3_w": conv_mat(params["c3_w"]), "c3_b": params["c3_b"],
        "fc1_w": fc1_w.astype(jnp.bfloat16), "fc1_b": params["fc1_b"],
        "fc2_w": params["fc2_w"].astype(jnp.bfloat16), "fc2_b": params["fc2_b"],
    }


def discriminator_forward(prep, x_nchw):
    x = jnp.transpose(x_nchw, (0, 2, 3, 1)).astype(jnp.bfloat16)   # NCHW -> NHWC
    x = conv2d_lrelu(x, prep["c1_w"], prep["c1_b"])   # (B, 32, 32, 32)
    x = conv2d_lrelu(x, prep["c2_w"], prep["c2_b"])   # (B, 16, 16, 64)
    x = conv2d_lrelu(x, prep["c3_w"], prep["c3_b"])   # (B, 8, 8, 128)
    b = x.shape[0]
    x = x.reshape(b, -1)  # NHWC flatten; fc1_w rows were permuted to match torch view(B,-1)
    return fc_fused(x, prep["fc1_w"], prep["fc1_b"],
                    prep["fc2_w"], prep["fc2_b"])     # (B, num_classes) f32


if __name__ == "__main__":
    key = jax.random.PRNGKey(0)
    pkey, xkey = jax.random.split(key)
    params = init_params(pkey, num_classes=4)
    prep = prepare_params(params)
    # Spatial size must be 64x64: three stride-2 convs -> 8x8, matching the
    # hard-coded 128*8*8 input of the first Linear layer.
    x = jax.random.normal(xkey, (2, 3, 64, 64), jnp.float32)
    out = jax.jit(discriminator_forward)(prep, x)
    out = jax.block_until_ready(out)
    assert out.shape == (2, 4), out.shape
    print("KERNEL_OK")
</pallas_src>

<mosaic_0001>
module attributes {stable_mosaic.version = 11 : i64} {
  func.func @_mm_bias_act_kernel(%arg0: i32, %arg1: memref<512x32xbf16, #tpu.memory_space<vmem>>, %arg2: memref<32x32xbf16, #tpu.memory_space<vmem>>, %arg3: memref<1x32xf32, #tpu.memory_space<vmem>>, %arg4: memref<512x32xbf16, #tpu.memory_space<vmem>>) attributes {dimension_semantics = [#tpu.dimension_semantics<parallel>], iteration_bounds = array<i64: 4>, scalar_prefetch = 0 : i64, scratch_operands = 0 : i64, tpu.core_type = #tpu.core_type<tc>, window_params = [{transform_indices = @transform_0, window_bounds = array<i64: 512, 32>}, {pipeline_mode = #tpu.pipeline_mode<synchronous>, transform_indices = @transform_1, window_bounds = array<i64: 32, 32>}, {pipeline_mode = #tpu.pipeline_mode<synchronous>, transform_indices = @transform_2, window_bounds = array<i64: 1, 32>}, {transform_indices = @transform_3, window_bounds = array<i64: 512, 32>}]} {
    %c0 = arith.constant 0 : index
    %c0_0 = arith.constant 0 : index
    %0 = vector.load %arg1[%c0, %c0_0] : memref<512x32xbf16, #tpu.memory_space<vmem>>, vector<512x32xbf16>
    %c0_1 = arith.constant 0 : index
    %c0_2 = arith.constant 0 : index
    %1 = vector.load %arg2[%c0_1, %c0_2] : memref<32x32xbf16, #tpu.memory_space<vmem>>, vector<32x32xbf16>
    %cst = arith.constant dense<0.000000e+00> : vector<512x32xf32>
    %2 = tpu.matmul %0, %1, %cst {dimension_numbers = #tpu.dot_dimension_numbers<[1], [0], [0], [1], [0, 0, 1, 1], [], []>} : vector<512x32xbf16>, vector<32x32xbf16>, vector<512x32xf32> -> vector<512x32xf32>
    %c0_3 = arith.constant 0 : index
    %c0_4 = arith.constant 0 : index
    %3 = vector.load %arg3[%c0_3, %c0_4] : memref<1x32xf32, #tpu.memory_space<vmem>>, vector<1x32xf32>
    %4 = vector.broadcast %3 : vector<1x32xf32> to vector<512x32xf32>
    %5 = arith.addf %2, %4 : vector<512x32xf32>
    %cst_5 = arith.constant 0.000000e+00 : f32
    %6 = vector.broadcast %cst_5 : f32 to vector<512x32xf32>
    %7 = arith.cmpf oge, %5, %6 : vector<512x32xf32>
    %cst_6 = arith.constant 2.000000e-01 : f32
    %8 = vector.broadcast %cst_6 : f32 to vector<512x32xf32>
    %9 = arith.mulf %8, %5 : vector<512x32xf32>
    %10 = arith.select %7, %5, %9 : vector<512x32xi1>, vector<512x32xf32>
    %11 = arith.truncf %10 : vector<512x32xf32> to vector<512x32xbf16>
    %c0_7 = arith.constant 0 : index
    %c0_8 = arith.constant 0 : index
    %12 = vector.load %arg4[%c0_7, %c0_8] : memref<512x32xbf16, #tpu.memory_space<vmem>>, vector<512x32xbf16>
    tpu.vector_store %arg4[%c0_7, %c0_8], %11 {strides = array<i32>} : memref<512x32xbf16, #tpu.memory_space<vmem>>, vector<512x32xbf16>,
    return
  }
  func.func @transform_0(%arg0: i32) -> (i32, i32) {
    %c0_i32 = arith.constant 0 : i32
    %c0_i32_0 = arith.constant 0 : i32
    return %arg0, %c0_i32 : i32, i32
  }
  func.func @transform_1(%arg0: i32) -> (i32, i32) {
    %c0_i32 = arith.constant 0 : i32
    %c0_i32_0 = arith.constant 0 : i32
    %c0_i32_1 = arith.constant 0 : i32
    return %c0_i32, %c0_i32_0 : i32, i32
  }
  func.func @transform_2(%arg0: i32) -> (i32, i32) {
    %c0_i32 = arith.constant 0 : i32
    %c0_i32_0 = arith.constant 0 : i32
    %c0_i32_1 = arith.constant 0 : i32
    return %c0_i32, %c0_i32_0 : i32, i32
  }
  func.func @transform_3(%arg0: i32) -> (i32, i32) {
    %c0_i32 = arith.constant 0 : i32
    %c0_i32_0 = arith.constant 0 : i32
    return %arg0, %c0_i32 : i32, i32
  }
}

module attributes {stable_mosaic.version = 11 : i64} {
  func.func @_mm_bias_act_kernel(%arg0: i32, %arg1: memref<512x288xbf16, #tpu.memory_space<vmem>>, %arg2: memref<288x64xbf16, #tpu.memory_space<vmem>>, %arg3: memref<1x64xf32, #tpu.memory_space<vmem>>, %arg4: memref<512x64xbf16, #tpu.memory_space<vmem>>) attributes {dimension_semantics = [#tpu.dimension_semantics<parallel>], iteration_bounds = array<i64: 1>, scalar_prefetch = 0 : i64, scratch_operands = 0 : i64, tpu.core_type = #tpu.core_type<tc>, window_params = [{transform_indices = @transform_0, window_bounds = array<i64: 512, 288>}, {pipeline_mode = #tpu.pipeline_mode<synchronous>, transform_indices = @transform_1, window_bounds = array<i64: 288, 64>}, {pipeline_mode = #tpu.pipeline_mode<synchronous>, transform_indices = @transform_2, window_bounds = array<i64: 1, 64>}, {transform_indices = @transform_3, window_bounds = array<i64: 512, 64>}]} {
    %c0 = arith.constant 0 : index
    %c0_0 = arith.constant 0 : index
    %0 = vector.load %arg1[%c0, %c0_0] : memref<512x288xbf16, #tpu.memory_space<vmem>>, vector<512x288xbf16>
    %c0_1 = arith.constant 0 : index
    %c0_2 = arith.constant 0 : index
    %1 = vector.load %arg2[%c0_1, %c0_2] : memref<288x64xbf16, #tpu.memory_space<vmem>>, vector<288x64xbf16>
    %cst = arith.constant dense<0.000000e+00> : vector<512x64xf32>
    %2 = tpu.matmul %0, %1, %cst {dimension_numbers = #tpu.dot_dimension_numbers<[1], [0], [0], [1], [0, 0, 1, 1], [], []>} : vector<512x288xbf16>, vector<288x64xbf16>, vector<512x64xf32> -> vector<512x64xf32>
    %c0_3 = arith.constant 0 : index
    %c0_4 = arith.constant 0 : index
    %3 = vector.load %arg3[%c0_3, %c0_4] : memref<1x64xf32, #tpu.memory_space<vmem>>, vector<1x64xf32>
    %4 = vector.broadcast %3 : vector<1x64xf32> to vector<512x64xf32>
    %5 = arith.addf %2, %4 : vector<512x64xf32>
    %cst_5 = arith.constant 0.000000e+00 : f32
    %6 = vector.broadcast %cst_5 : f32 to vector<512x64xf32>
    %7 = arith.cmpf oge, %5, %6 : vector<512x64xf32>
    %cst_6 = arith.constant 2.000000e-01 : f32
    %8 = vector.broadcast %cst_6 : f32 to vector<512x64xf32>
    %9 = arith.mulf %8, %5 : vector<512x64xf32>
    %10 = arith.select %7, %5, %9 : vector<512x64xi1>, vector<512x64xf32>
    %11 = arith.truncf %10 : vector<512x64xf32> to vector<512x64xbf16>
    %c0_7 = arith.constant 0 : index
    %c0_8 = arith.constant 0 : index
    %12 = vector.load %arg4[%c0_7, %c0_8] : memref<512x64xbf16, #tpu.memory_space<vmem>>, vector<512x64xbf16>
    tpu.vector_store %arg4[%c0_7, %c0_8], %11 {strides = array<i32>} : memref<512x64xbf16, #tpu.memory_space<vmem>>, vector<512x64xbf16>,
    return
  }
  func.func @transform_0(%arg0: i32) -> (i32, i32) {
    %c0_i32 = arith.constant 0 : i32
    %c0_i32_0 = arith.constant 0 : i32
    return %arg0, %c0_i32 : i32, i32
  }
  func.func @transform_1(%arg0: i32) -> (i32, i32) {
    %c0_i32 = arith.constant 0 : i32
    %c0_i32_0 = arith.constant 0 : i32
    %c0_i32_1 = arith.constant 0 : i32
    return %c0_i32, %c0_i32_0 : i32, i32
  }
  func.func @transform_2(%arg0: i32) -> (i32, i32) {
    %c0_i32 = arith.constant 0 : i32
    %c0_i32_0 = arith.constant 0 : i32
    %c0_i32_1 = arith.constant 0 : i32
    return %c0_i32, %c0_i32_0 : i32, i32
  }
  func.func @transform_3(%arg0: i32) -> (i32, i32) {
    %c0_i32 = arith.constant 0 : i32
    %c0_i32_0 = arith.constant 0 : i32
    return %arg0, %c0_i32 : i32, i32
  }
}

module attributes {stable_mosaic.version = 11 : i64} {
  func.func @_mm_bias_act_kernel(%arg0: i32, %arg1: memref<128x576xbf16, #tpu.memory_space<vmem>>, %arg2: memref<576x128xbf16, #tpu.memory_space<vmem>>, %arg3: memref<1x128xf32, #tpu.memory_space<vmem>>, %arg4: memref<128x128xbf16, #tpu.memory_space<vmem>>) attributes {dimension_semantics = [#tpu.dimension_semantics<parallel>], iteration_bounds = array<i64: 1>, scalar_prefetch = 0 : i64, scratch_operands = 0 : i64, tpu.core_type = #tpu.core_type<tc>, window_params = [{transform_indices = @transform_0, window_bounds = array<i64: 128, 576>}, {pipeline_mode = #tpu.pipeline_mode<synchronous>, transform_indices = @transform_1, window_bounds = array<i64: 576, 128>}, {pipeline_mode = #tpu.pipeline_mode<synchronous>, transform_indices = @transform_2, window_bounds = array<i64: 1, 128>}, {transform_indices = @transform_3, window_bounds = array<i64: 128, 128>}]} {
    %c0 = arith.constant 0 : index
    %c0_0 = arith.constant 0 : index
    %0 = vector.load %arg1[%c0, %c0_0] : memref<128x576xbf16, #tpu.memory_space<vmem>>, vector<128x576xbf16>
    %c0_1 = arith.constant 0 : index
    %c0_2 = arith.constant 0 : index
    %1 = vector.load %arg2[%c0_1, %c0_2] : memref<576x128xbf16, #tpu.memory_space<vmem>>, vector<576x128xbf16>
    %cst = arith.constant dense<0.000000e+00> : vector<128x128xf32>
    %2 = tpu.matmul %0, %1, %cst {dimension_numbers = #tpu.dot_dimension_numbers<[1], [0], [0], [1], [0, 0, 1, 1], [], []>} : vector<128x576xbf16>, vector<576x128xbf16>, vector<128x128xf32> -> vector<128x128xf32>
    %c0_3 = arith.constant 0 : index
    %c0_4 = arith.constant 0 : index
    %3 = vector.load %arg3[%c0_3, %c0_4] : memref<1x128xf32, #tpu.memory_space<vmem>>, vector<1x128xf32>
    %4 = vector.broadcast %3 : vector<1x128xf32> to vector<128x128xf32>
    %5 = arith.addf %2, %4 : vector<128x128xf32>
    %cst_5 = arith.constant 0.000000e+00 : f32
    %6 = vector.broadcast %cst_5 : f32 to vector<128x128xf32>
    %7 = arith.cmpf oge, %5, %6 : vector<128x128xf32>
    %cst_6 = arith.constant 2.000000e-01 : f32
    %8 = vector.broadcast %cst_6 : f32 to vector<128x128xf32>
    %9 = arith.mulf %8, %5 : vector<128x128xf32>
    %10 = arith.select %7, %5, %9 : vector<128x128xi1>, vector<128x128xf32>
    %11 = arith.truncf %10 : vector<128x128xf32> to vector<128x128xbf16>
    %c0_7 = arith.constant 0 : index
    %c0_8 = arith.constant 0 : index
    %12 = vector.load %arg4[%c0_7, %c0_8] : memref<128x128xbf16, #tpu.memory_space<vmem>>, vector<128x128xbf16>
    tpu.vector_store %arg4[%c0_7, %c0_8], %11 {strides = array<i32>} : memref<128x128xbf16, #tpu.memory_space<vmem>>, vector<128x128xbf16>,
    return
  }
  func.func @transform_0(%arg0: i32) -> (i32, i32) {
    %c0_i32 = arith.constant 0 : i32
    %c0_i32_0 = arith.constant 0 : i32
    return %arg0, %c0_i32 : i32, i32
  }
  func.func @transform_1(%arg0: i32) -> (i32, i32) {
    %c0_i32 = arith.constant 0 : i32
    %c0_i32_0 = arith.constant 0 : i32
    %c0_i32_1 = arith.constant 0 : i32
    return %c0_i32, %c0_i32_0 : i32, i32
  }
  func.func @transform_2(%arg0: i32) -> (i32, i32) {
    %c0_i32 = arith.constant 0 : i32
    %c0_i32_0 = arith.constant 0 : i32
    %c0_i32_1 = arith.constant 0 : i32
    return %c0_i32, %c0_i32_0 : i32, i32
  }
  func.func @transform_3(%arg0: i32) -> (i32, i32) {
    %c0_i32 = arith.constant 0 : i32
    %c0_i32_0 = arith.constant 0 : i32
    return %arg0, %c0_i32 : i32, i32
  }
}

module attributes {stable_mosaic.version = 11 : i64} {
  func.func @_fc_fused_kernel(%arg0: i32, %arg1: i32, %arg2: memref<8x2048xbf16, #tpu.memory_space<vmem>>, %arg3: memref<2048x256xbf16, #tpu.memory_space<vmem>>, %arg4: memref<1x256xf32, #tpu.memory_space<vmem>>, %arg5: memref<256x128xbf16, #tpu.memory_space<vmem>>, %arg6: memref<1x128xf32, #tpu.memory_space<vmem>>, %arg7: memref<8x128xf32, #tpu.memory_space<vmem>>, %arg8: memref<8x256xf32, #tpu.memory_space<vmem>>) attributes {dimension_semantics = [#tpu.dimension_semantics<parallel>, #tpu.dimension_semantics<arbitrary>], iteration_bounds = array<i64: 1, 4>, scalar_prefetch = 0 : i64, scratch_operands = 1 : i64, tpu.core_type = #tpu.core_type<tc>, window_params = [{transform_indices = @transform_0, window_bounds = array<i64: 8, 2048>}, {transform_indices = @transform_1, window_bounds = array<i64: 2048, 256>}, {pipeline_mode = #tpu.pipeline_mode<synchronous>, transform_indices = @transform_2, window_bounds = array<i64: 1, 256>}, {pipeline_mode = #tpu.pipeline_mode<synchronous>, transform_indices = @transform_3, window_bounds = array<i64: 256, 128>}, {pipeline_mode = #tpu.pipeline_mode<synchronous>, transform_indices = @transform_4, window_bounds = array<i64: 1, 128>}, {transform_indices = @transform_5, window_bounds = array<i64: 8, 128>}]} {
    %c0_i32 = arith.constant 0 : i32
    %0 = arith.cmpi eq, %arg1, %c0_i32 : i32
    %1 = arith.extui %0 : i1 to i32
    %c0_i32_0 = arith.constant 0 : i32
    %2 = arith.cmpi ne, %1, %c0_i32_0 : i32
    scf.if %2 {
      %cst_9 = arith.constant 0.000000e+00 : f32
      %12 = vector.broadcast %cst_9 : f32 to vector<8x256xf32>
      %c0_10 = arith.constant 0 : index
      %c0_11 = arith.constant 0 : index
      %13 = vector.load %arg8[%c0_10, %c0_11] : memref<8x256xf32, #tpu.memory_space<vmem>>, vector<8x256xf32>
      tpu.vector_store %arg8[%c0_10, %c0_11], %12 {strides = array<i32>} : memref<8x256xf32, #tpu.memory_space<vmem>>, vector<8x256xf32>,
    } else {
    }
    %c0 = arith.constant 0 : index
    %c0_1 = arith.constant 0 : index
    %3 = vector.load %arg8[%c0, %c0_1] : memref<8x256xf32, #tpu.memory_space<vmem>>, vector<8x256xf32>
    %c0_2 = arith.constant 0 : index
    %c0_3 = arith.constant 0 : index
    %4 = vector.load %arg2[%c0_2, %c0_3] : memref<8x2048xbf16, #tpu.memory_space<vmem>>, vector<8x2048xbf16>
    %c0_4 = arith.constant 0 : index
    %c0_5 = arith.constant 0 : index
    %5 = vector.load %arg3[%c0_4, %c0_5] : memref<2048x256xbf16, #tpu.memory_space<vmem>>, vector<2048x256xbf16>
    %cst = arith.constant dense<0.000000e+00> : vector<8x256xf32>
    %6 = tpu.matmul %4, %5, %cst {dimension_numbers = #tpu.dot_dimension_numbers<[1], [0], [0], [1], [0, 0, 1, 1], [], []>} : vector<8x2048xbf16>, vector<2048x256xbf16>, vector<8x256xf32> -> vector<8x256xf32>
    %7 = arith.addf %3, %6 : vector<8x256xf32>
    %c0_6 = arith.constant 0 : index
    %c0_7 = arith.constant 0 : index
    %8 = vector.load %arg8[%c0_6, %c0_7] : memref<8x256xf32, #tpu.memory_space<vmem>>, vector<8x256xf32>
    tpu.vector_store %arg8[%c0_6, %c0_7], %7 {strides = array<i32>} : memref<8x256xf32, #tpu.memory_space<vmem>>, vector<8x256xf32>,
    %c3_i32 = arith.constant 3 : i32
    %9 = arith.cmpi eq, %arg1, %c3_i32 : i32
    %10 = arith.extui %9 : i1 to i32
    %c0_i32_8 = arith.constant 0 : i32
    %11 = arith.cmpi ne, %10, %c0_i32_8 : i32
    scf.if %11 {
      %c0_9 = arith.constant 0 : index
      %c0_10 = arith.constant 0 : index
      %12 = vector.load %arg8[%c0_9, %c0_10] : memref<8x256xf32, #tpu.memory_space<vmem>>, vector<8x256xf32>
      %c0_11 = arith.constant 0 : index
      %c0_12 = arith.constant 0 : index
      %13 = vector.load %arg4[%c0_11, %c0_12] : memref<1x256xf32, #tpu.memory_space<vmem>>, vector<1x256xf32>
      %14 = vector.broadcast %13 : vector<1x256xf32> to vector<8x256xf32>
      %15 = arith.addf %12, %14 : vector<8x256xf32>
      %cst_13 = arith.constant 0.000000e+00 : f32
      %16 = vector.broadcast %cst_13 : f32 to vector<8x256xf32>
      %17 = arith.cmpf oge, %15, %16 : vector<8x256xf32>
      %cst_14 = arith.constant 2.000000e-01 : f32
      %18 = vector.broadcast %cst_14 : f32 to vector<8x256xf32>
      %19 = arith.mulf %18, %15 : vector<8x256xf32>
      %20 = arith.select %17, %15, %19 : vector<8x256xi1>, vector<8x256xf32>
      %21 = arith.truncf %20 : vector<8x256xf32> to vector<8x256xbf16>
      %c0_15 = arith.constant 0 : index
      %c0_16 = arith.constant 0 : index
      %22 = vector.load %arg5[%c0_15, %c0_16] : memref<256x128xbf16, #tpu.memory_space<vmem>>, vector<256x128xbf16>
      %cst_17 = arith.constant dense<0.000000e+00> : vector<8x128xf32>
      %23 = tpu.matmul %21, %22, %cst_17 {dimension_numbers = #tpu.dot_dimension_numbers<[1], [0], [0], [1], [0, 0, 1, 1], [], []>} : vector<8x256xbf16>, vector<256x128xbf16>, vector<8x128xf32> -> vector<8x128xf32>
      %c0_18 = arith.constant 0 : index
      %c0_19 = arith.constant 0 : index
      %24 = vector.load %arg6[%c0_18, %c0_19] : memref<1x128xf32, #tpu.memory_space<vmem>>, vector<1x128xf32>
      %25 = vector.broadcast %24 : vector<1x128xf32> to vector<8x128xf32>
      %26 = arith.addf %23, %25 : vector<8x128xf32>
      %c0_20 = arith.constant 0 : index
      %c0_21 = arith.constant 0 : index
      %27 = vector.load %arg7[%c0_20, %c0_21] : memref<8x128xf32, #tpu.memory_space<vmem>>, vector<8x128xf32>
      tpu.vector_store %arg7[%c0_20, %c0_21], %26 {strides = array<i32>} : memref<8x128xf32, #tpu.memory_space<vmem>>, vector<8x128xf32>,
    } else {
    }
    return
  }
  func.func @transform_0(%arg0: i32, %arg1: i32) -> (i32, i32) {
    %c0_i32 = arith.constant 0 : i32
    return %arg0, %arg1 : i32, i32
  }
  func.func @transform_1(%arg0: i32, %arg1: i32) -> (i32, i32) {
    %c0_i32 = arith.constant 0 : i32
    %c0_i32_0 = arith.constant 0 : i32
    return %arg1, %c0_i32 : i32, i32
  }
  func.func @transform_2(%arg0: i32, %arg1: i32) -> (i32, i32) {
    %c0_i32 = arith.constant 0 : i32
    %c0_i32_0 = arith.constant 0 : i32
    %c0_i32_1 = arith.constant 0 : i32
    return %c0_i32, %c0_i32_0 : i32, i32
  }
  func.func @transform_3(%arg0: i32, %arg1: i32) -> (i32, i32) {
    %c0_i32 = arith.constant 0 : i32
    %c0_i32_0 = arith.constant 0 : i32
    %c0_i32_1 = arith.constant 0 : i32
    return %c0_i32, %c0_i32_0 : i32, i32
  }
  func.func @transform_4(%arg0: i32, %arg1: i32) -> (i32, i32) {
    %c0_i32 = arith.constant 0 : i32
    %c0_i32_0 = arith.constant 0 : i32
    %c0_i32_1 = arith.constant 0 : i32
    return %c0_i32, %c0_i32_0 : i32, i32
  }
  func.func @transform_5(%arg0: i32, %arg1: i32) -> (i32, i32) {
    %c0_i32 = arith.constant 0 : i32
    %c0_i32_0 = arith.constant 0 : i32
    return %arg0, %c0_i32 : i32, i32
  }
}

</mosaic_0001>

<llo_original>
// kernel: discriminator_forward.4
$region0: #{discriminator_forward.4}
  #allocation0 [shape = 'u32[]', space=smem, size = 0x4, offset = 0x4, fixed_abs, tag = 'smem constant byte address 0x4 - core index']
  #allocation1 [shape = 'u32[144,128]{1,0:T(1,128)}', space=vmem, size = 0x12000, scoped, tag = 'internal scratch']
  %s0 = inlined_call_operand.vmem [shape: bf16[2048,32], index: 0, kind: input, shape index: {}]
  %s1 = inlined_call_operand.vmem [shape: bf16[32,32], index: 1, kind: input, shape index: {}]
  %s2 = inlined_call_operand.vmem [shape: f32[1,32], index: 2, kind: input, shape index: {}]
  %s3 = inlined_call_operand.vmem [shape: bf16[2048,32], index: 3, kind: output, shape index: {}]
  %s4 = sld [smem:[#allocation0]]
  $region45: #{discriminator_forward.4} parent=0
    _
  %s6 = ssub.s32 1, %s4
  %s7 = scalar_select 0, %s6, %s4
  loop: start=0, step=1, limit=6
  $region2: #{discriminator_forward.4} parent=0 // loop_pre_header
    _
  $region3: #{discriminator_forward.4} parent=0 // loop_header
    %s9 = sphi 0, %s13
    %p10 = scmp.ge.s32.totalorder %s9, 6
    %s19 = sphi 0, %s21
    %s22 = sphi 0, %s19
    %s23 = sphi 0, %s22
    %s39 = sphi 0, %s23
    %s43 = sphi 0, %s43
    %s45 = sphi 0, %s43
    %s46 = sphi 0, %s45
    %s60 = sphi 0, %s46
    %s64 = sphi 0, %s64
    %s66 = sphi 0, %s64
    %s67 = sphi 0, %s66
    %s81 = sphi 0, %s67
    %s87 = sphi 0, %s89
    %s90 = sphi 0, %s87
    %s91 = sphi 0, %s90
    %s107 = sphi 0, %s91
  $region4: #{discriminator_forward.4} parent=0 // loop_header_branch
    %12 = sbr.rel (%p10) target = $region8
  $region5: #{discriminator_forward.4} parent=0 // loop_body
    %s14 = ssub.s32 %s9, 1
    %s15 = ssub.s32 %s9, 2
    %s16 = sadd.s32 %s9, 1
    %s17 = ssub.s32 %s9, %s16
    %p18 = scmp.eq.s32.totalorder %s17, 0
    %s20 = sadd.s32 %s19, 1
    %s21 = scalar_select %p18, %s19, %s20
    %p24 = pneg %p18
    %p25 = scmp.eq.s32.totalorder %s9, 3
    %p26 = por %p24, %p25
    %p27 = scmp.ne.s32.totalorder %s19, %s22
    %p28 = scmp.eq.s32.totalorder %s9, 0
    %p29 = por %p27, %p28
    %p30 = scmp.ne.s32.totalorder %s19, %s22
    %p31 = scmp.eq.s32.totalorder %s14, 3
    %p32 = por %p30, %p31
    %p33 = scmp.ne.s32.totalorder %s22, %s23
    %p34 = scmp.eq.s32.totalorder %s14, 0
    %p35 = por %p33, %p34
    %p36 = scmp.ne.s32.totalorder %s22, %s23
    %p37 = scmp.eq.s32.totalorder %s15, 3
    %p38 = por %p36, %p37
    %p40 = scmp.ne.s32.totalorder %s23, %s39
    %p41 = scmp.eq.s32.totalorder %s15, 0
    %p42 = por %p40, %p41
    %s44 = sadd.s32 %s43, 1
    %p47 = scmp.eq.s32.totalorder %s9, 3
    %p48 = scmp.ne.s32.totalorder %s43, %s45
    %p49 = scmp.eq.s32.totalorder %s9, 0
    %p50 = por %p48, %p49
    %p51 = scmp.ne.s32.totalorder %s43, %s45
    %p52 = scmp.eq.s32.totalorder %s14, 3
    %p53 = por %p51, %p52
    %p54 = scmp.ne.s32.totalorder %s45, %s46
    %p55 = scmp.eq.s32.totalorder %s14, 0
    %p56 = por %p54, %p55
    %p57 = scmp.ne.s32.totalorder %s45, %s46
    %p58 = scmp.eq.s32.totalorder %s15, 3
    %p59 = por %p57, %p58
    %p61 = scmp.ne.s32.totalorder %s46, %s60
    %p62 = scmp.eq.s32.totalorder %s15, 0
    %p63 = por %p61, %p62
    %s65 = sadd.s32 %s64, 1
    %p68 = scmp.eq.s32.totalorder %s9, 3
    %p69 = scmp.ne.s32.totalorder %s64, %s66
    %p70 = scmp.eq.s32.totalorder %s9, 0
    %p71 = por %p69, %p70
    %p72 = scmp.ne.s32.totalorder %s64, %s66
    %p73 = scmp.eq.s32.totalorder %s14, 3
    %p74 = por %p72, %p73
    %p75 = scmp.ne.s32.totalorder %s66, %s67
    %p76 = scmp.eq.s32.totalorder %s14, 0
    %p77 = por %p75, %p76
    %p78 = scmp.ne.s32.totalorder %s66, %s67
    %p79 = scmp.eq.s32.totalorder %s15, 3
    %p80 = por %p78, %p79
    %p82 = scmp.ne.s32.totalorder %s67, %s81
    %p83 = scmp.eq.s32.totalorder %s15, 0
    %p84 = por %p82, %p83
    %s85 = ssub.s32 %s9, %s16
    %p86 = scmp.eq.s32.totalorder %s85, 0
    %s88 = sadd.s32 %s87, 1
    %s89 = scalar_select %p86, %s87, %s88
    %p92 = pneg %p86
    %p93 = scmp.eq.s32.totalorder %s9, 3
    %p94 = por %p92, %p93
    %p95 = scmp.ne.s32.totalorder %s87, %s90
    %p96 = scmp.eq.s32.totalorder %s9, 0
    %p97 = por %p95, %p96
    %p98 = scmp.ne.s32.totalorder %s87, %s90
    %p99 = scmp.eq.s32.totalorder %s14, 3
    %p100 = por %p98, %p99
    %p101 = scmp.ne.s32.totalorder %s90, %s91
    %p102 = scmp.eq.s32.totalorder %s14, 0
    %p103 = por %p101, %p102
    %p104 = scmp.ne.s32.totalorder %s90, %s91
    %p105 = scmp.eq.s32.totalorder %s15, 3
    %p106 = por %p104, %p105
    %p108 = scmp.ne.s32.totalorder %s91, %s107
    %p109 = scmp.eq.s32.totalorder %s15, 0
    %p110 = por %p108, %p109
    %p111 = scmp.le.s32.totalorder 1, %s9
    %p112 = scmp.lt.s32.totalorder %s9, 5
    %p113 = pnand %p111, %p112
    %p114 = pneg %p113
    // Predicated region
    $region9: #{discriminator_forward.4} parent=5 // pred_check
      _
    $region10: #{discriminator_forward.4} parent=5 // pred_check_branch
      %116 = sbr.rel (%p113) target = $region12
    $region11: #{discriminator_forward.4} parent=5 // pred_region
      %s117 = ssub.s32 %s9, 1
      // Predicated region
      $region13: #{discriminator_forward.4} parent=11 // pred_check
        %p118 = pneg %p56
      $region14: #{discriminator_forward.4} parent=11 // pred_check_branch
        %120 = sbr.rel (%p118) target = $region16
      $region15: #{discriminator_forward.4} parent=11 // pred_region
        _
      $region16: #{discriminator_forward.4} parent=11 // pred_fallthru
        _
      // Predicated region
      $region17: #{discriminator_forward.4} parent=11 // pred_check
        %p121 = pneg %p77
      $region18: #{discriminator_forward.4} parent=11 // pred_check_branch
        %123 = sbr.rel (%p121) target = $region20
      $region19: #{discriminator_forward.4} parent=11 // pred_region
        _
      $region20: #{discriminator_forward.4} parent=11 // pred_fallthru
        _
    $region12: #{discriminator_forward.4} parent=5 // pred_fallthru
      _
    %p124 = scmp.lt.s32.totalorder %s9, 4
    // Predicated region
    $region21: #{discriminator_forward.4} parent=5 // pred_check
      %p125 = pneg %p124
    $region22: #{discriminator_forward.4} parent=5 // pred_check_branch
      %127 = sbr.rel (%p125) target = $region24
    $region23: #{discriminator_forward.4} parent=5 // pred_region
      // Predicated region
      $region25: #{discriminator_forward.4} parent=23 // pred_check
        %p128 = pneg %p29
      $region26: #{discriminator_forward.4} parent=23 // pred_check_branch
        %130 = sbr.rel (%p128) target = $region28
      $region27: #{discriminator_forward.4} parent=23 // pred_region
        %s131 = smul.u32 64, %s9
        %p132 = scmp.lt.s32.totalorder %s131, 255
        %s133 = scalar_select %p132, %s131, 255
        %s134 = smul.addr %s133, 4
        %s135 = scalar_lea.vmem %s0, %s134
        %s136 = smul.u32 64, %s9
      $region28: #{discriminator_forward.4} parent=23 // pred_fallthru
        _
    $region24: #{discriminator_forward.4} parent=5 // pred_fallthru
      _
    %p137 = scmp.le.s32.totalorder 1, %s9
    %p138 = scmp.lt.s32.totalorder %s9, 5
    %p139 = pnand %p137, %p138
    %p140 = pneg %p139
    // Predicated region
    $region29: #{discriminator_forward.4} parent=5 // pred_check
      _
    $region30: #{discriminator_forward.4} parent=5 // pred_check_branch
      %142 = sbr.rel (%p139) target = $region32
    $region31: #{discriminator_forward.4} parent=5 // pred_region
      %s143 = ssub.s32 %s9, 1
      %s144 = smul.u32 64, %s14
      %p145 = scmp.lt.s32.totalorder %s144, 255
      %s146 = scalar_select %p145, %s144, 255
      %s147 = smul.addr %s146, 4
      %s148 = scalar_lea.vmem %s0, %s147
      %p149 = pneg %p35
      %p150 = pneg %p32
      %p151 = pneg %p56
      %p152 = pneg %p53
      %p153 = pneg %p77
      %p154 = pneg %p74
      %p155 = pneg %p103
      %p156 = pneg %p100
      %s157 = smul.u32 64, %s14
      %p158 = scmp.lt.s32.totalorder %s157, 255
      %s159 = scalar_select %p158, %s157, 255
      %s160 = smul.addr %s159, 4
      %s161 = scalar_lea.vmem %s3, %s160
      %s162 = smul.u32 64, %s14
      %p163 = scmp.lt.s32.totalorder %s162, 255
      %s164 = scalar_select %p163, %s162, 255
      %s165 = smul.addr %s164, 4
      %s166 = scalar_lea.vmem %s0, %s165
      %s167 = smul.u32 64, %s14
      %s168 = smul.u32 64, %s14
      %p169 = scmp.lt.s32.totalorder %s168, 255
      %s170 = scalar_select %p169, %s168, 255
      %s171 = smul.addr %s170, 4
      %s172 = scalar_lea.vmem %s3, %s171
      %s173 = smul.u32 64, %s14
      %v175 = vld [vmem:[%s166] sm:$0xf]
      %v176 = vld [vmem:[%s166 + $0x4] sm:$0xf]
      %v177 = vld [vmem:[%s166 + $0x8] sm:$0xf]
      %v178 = vld [vmem:[%s166 + $0xc] sm:$0xf]
      %v179 = vld [vmem:[%s166 + $0x10] sm:$0xf]
      %v180 = vld [vmem:[%s166 + $0x14] sm:$0xf]
      %v181 = vld [vmem:[%s166 + $0x18] sm:$0xf]
      %v182 = vld [vmem:[%s166 + $0x1c] sm:$0xf]
      %v183 = vld [vmem:[%s166 + $0x20] sm:$0xf]
      %v184 = vld [vmem:[%s166 + $0x24] sm:$0xf]
      %v185 = vld [vmem:[%s166 + $0x28] sm:$0xf]
      %v186 = vld [vmem:[%s166 + $0x2c] sm:$0xf]
      %v187 = vld [vmem:[%s166 + $0x30] sm:$0xf]
      %v188 = vld [vmem:[%s166 + $0x34] sm:$0xf]
      %v189 = vld [vmem:[%s166 + $0x38] sm:$0xf]
      %v190 = vld [vmem:[%s166 + $0x3c] sm:$0xf]
      %v191 = vld [vmem:[%s166 + $0x40] sm:$0xf]
      %v192 = vld [vmem:[%s166 + $0x44] sm:$0xf]
      %v193 = vld [vmem:[%s166 + $0x48] sm:$0xf]
      %v194 = vld [vmem:[%s166 + $0x4c] sm:$0xf]
      %v195 = vld [vmem:[%s166 + $0x50] sm:$0xf]
      %v196 = vld [vmem:[%s166 + $0x54] sm:$0xf]
      %v197 = vld [vmem:[%s166 + $0x58] sm:$0xf]
      %v198 = vld [vmem:[%s166 + $0x5c] sm:$0xf]
      %v199 = vld [vmem:[%s166 + $0x60] sm:$0xf]
      %v200 = vld [vmem:[%s166 + $0x64] sm:$0xf]
      %v201 = vld [vmem:[%s166 + $0x68] sm:$0xf]
      %v202 = vld [vmem:[%s166 + $0x6c] sm:$0xf]
      %v203 = vld [vmem:[%s166 + $0x70] sm:$0xf]
      %v204 = vld [vmem:[%s166 + $0x74] sm:$0xf]
      %v205 = vld [vmem:[%s166 + $0x78] sm:$0xf]
      %v206 = vld [vmem:[%s166 + $0x7c] sm:$0xf]
      %v207 = vld [vmem:[%s166 + $0x80] sm:$0xf]
      %v208 = vld [vmem:[%s166 + $0x84] sm:$0xf]
      %v209 = vld [vmem:[%s166 + $0x88] sm:$0xf]
      %v210 = vld [vmem:[%s166 + $0x8c] sm:$0xf]
      %v211 = vld [vmem:[%s166 + $0x90] sm:$0xf]
      %v212 = vld [vmem:[%s166 + $0x94] sm:$0xf]
      %v213 = vld [vmem:[%s166 + $0x98] sm:$0xf]
      %v214 = vld [vmem:[%s166 + $0x9c] sm:$0xf]
      %v215 = vld [vmem:[%s166 + $0xa0] sm:$0xf]
      %v216 = vld [vmem:[%s166 + $0xa4] sm:$0xf]
      %v217 = vld [vmem:[%s166 + $0xa8] sm:$0xf]
      %v218 = vld [vmem:[%s166 + $0xac] sm:$0xf]
      %v219 = vld [vmem:[%s166 + $0xb0] sm:$0xf]
      %v220 = vld [vmem:[%s166 + $0xb4] sm:$0xf]
      %v221 = vld [vmem:[%s166 + $0xb8] sm:$0xf]
      %v222 = vld [vmem:[%s166 + $0xbc] sm:$0xf]
      %v223 = vld [vmem:[%s166 + $0xc0] sm:$0xf]
      %v224 = vld [vmem:[%s166 + $0xc4] sm:$0xf]
      %v225 = vld [vmem:[%s166 + $0xc8] sm:$0xf]
      %v226 = vld [vmem:[%s166 + $0xcc] sm:$0xf]
      %v227 = vld [vmem:[%s166 + $0xd0] sm:$0xf]
      %v228 = vld [vmem:[%s166 + $0xd4] sm:$0xf]
      %v229 = vld [vmem:[%s166 + $0xd8] sm:$0xf]
      %v230 = vld [vmem:[%s166 + $0xdc] sm:$0xf]
      %v231 = vld [vmem:[%s166 + $0xe0] sm:$0xf]
      %v232 = vld [vmem:[%s166 + $0xe4] sm:$0xf]
      %v233 = vld [vmem:[%s166 + $0xe8] sm:$0xf]
      %v234 = vld [vmem:[%s166 + $0xec] sm:$0xf]
      %v235 = vld [vmem:[%s166 + $0xf0] sm:$0xf]
      %v236 = vld [vmem:[%s166 + $0xf4] sm:$0xf]
      %v237 = vld [vmem:[%s166 + $0xf8] sm:$0xf]
      %v238 = vld [vmem:[%s166 + $0xfc] sm:$0xf]
      %v239 = vld [vmem:[%s1] sm:$0xf]
      %v240 = vld [vmem:[%s1 + $0x4] sm:$0xf]
      %v241 = vld [vmem:[%s1 + $0x8] sm:$0xf]
      %v242 = vld [vmem:[%s1 + $0xc] sm:$0xf]
      %v243 = vld [vmem:[%s2] sm:$0x1]
      %v245 = vlaneseq
      %v246 = vshrl.u32 %v245, 7
      %v247 = vsub.s32 0, %v246
      %v248 = vrot.slane %v243, %v247
      %v314 = vunpack.c.l.b16 %v175
      %v315 = vunpack.c.l.b16 %v176
      %v316 = vunpack.c.l.b16 %v177
      %v317 = vunpack.c.l.b16 %v178
      %v318 = vunpack.c.l.b16 %v179
      %v319 = vunpack.c.l.b16 %v180
      %v320 = vunpack.c.l.b16 %v181
      %v321 = vunpack.c.l.b16 %v182
      %v322 = vunpack.c.l.b16 %v183
      %v323 = vunpack.c.l.b16 %v184
      %v324 = vunpack.c.l.b16 %v185
      %v325 = vunpack.c.l.b16 %v186
      %v326 = vunpack.c.l.b16 %v187
      %v327 = vunpack.c.l.b16 %v188
      %v328 = vunpack.c.l.b16 %v189
      %v329 = vunpack.c.l.b16 %v190
      %v330 = vunpack.c.l.b16 %v191
      %v331 = vunpack.c.l.b16 %v192
      %v332 = vunpack.c.l.b16 %v193
      %v333 = vunpack.c.l.b16 %v194
      %v334 = vunpack.c.l.b16 %v195
      %v335 = vunpack.c.l.b16 %v196
      %v336 = vunpack.c.l.b16 %v197
      %v337 = vunpack.c.l.b16 %v198
      %v338 = vunpack.c.l.b16 %v199
      %v339 = vunpack.c.l.b16 %v200
      %v340 = vunpack.c.l.b16 %v201
      %v341 = vunpack.c.l.b16 %v202
      %v342 = vunpack.c.l.b16 %v203
      %v343 = vunpack.c.l.b16 %v204
      %v344 = vunpack.c.l.b16 %v205
      %v345 = vunpack.c.l.b16 %v206
      %v346 = vunpack.c.l.b16 %v207
      %v347 = vunpack.c.l.b16 %v208
      %v348 = vunpack.c.l.b16 %v209
      %v349 = vunpack.c.l.b16 %v210
      %v350 = vunpack.c.l.b16 %v211
      %v351 = vunpack.c.l.b16 %v212
      %v352 = vunpack.c.l.b16 %v213
      %v353 = vunpack.c.l.b16 %v214
      %v354 = vunpack.c.l.b16 %v215
      %v355 = vunpack.c.l.b16 %v216
      %v356 = vunpack.c.l.b16 %v217
      %v357 = vunpack.c.l.b16 %v218
      %v358 = vunpack.c.l.b16 %v219
      %v359 = vunpack.c.l.b16 %v220
      %v360 = vunpack.c.l.b16 %v221
      %v361 = vunpack.c.l.b16 %v222
      %v362 = vunpack.c.l.b16 %v223
      %v363 = vunpack.c.l.b16 %v224
      %v364 = vunpack.c.l.b16 %v225
      %v365 = vunpack.c.l.b16 %v226
      %v366 = vunpack.c.l.b16 %v227
      %v367 = vunpack.c.l.b16 %v228
      %v368 = vunpack.c.l.b16 %v229
      %v369 = vunpack.c.l.b16 %v230
      %v370 = vunpack.c.l.b16 %v231
      %v371 = vunpack.c.l.b16 %v232
      %v372 = vunpack.c.l.b16 %v233
      %v373 = vunpack.c.l.b16 %v234
      %v374 = vunpack.c.l.b16 %v235
      %v375 = vunpack.c.l.b16 %v236
      %v376 = vunpack.c.l.b16 %v237
      %v377 = vunpack.c.l.b16 %v238
      %v378 = vpack.c.b16 %v315, %v314
      %v379 = vpack.c.b16 %v317, %v316
      %v380 = vpack.c.b16 %v319, %v318
      %v381 = vpack.c.b16 %v321, %v320
      %v382 = vpack.c.b16 %v323, %v322
      %v383 = vpack.c.b16 %v325, %v324
      %v384 = vpack.c.b16 %v327, %v326
      %v385 = vpack.c.b16 %v329, %v328
      %v386 = vpack.c.b16 %v331, %v330
      %v387 = vpack.c.b16 %v333, %v332
      %v388 = vpack.c.b16 %v335, %v334
      %v389 = vpack.c.b16 %v337, %v336
      %v390 = vpack.c.b16 %v339, %v338
      %v391 = vpack.c.b16 %v341, %v340
      %v392 = vpack.c.b16 %v343, %v342
      %v393 = vpack.c.b16 %v345, %v344
      %v394 = vpack.c.b16 %v347, %v346
      %v395 = vpack.c.b16 %v349, %v348
      %v396 = vpack.c.b16 %v351, %v350
      %v397 = vpack.c.b16 %v353, %v352
      %v398 = vpack.c.b16 %v355, %v354
      %v399 = vpack.c.b16 %v357, %v356
      %v400 = vpack.c.b16 %v359, %v358
      %v401 = vpack.c.b16 %v361, %v360
      %v402 = vpack.c.b16 %v363, %v362
      %v403 = vpack.c.b16 %v365, %v364
      %v404 = vpack.c.b16 %v367, %v366
      %v405 = vpack.c.b16 %v369, %v368
      %v406 = vpack.c.b16 %v371, %v370
      %v407 = vpack.c.b16 %v373, %v372
      %v408 = vpack.c.b16 %v375, %v374
      %v409 = vpack.c.b16 %v377, %v376
      %v414 = vunpack.c.l.b16 %v239
      %v415 = vunpack.c.l.b16 %v240
      %v416 = vunpack.c.l.b16 %v241
      %v417 = vunpack.c.l.b16 %v242
      %v418 = vpack.c.b16 %v415, %v414
      %v419 = vpack.c.b16 %v417, %v416
      %vm422 = vcmask 261120
      %v424 = vsel %vm422, %v378, 0
      %v427 = vsel %vm422, %v379, 0
      %v430 = vsel %vm422, %v380, 0
      %v433 = vsel %vm422, %v381, 0
      %v436 = vsel %vm422, %v382, 0
      %v439 = vsel %vm422, %v383, 0
      %v442 = vsel %vm422, %v384, 0
      %v445 = vsel %vm422, %v385, 0
      %v448 = vsel %vm422, %v386, 0
      %v451 = vsel %vm422, %v387, 0
      %v454 = vsel %vm422, %v388, 0
      %v457 = vsel %vm422, %v389, 0
      %v460 = vsel %vm422, %v390, 0
      %v463 = vsel %vm422, %v391, 0
      %v466 = vsel %vm422, %v392, 0
      %v469 = vsel %vm422, %v393, 0
      %v472 = vsel %vm422, %v394, 0
      %v475 = vsel %vm422, %v395, 0
      %v478 = vsel %vm422, %v396, 0
      %v481 = vsel %vm422, %v397, 0
      %v484 = vsel %vm422, %v398, 0
      %v487 = vsel %vm422, %v399, 0
      %v490 = vsel %vm422, %v400, 0
      %v493 = vsel %vm422, %v401, 0
      %v496 = vsel %vm422, %v402, 0
      %v499 = vsel %vm422, %v403, 0
      %v502 = vsel %vm422, %v404, 0
      %v505 = vsel %vm422, %v405, 0
      %v508 = vsel %vm422, %v406, 0
      %v511 = vsel %vm422, %v407, 0
      %v514 = vsel %vm422, %v408, 0
      %v517 = vsel %vm422, %v409, 0
      %519 = vmatprep.subr.bf16.mxu0 0
      %520 = vmatpush1.bf16.msra.mxu0 0
      %521 = vmatprep.subr.bf16.mxu0 0
      %522 = vmatpush1.bf16.msra.mxu0 0
      %523 = vmatprep.subr.bf16.mxu0 0
      %524 = vmatpush1.bf16.msra.mxu0 0
      %525 = vmatprep.subr.bf16.mxu0 0
      %526 = vmatpush1.bf16.msra.mxu0 0
      %527 = vmatprep.subr.bf16.mxu0 0
      %528 = vmatpush1.bf16.msra.mxu0 0
      %529 = vmatprep.subr.bf16.mxu0 0
      %530 = vmatpush1.bf16.msra.mxu0 0
      %531 = vmatprep.subr.bf16.mxu0 0
      %532 = vmatpush1.bf16.msra.mxu0 %v419
      %533 = vmatprep.subr.bf16.mxu0 0
      %534 = vmatpush1.bf16.msra.mxu0 %v418
      %535 = vmatprep.subr.bf16.mxu0 0
      %536 = vmatpush2.bf16.msra.mxu0 0
      %537 = vmatprep.subr.bf16.mxu0 0
      %538 = vmatpush2.bf16.msra.mxu0 0
      %539 = vmatprep.subr.bf16.mxu0 0
      %540 = vmatpush2.bf16.msra.mxu0 0
      %541 = vmatprep.subr.bf16.mxu0 0
      %542 = vmatpush2.bf16.msra.mxu0 0
      %543 = vmatprep.subr.bf16.mxu0 0
      %544 = vmatpush2.bf16.msra.mxu0 0
      %545 = vmatprep.subr.bf16.mxu0 0
      %546 = vmatpush2.bf16.msra.mxu0 0
      %547 = vmatprep.subr.bf16.mxu0 0
      %548 = vmatpush2.bf16.msra.mxu0 0
      %549 = vmatprep.subr.bf16.mxu0 0
      %550 = vmatpush2.bf16.msra.mxu0 0
      %551 = vmatprep.mubr.bf16.mxu0 0
      %552 = vmatmul.mubr.bf16.gmra.mxu0 %v424
      %v553 = vpop.f32.mrf.mxu0
      %v554 = vadd.f32 %v248, %v553
      %v555 = vpop.f32.mrf.mxu0
      %v556 = vpop.f32.mrf.mxu0
      %v557 = vadd.f32 %v248, %v556
      %v558 = vpop.f32.mrf.mxu0
      %559 = vmatprep.mubr.bf16.mxu0 0
      %560 = vmatmul.mubr.bf16.gmra.mxu0 %v427
      %v561 = vpop.f32.mrf.mxu0
      %v562 = vadd.f32 %v248, %v561
      %v563 = vpop.f32.mrf.mxu0
      %v564 = vpop.f32.mrf.mxu0
      %v565 = vadd.f32 %v248, %v564
      %v566 = vpop.f32.mrf.mxu0
      %567 = vmatprep.mubr.bf16.mxu0 0
      %568 = vmatmul.mubr.bf16.gmra.mxu0 %v430
      %v569 = vpop.f32.mrf.mxu0
      %v570 = vadd.f32 %v248, %v569
      %v571 = vpop.f32.mrf.mxu0
      %v572 = vpop.f32.mrf.mxu0
      %v573 = vadd.f32 %v248, %v572
      %v574 = vpop.f32.mrf.mxu0
      %575 = vmatprep.mubr.bf16.mxu0 0
      %576 = vmatmul.mubr.bf16.gmra.mxu0 %v433
      %v577 = vpop.f32.mrf.mxu0
      %v578 = vadd.f32 %v248, %v577
      %v579 = vpop.f32.mrf.mxu0
      %v580 = vpop.f32.mrf.mxu0
      %v581 = vadd.f32 %v248, %v580
      %v582 = vpop.f32.mrf.mxu0
      %583 = vmatprep.mubr.bf16.mxu0 0
      %584 = vmatmul.mubr.bf16.gmra.mxu0 %v436
      %v585 = vpop.f32.mrf.mxu0
      %v586 = vadd.f32 %v248, %v585
      %v587 = vpop.f32.mrf.mxu0
      %v588 = vpop.f32.mrf.mxu0
      %v589 = vadd.f32 %v248, %v588
      %v590 = vpop.f32.mrf.mxu0
      %591 = vmatprep.mubr.bf16.mxu0 0
      %592 = vmatmul.mubr.bf16.gmra.mxu0 %v439
      %v593 = vpop.f32.mrf.mxu0
      %v594 = vadd.f32 %v248, %v593
      %v595 = vpop.f32.mrf.mxu0
      %v596 = vpop.f32.mrf.mxu0
      %v597 = vadd.f32 %v248, %v596
      %v598 = vpop.f32.mrf.mxu0
      %599 = vmatprep.mubr.bf16.mxu0 0
      %600 = vmatmul.mubr.bf16.gmra.mxu0 %v442
      %v601 = vpop.f32.mrf.mxu0
      %v602 = vadd.f32 %v248, %v601
      %v603 = vpop.f32.mrf.mxu0
      %v604 = vpop.f32.mrf.mxu0
      %v605 = vadd.f32 %v248, %v604
      %v606 = vpop.f32.mrf.mxu0
      %607 = vmatprep.mubr.bf16.mxu0 0
      %608 = vmatmul.mubr.bf16.gmra.mxu0 %v445
      %v609 = vpop.f32.mrf.mxu0
      %v610 = vadd.f32 %v248, %v609
      %v611 = vpop.f32.mrf.mxu0
      %v612 = vpop.f32.mrf.mxu0
      %v613 = vadd.f32 %v248, %v612
      %v614 = vpop.f32.mrf.mxu0
      %615 = vmatprep.mubr.bf16.mxu0 0
      %616 = vmatmul.mubr.bf16.gmra.mxu0 %v448
      %v617 = vpop.f32.mrf.mxu0
      %v618 = vadd.f32 %v248, %v617
      %v619 = vpop.f32.mrf.mxu0
      %v620 = vpop.f32.mrf.mxu0
      %v621 = vadd.f32 %v248, %v620
      %v622 = vpop.f32.mrf.mxu0
      %623 = vmatprep.mubr.bf16.mxu0 0
      %624 = vmatmul.mubr.bf16.gmra.mxu0 %v451
      %v625 = vpop.f32.mrf.mxu0
      %v626 = vadd.f32 %v248, %v625
      %v627 = vpop.f32.mrf.mxu0
      %v628 = vpop.f32.mrf.mxu0
      %v629 = vadd.f32 %v248, %v628
      %v630 = vpop.f32.mrf.mxu0
      %631 = vmatprep.mubr.bf16.mxu0 0
      %632 = vmatmul.mubr.bf16.gmra.mxu0 %v454
      %v633 = vpop.f32.mrf.mxu0
      %v634 = vadd.f32 %v248, %v633
      %v635 = vpop.f32.mrf.mxu0
      %v636 = vpop.f32.mrf.mxu0
      %v637 = vadd.f32 %v248, %v636
      %v638 = vpop.f32.mrf.mxu0
      %639 = vmatprep.mubr.bf16.mxu0 0
      %640 = vmatmul.mubr.bf16.gmra.mxu0 %v457
      %v641 = vpop.f32.mrf.mxu0
      %v642 = vadd.f32 %v248, %v641
      %v643 = vpop.f32.mrf.mxu0
      %v644 = vpop.f32.mrf.mxu0
      %v645 = vadd.f32 %v248, %v644
      %v646 = vpop.f32.mrf.mxu0
      %647 = vmatprep.mubr.bf16.mxu0 0
      %648 = vmatmul.mubr.bf16.gmra.mxu0 %v460
      %v649 = vpop.f32.mrf.mxu0
      %v650 = vadd.f32 %v248, %v649
      %v651 = vpop.f32.mrf.mxu0
      %v652 = vpop.f32.mrf.mxu0
      %v653 = vadd.f32 %v248, %v652
      %v654 = vpop.f32.mrf.mxu0
      %655 = vmatprep.mubr.bf16.mxu0 0
      %656 = vmatmul.mubr.bf16.gmra.mxu0 %v463
      %v657 = vpop.f32.mrf.mxu0
      %v658 = vadd.f32 %v248, %v657
      %v659 = vpop.f32.mrf.mxu0
      %v660 = vpop.f32.mrf.mxu0
      %v661 = vadd.f32 %v248, %v660
      %v662 = vpop.f32.mrf.mxu0
      %663 = vmatprep.mubr.bf16.mxu0 0
      %664 = vmatmul.mubr.bf16.gmra.mxu0 %v466
      %v665 = vpop.f32.mrf.mxu0
      %v666 = vadd.f32 %v248, %v665
      %v667 = vpop.f32.mrf.mxu0
      %v668 = vpop.f32.mrf.mxu0
      %v669 = vadd.f32 %v248, %v668
      %v670 = vpop.f32.mrf.mxu0
      %671 = vmatprep.mubr.bf16.mxu0 0
      %672 = vmatmul.mubr.bf16.gmra.mxu0 %v469
      %v673 = vpop.f32.mrf.mxu0
      %v674 = vadd.f32 %v248, %v673
      %v675 = vpop.f32.mrf.mxu0
      %v676 = vpop.f32.mrf.mxu0
      %v677 = vadd.f32 %v248, %v676
      %v678 = vpop.f32.mrf.mxu0
      %679 = vmatprep.mubr.bf16.mxu0 0
      %680 = vmatmul.mubr.bf16.gmra.mxu0 %v472
      %v681 = vpop.f32.mrf.mxu0
      %v682 = vadd.f32 %v248, %v681
      %v683 = vpop.f32.mrf.mxu0
      %v684 = vpop.f32.mrf.mxu0
      %v685 = vadd.f32 %v248, %v684
      %v686 = vpop.f32.mrf.mxu0
      %687 = vmatprep.mubr.bf16.mxu0 0
      %688 = vmatmul.mubr.bf16.gmra.mxu0 %v475
      %v689 = vpop.f32.mrf.mxu0
      %v690 = vadd.f32 %v248, %v689
      %v691 = vpop.f32.mrf.mxu0
      %v692 = vpop.f32.mrf.mxu0
      %v693 = vadd.f32 %v248, %v692
      %v694 = vpop.f32.mrf.mxu0
      %695 = vmatprep.mubr.bf16.mxu0 0
      %696 = vmatmul.mubr.bf16.gmra.mxu0 %v478
      %v697 = vpop.f32.mrf.mxu0
      %v698 = vadd.f32 %v248, %v697
      %v699 = vpop.f32.mrf.mxu0
      %v700 = vpop.f32.mrf.mxu0
      %v701 = vadd.f32 %v248, %v700
      %v702 = vpop.f32.mrf.mxu0
      %703 = vmatprep.mubr.bf16.mxu0 0
      %704 = vmatmul.mubr.bf16.gmra.mxu0 %v481
      %v705 = vpop.f32.mrf.mxu0
      %v706 = vadd.f32 %v248, %v705
      %v707 = vpop.f32.mrf.mxu0
      %v708 = vpop.f32.mrf.mxu0
      %v709 = vadd.f32 %v248, %v708
      %v710 = vpop.f32.mrf.mxu0
      %711 = vmatprep.mubr.bf16.mxu0 0
      %712 = vmatmul.mubr.bf16.gmra.mxu0 %v484
      %v713 = vpop.f32.mrf.mxu0
      %v714 = vadd.f32 %v248, %v713
      %v715 = vpop.f32.mrf.mxu0
      %v716 = vpop.f32.mrf.mxu0
      %v717 = vadd.f32 %v248, %v716
      %v718 = vpop.f32.mrf.mxu0
      %719 = vmatprep.mubr.bf16.mxu0 0
      %720 = vmatmul.mubr.bf16.gmra.mxu0 %v487
      %v721 = vpop.f32.mrf.mxu0
      %v722 = vadd.f32 %v248, %v721
      %v723 = vpop.f32.mrf.mxu0
      %v724 = vpop.f32.mrf.mxu0
      %v725 = vadd.f32 %v248, %v724
      %v726 = vpop.f32.mrf.mxu0
      %727 = vmatprep.mubr.bf16.mxu0 0
      %728 = vmatmul.mubr.bf16.gmra.mxu0 %v490
      %v729 = vpop.f32.mrf.mxu0
      %v730 = vadd.f32 %v248, %v729
      %v731 = vpop.f32.mrf.mxu0
      %v732 = vpop.f32.mrf.mxu0
      %v733 = vadd.f32 %v248, %v732
      %v734 = vpop.f32.mrf.mxu0
      %735 = vmatprep.mubr.bf16.mxu0 0
      %736 = vmatmul.mubr.bf16.gmra.mxu0 %v493
      %v737 = vpop.f32.mrf.mxu0
      %v738 = vadd.f32 %v248, %v737
      %v739 = vpop.f32.mrf.mxu0
      %v740 = vpop.f32.mrf.mxu0
      %v741 = vadd.f32 %v248, %v740
      %v742 = vpop.f32.mrf.mxu0
      %743 = vmatprep.mubr.bf16.mxu0 0
      %744 = vmatmul.mubr.bf16.gmra.mxu0 %v496
      %v745 = vpop.f32.mrf.mxu0
      %v746 = vadd.f32 %v248, %v745
      %v747 = vpop.f32.mrf.mxu0
      %v748 = vpop.f32.mrf.mxu0
      %v749 = vadd.f32 %v248, %v748
      %v750 = vpop.f32.mrf.mxu0
      %751 = vmatprep.mubr.bf16.mxu0 0
      %752 = vmatmul.mubr.bf16.gmra.mxu0 %v499
      %v753 = vpop.f32.mrf.mxu0
      %v754 = vadd.f32 %v248, %v753
      %v755 = vpop.f32.mrf.mxu0
      %v756 = vpop.f32.mrf.mxu0
      %v757 = vadd.f32 %v248, %v756
      %v758 = vpop.f32.mrf.mxu0
      %759 = vmatprep.mubr.bf16.mxu0 0
      %760 = vmatmul.mubr.bf16.gmra.mxu0 %v502
      %v761 = vpop.f32.mrf.mxu0
      %v762 = vadd.f32 %v248, %v761
      %v763 = vpop.f32.mrf.mxu0
      %v764 = vpop.f32.mrf.mxu0
      %v765 = vadd.f32 %v248, %v764
      %v766 = vpop.f32.mrf.mxu0
      %767 = vmatprep.mubr.bf16.mxu0 0
      %768 = vmatmul.mubr.bf16.gmra.mxu0 %v505
      %v769 = vpop.f32.mrf.mxu0
      %v770 = vadd.f32 %v248, %v769
      %v771 = vpop.f32.mrf.mxu0
      %v772 = vpop.f32.mrf.mxu0
      %v773 = vadd.f32 %v248, %v772
      %v774 = vpop.f32.mrf.mxu0
      %775 = vmatprep.mubr.bf16.mxu0 0
      %776 = vmatmul.mubr.bf16.gmra.mxu0 %v508
      %v777 = vpop.f32.mrf.mxu0
      %v778 = vadd.f32 %v248, %v777
      %v779 = vpop.f32.mrf.mxu0
      %v780 = vpop.f32.mrf.mxu0
      %v781 = vadd.f32 %v248, %v780
      %v782 = vpop.f32.mrf.mxu0
      %783 = vmatprep.mubr.bf16.mxu0 0
      %784 = vmatmul.mubr.bf16.gmra.mxu0 %v511
      %v785 = vpop.f32.mrf.mxu0
      %v786 = vadd.f32 %v248, %v785
      %v787 = vpop.f32.mrf.mxu0
      %v788 = vpop.f32.mrf.mxu0
      %v789 = vadd.f32 %v248, %v788
      %v790 = vpop.f32.mrf.mxu0
      %791 = vmatprep.mubr.bf16.mxu0 0
      %792 = vmatmul.mubr.bf16.gmra.mxu0 %v514
      %v793 = vpop.f32.mrf.mxu0
      %v794 = vadd.f32 %v248, %v793
      %v795 = vpop.f32.mrf.mxu0
      %v796 = vpop.f32.mrf.mxu0
      %v797 = vadd.f32 %v248, %v796
      %v798 = vpop.f32.mrf.mxu0
      %799 = vmatprep.mubr.bf16.mxu0 0
      %800 = vmatmul.mubr.bf16.gmra.mxu0 %v517
      %v801 = vpop.f32.mrf.mxu0
      %v802 = vadd.f32 %v248, %v801
      %v803 = vpop.f32.mrf.mxu0
      %v804 = vpop.f32.mrf.mxu0
      %v805 = vadd.f32 %v248, %v804
      %v806 = vpop.f32.mrf.mxu0
      %807 = vdwg.mxu0
      %vm808 = vcmp.ge.f32.partialorder %v554, 0.0
      %vm809 = vcmp.ge.f32.partialorder %v557, 0.0
      %vm810 = vcmp.ge.f32.partialorder %v562, 0.0
      %vm811 = vcmp.ge.f32.partialorder %v565, 0.0
      %vm812 = vcmp.ge.f32.partialorder %v570, 0.0
      %vm813 = vcmp.ge.f32.partialorder %v573, 0.0
      %vm814 = vcmp.ge.f32.partialorder %v578, 0.0
      %vm815 = vcmp.ge.f32.partialorder %v581, 0.0
      %vm816 = vcmp.ge.f32.partialorder %v586, 0.0
      %vm817 = vcmp.ge.f32.partialorder %v589, 0.0
      %vm818 = vcmp.ge.f32.partialorder %v594, 0.0
      %vm819 = vcmp.ge.f32.partialorder %v597, 0.0
      %vm820 = vcmp.ge.f32.partialorder %v602, 0.0
      %vm821 = vcmp.ge.f32.partialorder %v605, 0.0
      %vm822 = vcmp.ge.f32.partialorder %v610, 0.0
      %vm823 = vcmp.ge.f32.partialorder %v613, 0.0
      %vm824 = vcmp.ge.f32.partialorder %v618, 0.0
      %vm825 = vcmp.ge.f32.partialorder %v621, 0.0
      %vm826 = vcmp.ge.f32.partialorder %v626, 0.0
      %vm827 = vcmp.ge.f32.partialorder %v629, 0.0
      %vm828 = vcmp.ge.f32.partialorder %v634, 0.0
      %vm829 = vcmp.ge.f32.partialorder %v637, 0.0
      %vm830 = vcmp.ge.f32.partialorder %v642, 0.0
      %vm831 = vcmp.ge.f32.partialorder %v645, 0.0
      %vm832 = vcmp.ge.f32.partialorder %v650, 0.0
      %vm833 = vcmp.ge.f32.partialorder %v653, 0.0
      %vm834 = vcmp.ge.f32.partialorder %v658, 0.0
      %vm835 = vcmp.ge.f32.partialorder %v661, 0.0
      %vm836 = vcmp.ge.f32.partialorder %v666, 0.0
      %vm837 = vcmp.ge.f32.partialorder %v669, 0.0
      %vm838 = vcmp.ge.f32.partialorder %v674, 0.0
      %vm839 = vcmp.ge.f32.partialorder %v677, 0.0
      %vm840 = vcmp.ge.f32.partialorder %v682, 0.0
      %vm841 = vcmp.ge.f32.partialorder %v685, 0.0
      %vm842 = vcmp.ge.f32.partialorder %v690, 0.0
      %vm843 = vcmp.ge.f32.partialorder %v693, 0.0
      %vm844 = vcmp.ge.f32.partialorder %v698, 0.0
      %vm845 = vcmp.ge.f32.partialorder %v701, 0.0
      %vm846 = vcmp.ge.f32.partialorder %v706, 0.0
      %vm847 = vcmp.ge.f32.partialorder %v709, 0.0
      %vm848 = vcmp.ge.f32.partialorder %v714, 0.0
      %vm849 = vcmp.ge.f32.partialorder %v717, 0.0
      %vm850 = vcmp.ge.f32.partialorder %v722, 0.0
      %vm851 = vcmp.ge.f32.partialorder %v725, 0.0
      %vm852 = vcmp.ge.f32.partialorder %v730, 0.0
      %vm853 = vcmp.ge.f32.partialorder %v733, 0.0
      %vm854 = vcmp.ge.f32.partialorder %v738, 0.0
      %vm855 = vcmp.ge.f32.partialorder %v741, 0.0
      %vm856 = vcmp.ge.f32.partialorder %v746, 0.0
      %vm857 = vcmp.ge.f32.partialorder %v749, 0.0
      %vm858 = vcmp.ge.f32.partialorder %v754, 0.0
      %vm859 = vcmp.ge.f32.partialorder %v757, 0.0
      %vm860 = vcmp.ge.f32.partialorder %v762, 0.0
      %vm861 = vcmp.ge.f32.partialorder %v765, 0.0
      %vm862 = vcmp.ge.f32.partialorder %v770, 0.0
      %vm863 = vcmp.ge.f32.partialorder %v773, 0.0
      %vm864 = vcmp.ge.f32.partialorder %v778, 0.0
      %vm865 = vcmp.ge.f32.partialorder %v781, 0.0
      %vm866 = vcmp.ge.f32.partialorder %v786, 0.0
      %vm867 = vcmp.ge.f32.partialorder %v789, 0.0
      %vm868 = vcmp.ge.f32.partialorder %v794, 0.0
      %vm869 = vcmp.ge.f32.partialorder %v797, 0.0
      %vm870 = vcmp.ge.f32.partialorder %v802, 0.0
      %vm871 = vcmp.ge.f32.partialorder %v805, 0.0
      %v872 = vmul.f32 %v554, 0.2
      %v873 = vmul.f32 %v557, 0.2
      %v874 = vmul.f32 %v562, 0.2
      %v875 = vmul.f32 %v565, 0.2
      %v876 = vmul.f32 %v570, 0.2
      %v877 = vmul.f32 %v573, 0.2
      %v878 = vmul.f32 %v578, 0.2
      %v879 = vmul.f32 %v581, 0.2
      %v880 = vmul.f32 %v586, 0.2
      %v881 = vmul.f32 %v589, 0.2
      %v882 = vmul.f32 %v594, 0.2
      %v883 = vmul.f32 %v597, 0.2
      %v884 = vmul.f32 %v602, 0.2
      %v885 = vmul.f32 %v605, 0.2
      %v886 = vmul.f32 %v610, 0.2
      %v887 = vmul.f32 %v613, 0.2
      %v888 = vmul.f32 %v618, 0.2
      %v889 = vmul.f32 %v621, 0.2
      %v890 = vmul.f32 %v626, 0.2
      %v891 = vmul.f32 %v629, 0.2
      %v892 = vmul.f32 %v634, 0.2
      %v893 = vmul.f32 %v637, 0.2
      %v894 = vmul.f32 %v642, 0.2
      %v895 = vmul.f32 %v645, 0.2
      %v896 = vmul.f32 %v650, 0.2
      %v897 = vmul.f32 %v653, 0.2
      %v898 = vmul.f32 %v658, 0.2
      %v899 = vmul.f32 %v661, 0.2
      %v900 = vmul.f32 %v666, 0.2
      %v901 = vmul.f32 %v669, 0.2
      %v902 = vmul.f32 %v674, 0.2
      %v903 = vmul.f32 %v677, 0.2
      %v904 = vmul.f32 %v682, 0.2
      %v905 = vmul.f32 %v685, 0.2
      %v906 = vmul.f32 %v690, 0.2
      %v907 = vmul.f32 %v693, 0.2
      %v908 = vmul.f32 %v698, 0.2
      %v909 = vmul.f32 %v701, 0.2
      %v910 = vmul.f32 %v706, 0.2
      %v911 = vmul.f32 %v709, 0.2
      %v912 = vmul.f32 %v714, 0.2
      %v913 = vmul.f32 %v717, 0.2
      %v914 = vmul.f32 %v722, 0.2
      %v915 = vmul.f32 %v725, 0.2
      %v916 = vmul.f32 %v730, 0.2
      %v917 = vmul.f32 %v733, 0.2
      %v918 = vmul.f32 %v738, 0.2
      %v919 = vmul.f32 %v741, 0.2
      %v920 = vmul.f32 %v746, 0.2
      %v921 = vmul.f32 %v749, 0.2
      %v922 = vmul.f32 %v754, 0.2
      %v923 = vmul.f32 %v757, 0.2
      %v924 = vmul.f32 %v762, 0.2
      %v925 = vmul.f32 %v765, 0.2
      %v926 = vmul.f32 %v770, 0.2
      %v927 = vmul.f32 %v773, 0.2
      %v928 = vmul.f32 %v778, 0.2
      %v929 = vmul.f32 %v781, 0.2
      %v930 = vmul.f32 %v786, 0.2
      %v931 = vmul.f32 %v789, 0.2
      %v932 = vmul.f32 %v794, 0.2
      %v933 = vmul.f32 %v797, 0.2
      %v934 = vmul.f32 %v802, 0.2
      %v935 = vmul.f32 %v805, 0.2
      %v936 = vsel %vm808, %v554, %v872
      %v937 = vsel %vm809, %v557, %v873
      %v938 = vsel %vm810, %v562, %v874
      %v939 = vsel %vm811, %v565, %v875
      %v940 = vsel %vm812, %v570, %v876
      %v941 = vsel %vm813, %v573, %v877
      %v942 = vsel %vm814, %v578, %v878
      %v943 = vsel %vm815, %v581, %v879
      %v944 = vsel %vm816, %v586, %v880
      %v945 = vsel %vm817, %v589, %v881
      %v946 = vsel %vm818, %v594, %v882
      %v947 = vsel %vm819, %v597, %v883
      %v948 = vsel %vm820, %v602, %v884
      %v949 = vsel %vm821, %v605, %v885
      %v950 = vsel %vm822, %v610, %v886
      %v951 = vsel %vm823, %v613, %v887
      %v952 = vsel %vm824, %v618, %v888
      %v953 = vsel %vm825, %v621, %v889
      %v954 = vsel %vm826, %v626, %v890
      %v955 = vsel %vm827, %v629, %v891
      %v956 = vsel %vm828, %v634, %v892
      %v957 = vsel %vm829, %v637, %v893
      %v958 = vsel %vm830, %v642, %v894
      %v959 = vsel %vm831, %v645, %v895
      %v960 = vsel %vm832, %v650, %v896
      %v961 = vsel %vm833, %v653, %v897
      %v962 = vsel %vm834, %v658, %v898
      %v963 = vsel %vm835, %v661, %v899
      %v964 = vsel %vm836, %v666, %v900
      %v965 = vsel %vm837, %v669, %v901
      %v966 = vsel %vm838, %v674, %v902
      %v967 = vsel %vm839, %v677, %v903
      %v968 = vsel %vm840, %v682, %v904
      %v969 = vsel %vm841, %v685, %v905
      %v970 = vsel %vm842, %v690, %v906
      %v971 = vsel %vm843, %v693, %v907
      %v972 = vsel %vm844, %v698, %v908
      %v973 = vsel %vm845, %v701, %v909
      %v974 = vsel %vm846, %v706, %v910
      %v975 = vsel %vm847, %v709, %v911
      %v976 = vsel %vm848, %v714, %v912
      %v977 = vsel %vm849, %v717, %v913
      %v978 = vsel %vm850, %v722, %v914
      %v979 = vsel %vm851, %v725, %v915
      %v980 = vsel %vm852, %v730, %v916
      %v981 = vsel %vm853, %v733, %v917
      %v982 = vsel %vm854, %v738, %v918
      %v983 = vsel %vm855, %v741, %v919
      %v984 = vsel %vm856, %v746, %v920
      %v985 = vsel %vm857, %v749, %v921
      %v986 = vsel %vm858, %v754, %v922
      %v987 = vsel %vm859, %v757, %v923
      %v988 = vsel %vm860, %v762, %v924
      %v989 = vsel %vm861, %v765, %v925
      %v990 = vsel %vm862, %v770, %v926
      %v991 = vsel %vm863, %v773, %v927
      %v992 = vsel %vm864, %v778, %v928
      %v993 = vsel %vm865, %v781, %v929
      %v994 = vsel %vm866, %v786, %v930
      %v995 = vsel %vm867, %v789, %v931
      %v996 = vsel %vm868, %v794, %v932
      %v997 = vsel %vm869, %v797, %v933
      %v998 = vsel %vm870, %v802, %v934
      %v999 = vsel %vm871, %v805, %v935
      %v1000 = vpack.c.bf16 %v937, %v936
      %v1001 = vpack.c.bf16 %v939, %v938
      %v1002 = vpack.c.bf16 %v941, %v940
      %v1003 = vpack.c.bf16 %v943, %v942
      %v1004 = vpack.c.bf16 %v945, %v944
      %v1005 = vpack.c.bf16 %v947, %v946
      %v1006 = vpack.c.bf16 %v949, %v948
      %v1007 = vpack.c.bf16 %v951, %v950
      %v1008 = vpack.c.bf16 %v953, %v952
      %v1009 = vpack.c.bf16 %v955, %v954
      %v1010 = vpack.c.bf16 %v957, %v956
      %v1011 = vpack.c.bf16 %v959, %v958
      %v1012 = vpack.c.bf16 %v961, %v960
      %v1013 = vpack.c.bf16 %v963, %v962
      %v1014 = vpack.c.bf16 %v965, %v964
      %v1015 = vpack.c.bf16 %v967, %v966
      %v1016 = vpack.c.bf16 %v969, %v968
      %v1017 = vpack.c.bf16 %v971, %v970
      %v1018 = vpack.c.bf16 %v973, %v972
      %v1019 = vpack.c.bf16 %v975, %v974
      %v1020 = vpack.c.bf16 %v977, %v976
      %v1021 = vpack.c.bf16 %v979, %v978
      %v1022 = vpack.c.bf16 %v981, %v980
      %v1023 = vpack.c.bf16 %v983, %v982
      %v1024 = vpack.c.bf16 %v985, %v984
      %v1025 = vpack.c.bf16 %v987, %v986
      %v1026 = vpack.c.bf16 %v989, %v988
      %v1027 = vpack.c.bf16 %v991, %v990
      %v1028 = vpack.c.bf16 %v993, %v992
      %v1029 = vpack.c.bf16 %v995, %v994
      %v1030 = vpack.c.bf16 %v997, %v996
      %v1031 = vpack.c.bf16 %v999, %v998
      %v1064 = vunpack.c.l.b16 %v1000
      %v1065 = vunpack.c.h.b16 %v1000
      %v1066 = vunpack.c.l.b16 %v1001
      %v1067 = vunpack.c.h.b16 %v1001
      %v1068 = vunpack.c.l.b16 %v1002
      %v1069 = vunpack.c.h.b16 %v1002
      %v1070 = vunpack.c.l.b16 %v1003
      %v1071 = vunpack.c.h.b16 %v1003
      %v1072 = vunpack.c.l.b16 %v1004
      %v1073 = vunpack.c.h.b16 %v1004
      %v1074 = vunpack.c.l.b16 %v1005
      %v1075 = vunpack.c.h.b16 %v1005
      %v1076 = vunpack.c.l.b16 %v1006
      %v1077 = vunpack.c.h.b16 %v1006
      %v1078 = vunpack.c.l.b16 %v1007
      %v1079 = vunpack.c.h.b16 %v1007
      %v1080 = vunpack.c.l.b16 %v1008
      %v1081 = vunpack.c.h.b16 %v1008
      %v1082 = vunpack.c.l.b16 %v1009
      %v1083 = vunpack.c.h.b16 %v1009
      %v1084 = vunpack.c.l.b16 %v1010
      %v1085 = vunpack.c.h.b16 %v1010
      %v1086 = vunpack.c.l.b16 %v1011
      %v1087 = vunpack.c.h.b16 %v1011
      %v1088 = vunpack.c.l.b16 %v1012
      %v1089 = vunpack.c.h.b16 %v1012
      %v1090 = vunpack.c.l.b16 %v1013
      %v1091 = vunpack.c.h.b16 %v1013
      %v1092 = vunpack.c.l.b16 %v1014
      %v1093 = vunpack.c.h.b16 %v1014
      %v1094 = vunpack.c.l.b16 %v1015
      %v1095 = vunpack.c.h.b16 %v1015
      %v1096 = vunpack.c.l.b16 %v1016
      %v1097 = vunpack.c.h.b16 %v1016
      %v1098 = vunpack.c.l.b16 %v1017
      %v1099 = vunpack.c.h.b16 %v1017
      %v1100 = vunpack.c.l.b16 %v1018
      %v1101 = vunpack.c.h.b16 %v1018
      %v1102 = vunpack.c.l.b16 %v1019
      %v1103 = vunpack.c.h.b16 %v1019
      %v1104 = vunpack.c.l.b16 %v1020
      %v1105 = vunpack.c.h.b16 %v1020
      %v1106 = vunpack.c.l.b16 %v1021
      %v1107 = vunpack.c.h.b16 %v1021
      %v1108 = vunpack.c.l.b16 %v1022
      %v1109 = vunpack.c.h.b16 %v1022
      %v1110 = vunpack.c.l.b16 %v1023
      %v1111 = vunpack.c.h.b16 %v1023
      %v1112 = vunpack.c.l.b16 %v1024
      %v1113 = vunpack.c.h.b16 %v1024
      %v1114 = vunpack.c.l.b16 %v1025
      %v1115 = vunpack.c.h.b16 %v1025
      %v1116 = vunpack.c.l.b16 %v1026
      %v1117 = vunpack.c.h.b16 %v1026
      %v1118 = vunpack.c.l.b16 %v1027
      %v1119 = vunpack.c.h.b16 %v1027
      %v1120 = vunpack.c.l.b16 %v1028
      %v1121 = vunpack.c.h.b16 %v1028
      %v1122 = vunpack.c.l.b16 %v1029
      %v1123 = vunpack.c.h.b16 %v1029
      %v1124 = vunpack.c.l.b16 %v1030
      %v1125 = vunpack.c.h.b16 %v1030
      %v1126 = vunpack.c.l.b16 %v1031
      %v1127 = vunpack.c.h.b16 %v1031
      %v1128 = vpack.c.b16 %v1064, %v1064
      %v1129 = vpack.c.b16 %v1065, %v1065
      %v1130 = vpack.c.b16 %v1066, %v1066
      %v1131 = vpack.c.b16 %v1067, %v1067
      %v1132 = vpack.c.b16 %v1068, %v1068
      %v1133 = vpack.c.b16 %v1069, %v1069
      %v1134 = vpack.c.b16 %v1070, %v1070
      %v1135 = vpack.c.b16 %v1071, %v1071
      %v1136 = vpack.c.b16 %v1072, %v1072
      %v1137 = vpack.c.b16 %v1073, %v1073
      %v1138 = vpack.c.b16 %v1074, %v1074
      %v1139 = vpack.c.b16 %v1075, %v1075
      %v1140 = vpack.c.b16 %v1076, %v1076
      %v1141 = vpack.c.b16 %v1077, %v1077
      %v1142 = vpack.c.b16 %v1078, %v1078
      %v1143 = vpack.c.b16 %v1079, %v1079
      %v1144 = vpack.c.b16 %v1080, %v1080
      %v1145 = vpack.c.b16 %v1081, %v1081
      %v1146 = vpack.c.b16 %v1082, %v1082
      %v1147 = vpack.c.b16 %v1083, %v1083
      %v1148 = vpack.c.b16 %v1084, %v1084
      %v1149 = vpack.c.b16 %v1085, %v1085
      %v1150 = vpack.c.b16 %v1086, %v1086
      %v1151 = vpack.c.b16 %v1087, %v1087
      %v1152 = vpack.c.b16 %v1088, %v1088
      %v1153 = vpack.c.b16 %v1089, %v1089
      %v1154 = vpack.c.b16 %v1090, %v1090
      %v1155 = vpack.c.b16 %v1091, %v1091
      %v1156 = vpack.c.b16 %v1092, %v1092
      %v1157 = vpack.c.b16 %v1093, %v1093
      %v1158 = vpack.c.b16 %v1094, %v1094
      %v1159 = vpack.c.b16 %v1095, %v1095
      %v1160 = vpack.c.b16 %v1096, %v1096
      %v1161 = vpack.c.b16 %v1097, %v1097
      %v1162 = vpack.c.b16 %v1098, %v1098
      %v1163 = vpack.c.b16 %v1099, %v1099
      %v1164 = vpack.c.b16 %v1100, %v1100
      %v1165 = vpack.c.b16 %v1101, %v1101
      %v1166 = vpack.c.b16 %v1102, %v1102
      %v1167 = vpack.c.b16 %v1103, %v1103
      %v1168 = vpack.c.b16 %v1104, %v1104
      %v1169 = vpack.c.b16 %v1105, %v1105
      %v1170 = vpack.c.b16 %v1106, %v1106
      %v1171 = vpack.c.b16 %v1107, %v1107
      %v1172 = vpack.c.b16 %v1108, %v1108
      %v1173 = vpack.c.b16 %v1109, %v1109
      %v1174 = vpack.c.b16 %v1110, %v1110
      %v1175 = vpack.c.b16 %v1111, %v1111
      %v1176 = vpack.c.b16 %v1112, %v1112
      %v1177 = vpack.c.b16 %v1113, %v1113
      %v1178 = vpack.c.b16 %v1114, %v1114
      %v1179 = vpack.c.b16 %v1115, %v1115
      %v1180 = vpack.c.b16 %v1116, %v1116
      %v1181 = vpack.c.b16 %v1117, %v1117
      %v1182 = vpack.c.b16 %v1118, %v1118
      %v1183 = vpack.c.b16 %v1119, %v1119
      %v1184 = vpack.c.b16 %v1120, %v1120
      %v1185 = vpack.c.b16 %v1121, %v1121
      %v1186 = vpack.c.b16 %v1122, %v1122
      %v1187 = vpack.c.b16 %v1123, %v1123
      %v1188 = vpack.c.b16 %v1124, %v1124
      %v1189 = vpack.c.b16 %v1125, %v1125
      %v1190 = vpack.c.b16 %v1126, %v1126
      %v1191 = vpack.c.b16 %v1127, %v1127
      %vm1256 = vcmask 257024
      %1257 = vst.msk [vmem:[%s172] sm:$0xf] %vm1256, %v1128
      %1258 = vst.msk [vmem:[%s172 + $0x4] sm:$0xf] %vm1256, %v1129
      %1259 = vst.msk [vmem:[%s172 + $0x8] sm:$0xf] %vm1256, %v1130
      %1260 = vst.msk [vmem:[%s172 + $0xc] sm:$0xf] %vm1256, %v1131
      %1261 = vst.msk [vmem:[%s172 + $0x10] sm:$0xf] %vm1256, %v1132
      %1262 = vst.msk [vmem:[%s172 + $0x14] sm:$0xf] %vm1256, %v1133
      %1263 = vst.msk [vmem:[%s172 + $0x18] sm:$0xf] %vm1256, %v1134
      %1264 = vst.msk [vmem:[%s172 + $0x1c] sm:$0xf] %vm1256, %v1135
      %1265 = vst.msk [vmem:[%s172 + $0x20] sm:$0xf] %vm1256, %v1136
      %1266 = vst.msk [vmem:[%s172 + $0x24] sm:$0xf] %vm1256, %v1137
      %1267 = vst.msk [vmem:[%s172 + $0x28] sm:$0xf] %vm1256, %v1138
      %1268 = vst.msk [vmem:[%s172 + $0x2c] sm:$0xf] %vm1256, %v1139
      %1269 = vst.msk [vmem:[%s172 + $0x30] sm:$0xf] %vm1256, %v1140
      %1270 = vst.msk [vmem:[%s172 + $0x34] sm:$0xf] %vm1256, %v1141
      %1271 = vst.msk [vmem:[%s172 + $0x38] sm:$0xf] %vm1256, %v1142
      %1272 = vst.msk [vmem:[%s172 + $0x3c] sm:$0xf] %vm1256, %v1143
      %1273 = vst.msk [vmem:[%s172 + $0x40] sm:$0xf] %vm1256, %v1144
      %1274 = vst.msk [vmem:[%s172 + $0x44] sm:$0xf] %vm1256, %v1145
      %1275 = vst.msk [vmem:[%s172 + $0x48] sm:$0xf] %vm1256, %v1146
      %1276 = vst.msk [vmem:[%s172 + $0x4c] sm:$0xf] %vm1256, %v1147
      %1277 = vst.msk [vmem:[%s172 + $0x50] sm:$0xf] %vm1256, %v1148
      %1278 = vst.msk [vmem:[%s172 + $0x54] sm:$0xf] %vm1256, %v1149
      %1279 = vst.msk [vmem:[%s172 + $0x58] sm:$0xf] %vm1256, %v1150
      %1280 = vst.msk [vmem:[%s172 + $0x5c] sm:$0xf] %vm1256, %v1151
      %1281 = vst.msk [vmem:[%s172 + $0x60] sm:$0xf] %vm1256, %v1152
      %1282 = vst.msk [vmem:[%s172 + $0x64] sm:$0xf] %vm1256, %v1153
      %1283 = vst.msk [vmem:[%s172 + $0x68] sm:$0xf] %vm1256, %v1154
      %1284 = vst.msk [vmem:[%s172 + $0x6c] sm:$0xf] %vm1256, %v1155
      %1285 = vst.msk [vmem:[%s172 + $0x70] sm:$0xf] %vm1256, %v1156
      %1286 = vst.msk [vmem:[%s172 + $0x74] sm:$0xf] %vm1256, %v1157
      %1287 = vst.msk [vmem:[%s172 + $0x78] sm:$0xf] %vm1256, %v1158
      %1288 = vst.msk [vmem:[%s172 + $0x7c] sm:$0xf] %vm1256, %v1159
      %1289 = vst.msk [vmem:[%s172 + $0x80] sm:$0xf] %vm1256, %v1160
      %1290 = vst.msk [vmem:[%s172 + $0x84] sm:$0xf] %vm1256, %v1161
      %1291 = vst.msk [vmem:[%s172 + $0x88] sm:$0xf] %vm1256, %v1162
      %1292 = vst.msk [vmem:[%s172 + $0x8c] sm:$0xf] %vm1256, %v1163
      %1293 = vst.msk [vmem:[%s172 + $0x90] sm:$0xf] %vm1256, %v1164
      %1294 = vst.msk [vmem:[%s172 + $0x94] sm:$0xf] %vm1256, %v1165
      %1295 = vst.msk [vmem:[%s172 + $0x98] sm:$0xf] %vm1256, %v1166
      %1296 = vst.msk [vmem:[%s172 + $0x9c] sm:$0xf] %vm1256, %v1167
      %1297 = vst.msk [vmem:[%s172 + $0xa0] sm:$0xf] %vm1256, %v1168
      %1298 = vst.msk [vmem:[%s172 + $0xa4] sm:$0xf] %vm1256, %v1169
      %1299 = vst.msk [vmem:[%s172 + $0xa8] sm:$0xf] %vm1256, %v1170
      %1300 = vst.msk [vmem:[%s172 + $0xac] sm:$0xf] %vm1256, %v1171
      %1301 = vst.msk [vmem:[%s172 + $0xb0] sm:$0xf] %vm1256, %v1172
      %1302 = vst.msk [vmem:[%s172 + $0xb4] sm:$0xf] %vm1256, %v1173
      %1303 = vst.msk [vmem:[%s172 + $0xb8] sm:$0xf] %vm1256, %v1174
      %1304 = vst.msk [vmem:[%s172 + $0xbc] sm:$0xf] %vm1256, %v1175
      %1305 = vst.msk [vmem:[%s172 + $0xc0] sm:$0xf] %vm1256, %v1176
      %1306 = vst.msk [vmem:[%s172 + $0xc4] sm:$0xf] %vm1256, %v1177
      %1307 = vst.msk [vmem:[%s172 + $0xc8] sm:$0xf] %vm1256, %v1178
      %1308 = vst.msk [vmem:[%s172 + $0xcc] sm:$0xf] %vm1256, %v1179
      %1309 = vst.msk [vmem:[%s172 + $0xd0] sm:$0xf] %vm1256, %v1180
      %1310 = vst.msk [vmem:[%s172 + $0xd4] sm:$0xf] %vm1256, %v1181
      %1311 = vst.msk [vmem:[%s172 + $0xd8] sm:$0xf] %vm1256, %v1182
      %1312 = vst.msk [vmem:[%s172 + $0xdc] sm:$0xf] %vm1256, %v1183
      %1313 = vst.msk [vmem:[%s172 + $0xe0] sm:$0xf] %vm1256, %v1184
      %1314 = vst.msk [vmem:[%s172 + $0xe4] sm:$0xf] %vm1256, %v1185
      %1315 = vst.msk [vmem:[%s172 + $0xe8] sm:$0xf] %vm1256, %v1186
      %1316 = vst.msk [vmem:[%s172 + $0xec] sm:$0xf] %vm1256, %v1187
      %1317 = vst.msk [vmem:[%s172 + $0xf0] sm:$0xf] %vm1256, %v1188
      %1318 = vst.msk [vmem:[%s172 + $0xf4] sm:$0xf] %vm1256, %v1189
      %1319 = vst.msk [vmem:[%s172 + $0xf8] sm:$0xf] %vm1256, %v1190
      %1320 = vst.msk [vmem:[%s172 + $0xfc] sm:$0xf] %vm1256, %v1191
      %s1321 = smul.u32 64, %s14
      %p1322 = scmp.lt.s32.totalorder %s1321, 255
      %s1323 = scalar_select %p1322, %s1321, 255
      %s1324 = smul.addr %s1323, 4
      %s1325 = scalar_lea.vmem %s3, %s1324
      // Predicated region
      $region33: #{discriminator_forward.4} parent=31 // pred_check
        %p1326 = pneg %p100
      $region34: #{discriminator_forward.4} parent=31 // pred_check_branch
        %1328 = sbr.rel (%p1326) target = $region36
      $region35: #{discriminator_forward.4} parent=31 // pred_region
        %s1329 = smul.u32 64, %s14
      $region36: #{discriminator_forward.4} parent=31 // pred_fallthru
        _
    $region32: #{discriminator_forward.4} parent=5 // pred_fallthru
      _
    %p1330 = scmp.le.s32.totalorder 2, %s9
    // Predicated region
    $region37: #{discriminator_forward.4} parent=5 // pred_check
      %p1331 = pneg %p1330
    $region38: #{discriminator_forward.4} parent=5 // pred_check_branch
      %1333 = sbr.rel (%p1331) target = $region40
    $region39: #{discriminator_forward.4} parent=5 // pred_region
      %s1334 = ssub.s32 %s9, 2
      // Predicated region
      $region41: #{discriminator_forward.4} parent=39 // pred_check
        %p1335 = pneg %p106
      $region42: #{discriminator_forward.4} parent=39 // pred_check_branch
        %1337 = sbr.rel (%p1335) target = $region44
      $region43: #{discriminator_forward.4} parent=39 // pred_region
        %s1338 = smul.u32 64, %s15
        %p1339 = scmp.lt.s32.totalorder %s1338, 255
        %s1340 = scalar_select %p1339, %s1338, 255
        %s1341 = smul.addr %s1340, 4
        %s1342 = scalar_lea.vmem %s3, %s1341
      $region44: #{discriminator_forward.4} parent=39 // pred_fallthru
        _
    $region40: #{discriminator_forward.4} parent=5 // pred_fallthru
      _
  $region6: #{discriminator_forward.4} parent=0 // loop_footer
    %s13 = sadd.s32 1, %s9
  $region7: #{discriminator_forward.4} parent=0 // loop_footer_branch
    %8 = sbr.rel target = $region3
  $region8: #{discriminator_forward.4} parent=0 // loop_exit
    _

// kernel: discriminator_forward.5
$region0: #{discriminator_forward.5}
  #allocation0 [shape = 'u32[]', space=smem, size = 0x4, offset = 0x4, fixed_abs, tag = 'smem constant byte address 0x4 - core index']
  #allocation1 [shape = 'u32[144,128]{1,0:T(1,128)}', space=vmem, size = 0x12000, scoped, tag = 'internal scratch']
  %s0 = inlined_call_operand.vmem [shape: bf16[512,288], index: 0, kind: input, shape index: {}]
  %s1 = inlined_call_operand.vmem [shape: bf16[288,64], index: 1, kind: input, shape index: {}]
  %s2 = inlined_call_operand.vmem [shape: f32[1,64], index: 2, kind: input, shape index: {}]
  %s3 = inlined_call_operand.vmem [shape: bf16[512,64], index: 3, kind: output, shape index: {}]
  %s4 = sld [smem:[#allocation0]]
  $region22: #{discriminator_forward.5} parent=0
    _
  %s6 = ssub.s32 1, %s4
  %s7 = scalar_select 0, %s6, %s4
  // Predicated region
  $region2: #{discriminator_forward.5} parent=0 // pred_check
    _
  $region3: #{discriminator_forward.5} parent=0 // pred_check_branch
    %9 = sbr.rel (0) target = $region5
  $region4: #{discriminator_forward.5} parent=0 // pred_region
    _
  $region5: #{discriminator_forward.5} parent=0 // pred_fallthru
    _
  // Predicated region
  $region6: #{discriminator_forward.5} parent=0 // pred_check
    _
  $region7: #{discriminator_forward.5} parent=0 // pred_check_branch
    %11 = sbr.rel (0) target = $region9
  $region8: #{discriminator_forward.5} parent=0 // pred_region
    _
  $region9: #{discriminator_forward.5} parent=0 // pred_fallthru
    _
  // Predicated region
  $region10: #{discriminator_forward.5} parent=0 // pred_check
    _
  $region11: #{discriminator_forward.5} parent=0 // pred_check_branch
    %13 = sbr.rel (0) target = $region13
  $region12: #{discriminator_forward.5} parent=0 // pred_region
    _
  $region13: #{discriminator_forward.5} parent=0 // pred_fallthru
    _
  %v15 = vld [vmem:[%s0] sm:$0xff]
  %v16 = vld [vmem:[%s0 + $0x8] sm:$0xf]
  %v17 = vld [vmem:[%s0 + $0xc] sm:$0xff]
  %v18 = vld [vmem:[%s0 + $0x14] sm:$0xf]
  %v19 = vld [vmem:[%s0 + $0x18] sm:$0xff]
  %v20 = vld [vmem:[%s0 + $0x20] sm:$0xf]
  %v21 = vld [vmem:[%s0 + $0x24] sm:$0xff]
  %v22 = vld [vmem:[%s0 + $0x2c] sm:$0xf]
  %v23 = vld [vmem:[%s0 + $0x30] sm:$0xff]
  %v24 = vld [vmem:[%s0 + $0x38] sm:$0xf]
  %v25 = vld [vmem:[%s0 + $0x3c] sm:$0xff]
  %v26 = vld [vmem:[%s0 + $0x44] sm:$0xf]
  %v27 = vld [vmem:[%s0 + $0x48] sm:$0xff]
  %v28 = vld [vmem:[%s0 + $0x50] sm:$0xf]
  %v29 = vld [vmem:[%s0 + $0x54] sm:$0xff]
  %v30 = vld [vmem:[%s0 + $0x5c] sm:$0xf]
  %v31 = vld [vmem:[%s0 + $0x60] sm:$0xff]
  %v32 = vld [vmem:[%s0 + $0x68] sm:$0xf]
  %v33 = vld [vmem:[%s0 + $0x6c] sm:$0xff]
  %v34 = vld [vmem:[%s0 + $0x74] sm:$0xf]
  %v35 = vld [vmem:[%s0 + $0x78] sm:$0xff]
  %v36 = vld [vmem:[%s0 + $0x80] sm:$0xf]
  %v37 = vld [vmem:[%s0 + $0x84] sm:$0xff]
  %v38 = vld [vmem:[%s0 + $0x8c] sm:$0xf]
  %v39 = vld [vmem:[%s0 + $0x90] sm:$0xff]
  %v40 = vld [vmem:[%s0 + $0x98] sm:$0xf]
  %v41 = vld [vmem:[%s0 + $0x9c] sm:$0xff]
  %v42 = vld [vmem:[%s0 + $0xa4] sm:$0xf]
  %v43 = vld [vmem:[%s0 + $0xa8] sm:$0xff]
  %v44 = vld [vmem:[%s0 + $0xb0] sm:$0xf]
  %v45 = vld [vmem:[%s0 + $0xb4] sm:$0xff]
  %v46 = vld [vmem:[%s0 + $0xbc] sm:$0xf]
  %v47 = vld [vmem:[%s0 + $0xc0] sm:$0xff]
  %v48 = vld [vmem:[%s0 + $0xc8] sm:$0xf]
  %v49 = vld [vmem:[%s0 + $0xcc] sm:$0xff]
  %v50 = vld [vmem:[%s0 + $0xd4] sm:$0xf]
  %v51 = vld [vmem:[%s0 + $0xd8] sm:$0xff]
  %v52 = vld [vmem:[%s0 + $0xe0] sm:$0xf]
  %v53 = vld [vmem:[%s0 + $0xe4] sm:$0xff]
  %v54 = vld [vmem:[%s0 + $0xec] sm:$0xf]
  %v55 = vld [vmem:[%s0 + $0xf0] sm:$0xff]
  %v56 = vld [vmem:[%s0 + $0xf8] sm:$0xf]
  %v57 = vld [vmem:[%s0 + $0xfc] sm:$0xff]
  %v58 = vld [vmem:[%s0 + $0x104] sm:$0xf]
  %v59 = vld [vmem:[%s0 + $0x108] sm:$0xff]
  %v60 = vld [vmem:[%s0 + $0x110] sm:$0xf]
  %v61 = vld [vmem:[%s0 + $0x114] sm:$0xff]
  %v62 = vld [vmem:[%s0 + $0x11c] sm:$0xf]
  %v63 = vld [vmem:[%s0 + $0x120] sm:$0xff]
  %v64 = vld [vmem:[%s0 + $0x128] sm:$0xf]
  %v65 = vld [vmem:[%s0 + $0x12c] sm:$0xff]
  %v66 = vld [vmem:[%s0 + $0x134] sm:$0xf]
  %v67 = vld [vmem:[%s0 + $0x138] sm:$0xff]
  %v68 = vld [vmem:[%s0 + $0x140] sm:$0xf]
  %v69 = vld [vmem:[%s0 + $0x144] sm:$0xff]
  %v70 = vld [vmem:[%s0 + $0x14c] sm:$0xf]
  %v71 = vld [vmem:[%s0 + $0x150] sm:$0xff]
  %v72 = vld [vmem:[%s0 + $0x158] sm:$0xf]
  %v73 = vld [vmem:[%s0 + $0x15c] sm:$0xff]
  %v74 = vld [vmem:[%s0 + $0x164] sm:$0xf]
  %v75 = vld [vmem:[%s0 + $0x168] sm:$0xff]
  %v76 = vld [vmem:[%s0 + $0x170] sm:$0xf]
  %v77 = vld [vmem:[%s0 + $0x174] sm:$0xff]
  %v78 = vld [vmem:[%s0 + $0x17c] sm:$0xf]
  %v79 = vld [vmem:[%s0 + $0x180] sm:$0xff]
  %v80 = vld [vmem:[%s0 + $0x188] sm:$0xf]
  %v81 = vld [vmem:[%s0 + $0x18c] sm:$0xff]
  %v82 = vld [vmem:[%s0 + $0x194] sm:$0xf]
  %v83 = vld [vmem:[%s0 + $0x198] sm:$0xff]
  %v84 = vld [vmem:[%s0 + $0x1a0] sm:$0xf]
  %v85 = vld [vmem:[%s0 + $0x1a4] sm:$0xff]
  %v86 = vld [vmem:[%s0 + $0x1ac] sm:$0xf]
  %v87 = vld [vmem:[%s0 + $0x1b0] sm:$0xff]
  %v88 = vld [vmem:[%s0 + $0x1b8] sm:$0xf]
  %v89 = vld [vmem:[%s0 + $0x1bc] sm:$0xff]
  %v90 = vld [vmem:[%s0 + $0x1c4] sm:$0xf]
  %v91 = vld [vmem:[%s0 + $0x1c8] sm:$0xff]
  %v92 = vld [vmem:[%s0 + $0x1d0] sm:$0xf]
  %v93 = vld [vmem:[%s0 + $0x1d4] sm:$0xff]
  %v94 = vld [vmem:[%s0 + $0x1dc] sm:$0xf]
  %v95 = vld [vmem:[%s0 + $0x1e0] sm:$0xff]
  %v96 = vld [vmem:[%s0 + $0x1e8] sm:$0xf]
  %v97 = vld [vmem:[%s0 + $0x1ec] sm:$0xff]
  %v98 = vld [vmem:[%s0 + $0x1f4] sm:$0xf]
  %v99 = vld [vmem:[%s0 + $0x1f8] sm:$0xff]
  %v100 = vld [vmem:[%s0 + $0x200] sm:$0xf]
  %v101 = vld [vmem:[%s0 + $0x204] sm:$0xff]
  %v102 = vld [vmem:[%s0 + $0x20c] sm:$0xf]
  %v103 = vld [vmem:[%s0 + $0x210] sm:$0xff]
  %v104 = vld [vmem:[%s0 + $0x218] sm:$0xf]
  %v105 = vld [vmem:[%s0 + $0x21c] sm:$0xff]
  %v106 = vld [vmem:[%s0 + $0x224] sm:$0xf]
  %v107 = vld [vmem:[%s0 + $0x228] sm:$0xff]
  %v108 = vld [vmem:[%s0 + $0x230] sm:$0xf]
  %v109 = vld [vmem:[%s0 + $0x234] sm:$0xff]
  %v110 = vld [vmem:[%s0 + $0x23c] sm:$0xf]
  %v111 = vld [vmem:[%s0 + $0x240] sm:$0xff]
  %v112 = vld [vmem:[%s0 + $0x248] sm:$0xf]
  %v113 = vld [vmem:[%s0 + $0x24c] sm:$0xff]
  %v114 = vld [vmem:[%s0 + $0x254] sm:$0xf]
  %v115 = vld [vmem:[%s0 + $0x258] sm:$0xff]
  %v116 = vld [vmem:[%s0 + $0x260] sm:$0xf]
  %v117 = vld [vmem:[%s0 + $0x264] sm:$0xff]
  %v118 = vld [vmem:[%s0 + $0x26c] sm:$0xf]
  %v119 = vld [vmem:[%s0 + $0x270] sm:$0xff]
  %v120 = vld [vmem:[%s0 + $0x278] sm:$0xf]
  %v121 = vld [vmem:[%s0 + $0x27c] sm:$0xff]
  %v122 = vld [vmem:[%s0 + $0x284] sm:$0xf]
  %v123 = vld [vmem:[%s0 + $0x288] sm:$0xff]
  %v124 = vld [vmem:[%s0 + $0x290] sm:$0xf]
  %v125 = vld [vmem:[%s0 + $0x294] sm:$0xff]
  %v126 = vld [vmem:[%s0 + $0x29c] sm:$0xf]
  %v127 = vld [vmem:[%s0 + $0x2a0] sm:$0xff]
  %v128 = vld [vmem:[%s0 + $0x2a8] sm:$0xf]
  %v129 = vld [vmem:[%s0 + $0x2ac] sm:$0xff]
  %v130 = vld [vmem:[%s0 + $0x2b4] sm:$0xf]
  %v131 = vld [vmem:[%s0 + $0x2b8] sm:$0xff]
  %v132 = vld [vmem:[%s0 + $0x2c0] sm:$0xf]
  %v133 = vld [vmem:[%s0 + $0x2c4] sm:$0xff]
  %v134 = vld [vmem:[%s0 + $0x2cc] sm:$0xf]
  %v135 = vld [vmem:[%s0 + $0x2d0] sm:$0xff]
  %v136 = vld [vmem:[%s0 + $0x2d8] sm:$0xf]
  %v137 = vld [vmem:[%s0 + $0x2dc] sm:$0xff]
  %v138 = vld [vmem:[%s0 + $0x2e4] sm:$0xf]
  %v139 = vld [vmem:[%s0 + $0x2e8] sm:$0xff]
  %v140 = vld [vmem:[%s0 + $0x2f0] sm:$0xf]
  %v141 = vld [vmem:[%s0 + $0x2f4] sm:$0xff]
  %v142 = vld [vmem:[%s0 + $0x2fc] sm:$0xf]
  %v143 = vld [vmem:[%s1] sm:$0xf]
  %v144 = vld [vmem:[%s1 + $0x4] sm:$0xf]
  %v145 = vld [vmem:[%s1 + $0x8] sm:$0xf]
  %v146 = vld [vmem:[%s1 + $0xc] sm:$0xf]
  %v147 = vld [vmem:[%s1 + $0x10] sm:$0xf]
  %v148 = vld [vmem:[%s1 + $0x14] sm:$0xf]
  %v149 = vld [vmem:[%s1 + $0x18] sm:$0xf]
  %v150 = vld [vmem:[%s1 + $0x1c] sm:$0xf]
  %v151 = vld [vmem:[%s1 + $0x20] sm:$0xf]
  %v152 = vld [vmem:[%s1 + $0x24] sm:$0xf]
  %v153 = vld [vmem:[%s1 + $0x28] sm:$0xf]
  %v154 = vld [vmem:[%s1 + $0x2c] sm:$0xf]
  %v155 = vld [vmem:[%s1 + $0x30] sm:$0xf]
  %v156 = vld [vmem:[%s1 + $0x34] sm:$0xf]
  %v157 = vld [vmem:[%s1 + $0x38] sm:$0xf]
  %v158 = vld [vmem:[%s1 + $0x3c] sm:$0xf]
  %v159 = vld [vmem:[%s1 + $0x40] sm:$0xf]
  %v160 = vld [vmem:[%s1 + $0x44] sm:$0xf]
  %v161 = vld [vmem:[%s1 + $0x48] sm:$0xf]
  %v162 = vld [vmem:[%s1 + $0x4c] sm:$0xf]
  %v163 = vld [vmem:[%s1 + $0x50] sm:$0xf]
  %v164 = vld [vmem:[%s1 + $0x54] sm:$0xf]
  %v165 = vld [vmem:[%s1 + $0x58] sm:$0xf]
  %v166 = vld [vmem:[%s1 + $0x5c] sm:$0xf]
  %v167 = vld [vmem:[%s1 + $0x60] sm:$0xf]
  %v168 = vld [vmem:[%s1 + $0x64] sm:$0xf]
  %v169 = vld [vmem:[%s1 + $0x68] sm:$0xf]
  %v170 = vld [vmem:[%s1 + $0x6c] sm:$0xf]
  %v171 = vld [vmem:[%s1 + $0x70] sm:$0xf]
  %v172 = vld [vmem:[%s1 + $0x74] sm:$0xf]
  %v173 = vld [vmem:[%s1 + $0x78] sm:$0xf]
  %v174 = vld [vmem:[%s1 + $0x7c] sm:$0xf]
  %v175 = vld [vmem:[%s1 + $0x80] sm:$0xf]
  %v176 = vld [vmem:[%s1 + $0x84] sm:$0xf]
  %v177 = vld [vmem:[%s1 + $0x88] sm:$0xf]
  %v178 = vld [vmem:[%s1 + $0x8c] sm:$0xf]
  %v179 = vld [vmem:[%s2] sm:$0x1]
  %v181 = vlaneseq
  %v182 = vshrl.u32 %v181, 7
  %v183 = vsub.s32 0, %v182
  %v184 = vrot.slane %v179, %v183
  %v314 = vunpack.c.l.b16 %v15
  %v315 = vunpack.c.h.b16 %v15
  %v316 = vunpack.c.l.b16 %v16
  %v317 = vunpack.c.l.b16 %v17
  %v318 = vunpack.c.h.b16 %v17
  %v319 = vunpack.c.l.b16 %v18
  %v320 = vunpack.c.l.b16 %v19
  %v321 = vunpack.c.h.b16 %v19
  %v322 = vunpack.c.l.b16 %v20
  %v323 = vunpack.c.l.b16 %v21
  %v324 = vunpack.c.h.b16 %v21
  %v325 = vunpack.c.l.b16 %v22
  %v326 = vunpack.c.l.b16 %v23
  %v327 = vunpack.c.h.b16 %v23
  %v328 = vunpack.c.l.b16 %v24
  %v329 = vunpack.c.l.b16 %v25
  %v330 = vunpack.c.h.b16 %v25
  %v331 = vunpack.c.l.b16 %v26
  %v332 = vunpack.c.l.b16 %v27
  %v333 = vunpack.c.h.b16 %v27
  %v334 = vunpack.c.l.b16 %v28
  %v335 = vunpack.c.l.b16 %v29
  %v336 = vunpack.c.h.b16 %v29
  %v337 = vunpack.c.l.b16 %v30
  %v338 = vunpack.c.l.b16 %v31
  %v339 = vunpack.c.h.b16 %v31
  %v340 = vunpack.c.l.b16 %v32
  %v341 = vunpack.c.l.b16 %v33
  %v342 = vunpack.c.h.b16 %v33
  %v343 = vunpack.c.l.b16 %v34
  %v344 = vunpack.c.l.b16 %v35
  %v345 = vunpack.c.h.b16 %v35
  %v346 = vunpack.c.l.b16 %v36
  %v347 = vunpack.c.l.b16 %v37
  %v348 = vunpack.c.h.b16 %v37
  %v349 = vunpack.c.l.b16 %v38
  %v350 = vunpack.c.l.b16 %v39
  %v351 = vunpack.c.h.b16 %v39
  %v352 = vunpack.c.l.b16 %v40
  %v353 = vunpack.c.l.b16 %v41
  %v354 = vunpack.c.h.b16 %v41
  %v355 = vunpack.c.l.b16 %v42
  %v356 = vunpack.c.l.b16 %v43
  %v357 = vunpack.c.h.b16 %v43
  %v358 = vunpack.c.l.b16 %v44
  %v359 = vunpack.c.l.b16 %v45
  %v360 = vunpack.c.h.b16 %v45
  %v361 = vunpack.c.l.b16 %v46
  %v362 = vunpack.c.l.b16 %v47
  %v363 = vunpack.c.h.b16 %v47
  %v364 = vunpack.c.l.b16 %v48
  %v365 = vunpack.c.l.b16 %v49
  %v366 = vunpack.c.h.b16 %v49
  %v367 = vunpack.c.l.b16 %v50
  %v368 = vunpack.c.l.b16 %v51
  %v369 = vunpack.c.h.b16 %v51
  %v370 = vunpack.c.l.b16 %v52
  %v371 = vunpack.c.l.b16 %v53
  %v372 = vunpack.c.h.b16 %v53
  %v373 = vunpack.c.l.b16 %v54
  %v374 = vunpack.c.l.b16 %v55
  %v375 = vunpack.c.h.b16 %v55
  %v376 = vunpack.c.l.b16 %v56
  %v377 = vunpack.c.l.b16 %v57
  %v378 = vunpack.c.h.b16 %v57
  %v379 = vunpack.c.l.b16 %v58
  %v380 = vunpack.c.l.b16 %v59
  %v381 = vunpack.c.h.b16 %v59
  %v382 = vunpack.c.l.b16 %v60
  %v383 = vunpack.c.l.b16 %v61
  %v384 = vunpack.c.h.b16 %v61
  %v385 = vunpack.c.l.b16 %v62
  %v386 = vunpack.c.l.b16 %v63
  %v387 = vunpack.c.h.b16 %v63
  %v388 = vunpack.c.l.b16 %v64
  %v389 = vunpack.c.l.b16 %v65
  %v390 = vunpack.c.h.b16 %v65
  %v391 = vunpack.c.l.b16 %v66
  %v392 = vunpack.c.l.b16 %v67
  %v393 = vunpack.c.h.b16 %v67
  %v394 = vunpack.c.l.b16 %v68
  %v395 = vunpack.c.l.b16 %v69
  %v396 = vunpack.c.h.b16 %v69
  %v397 = vunpack.c.l.b16 %v70
  %v398 = vunpack.c.l.b16 %v71
  %v399 = vunpack.c.h.b16 %v71
  %v400 = vunpack.c.l.b16 %v72
  %v401 = vunpack.c.l.b16 %v73
  %v402 = vunpack.c.h.b16 %v73
  %v403 = vunpack.c.l.b16 %v74
  %v404 = vunpack.c.l.b16 %v75
  %v405 = vunpack.c.h.b16 %v75
  %v406 = vunpack.c.l.b16 %v76
  %v407 = vunpack.c.l.b16 %v77
  %v408 = vunpack.c.h.b16 %v77
  %v409 = vunpack.c.l.b16 %v78
  %v410 = vunpack.c.l.b16 %v79
  %v411 = vunpack.c.h.b16 %v79
  %v412 = vunpack.c.l.b16 %v80
  %v413 = vunpack.c.l.b16 %v81
  %v414 = vunpack.c.h.b16 %v81
  %v415 = vunpack.c.l.b16 %v82
  %v416 = vunpack.c.l.b16 %v83
  %v417 = vunpack.c.h.b16 %v83
  %v418 = vunpack.c.l.b16 %v84
  %v419 = vunpack.c.l.b16 %v85
  %v420 = vunpack.c.h.b16 %v85
  %v421 = vunpack.c.l.b16 %v86
  %v422 = vunpack.c.l.b16 %v87
  %v423 = vunpack.c.h.b16 %v87
  %v424 = vunpack.c.l.b16 %v88
  %v425 = vunpack.c.l.b16 %v89
  %v426 = vunpack.c.h.b16 %v89
  %v427 = vunpack.c.l.b16 %v90
  %v428 = vunpack.c.l.b16 %v91
  %v429 = vunpack.c.h.b16 %v91
  %v430 = vunpack.c.l.b16 %v92
  %v431 = vunpack.c.l.b16 %v93
  %v432 = vunpack.c.h.b16 %v93
  %v433 = vunpack.c.l.b16 %v94
  %v434 = vunpack.c.l.b16 %v95
  %v435 = vunpack.c.h.b16 %v95
  %v436 = vunpack.c.l.b16 %v96
  %v437 = vunpack.c.l.b16 %v97
  %v438 = vunpack.c.h.b16 %v97
  %v439 = vunpack.c.l.b16 %v98
  %v440 = vunpack.c.l.b16 %v99
  %v441 = vunpack.c.h.b16 %v99
  %v442 = vunpack.c.l.b16 %v100
  %v443 = vunpack.c.l.b16 %v101
  %v444 = vunpack.c.h.b16 %v101
  %v445 = vunpack.c.l.b16 %v102
  %v446 = vunpack.c.l.b16 %v103
  %v447 = vunpack.c.h.b16 %v103
  %v448 = vunpack.c.l.b16 %v104
  %v449 = vunpack.c.l.b16 %v105
  %v450 = vunpack.c.h.b16 %v105
  %v451 = vunpack.c.l.b16 %v106
  %v452 = vunpack.c.l.b16 %v107
  %v453 = vunpack.c.h.b16 %v107
  %v454 = vunpack.c.l.b16 %v108
  %v455 = vunpack.c.l.b16 %v109
  %v456 = vunpack.c.h.b16 %v109
  %v457 = vunpack.c.l.b16 %v110
  %v458 = vunpack.c.l.b16 %v111
  %v459 = vunpack.c.h.b16 %v111
  %v460 = vunpack.c.l.b16 %v112
  %v461 = vunpack.c.l.b16 %v113
  %v462 = vunpack.c.h.b16 %v113
  %v463 = vunpack.c.l.b16 %v114
  %v464 = vunpack.c.l.b16 %v115
  %v465 = vunpack.c.h.b16 %v115
  %v466 = vunpack.c.l.b16 %v116
  %v467 = vunpack.c.l.b16 %v117
  %v468 = vunpack.c.h.b16 %v117
  %v469 = vunpack.c.l.b16 %v118
  %v470 = vunpack.c.l.b16 %v119
  %v471 = vunpack.c.h.b16 %v119
  %v472 = vunpack.c.l.b16 %v120
  %v473 = vunpack.c.l.b16 %v121
  %v474 = vunpack.c.h.b16 %v121
  %v475 = vunpack.c.l.b16 %v122
  %v476 = vunpack.c.l.b16 %v123
  %v477 = vunpack.c.h.b16 %v123
  %v478 = vunpack.c.l.b16 %v124
  %v479 = vunpack.c.l.b16 %v125
  %v480 = vunpack.c.h.b16 %v125
  %v481 = vunpack.c.l.b16 %v126
  %v482 = vunpack.c.l.b16 %v127
  %v483 = vunpack.c.h.b16 %v127
  %v484 = vunpack.c.l.b16 %v128
  %v485 = vunpack.c.l.b16 %v129
  %v486 = vunpack.c.h.b16 %v129
  %v487 = vunpack.c.l.b16 %v130
  %v488 = vunpack.c.l.b16 %v131
  %v489 = vunpack.c.h.b16 %v131
  %v490 = vunpack.c.l.b16 %v132
  %v491 = vunpack.c.l.b16 %v133
  %v492 = vunpack.c.h.b16 %v133
  %v493 = vunpack.c.l.b16 %v134
  %v494 = vunpack.c.l.b16 %v135
  %v495 = vunpack.c.h.b16 %v135
  %v496 = vunpack.c.l.b16 %v136
  %v497 = vunpack.c.l.b16 %v137
  %v498 = vunpack.c.h.b16 %v137
  %v499 = vunpack.c.l.b16 %v138
  %v500 = vunpack.c.l.b16 %v139
  %v501 = vunpack.c.h.b16 %v139
  %v502 = vunpack.c.l.b16 %v140
  %v503 = vunpack.c.l.b16 %v141
  %v504 = vunpack.c.h.b16 %v141
  %v505 = vunpack.c.l.b16 %v142
  %v506 = vpack.c.b16 %v317, %v314
  %v507 = vpack.c.b16 %v318, %v315
  %v508 = vpack.c.b16 %v319, %v316
  %v509 = vpack.c.b16 %v323, %v320
  %v510 = vpack.c.b16 %v324, %v321
  %v511 = vpack.c.b16 %v325, %v322
  %v512 = vpack.c.b16 %v329, %v326
  %v513 = vpack.c.b16 %v330, %v327
  %v514 = vpack.c.b16 %v331, %v328
  %v515 = vpack.c.b16 %v335, %v332
  %v516 = vpack.c.b16 %v336, %v333
  %v517 = vpack.c.b16 %v337, %v334
  %v518 = vpack.c.b16 %v341, %v338
  %v519 = vpack.c.b16 %v342, %v339
  %v520 = vpack.c.b16 %v343, %v340
  %v521 = vpack.c.b16 %v347, %v344
  %v522 = vpack.c.b16 %v348, %v345
  %v523 = vpack.c.b16 %v349, %v346
  %v524 = vpack.c.b16 %v353, %v350
  %v525 = vpack.c.b16 %v354, %v351
  %v526 = vpack.c.b16 %v355, %v352
  %v527 = vpack.c.b16 %v359, %v356
  %v528 = vpack.c.b16 %v360, %v357
  %v529 = vpack.c.b16 %v361, %v358
  %v530 = vpack.c.b16 %v365, %v362
  %v531 = vpack.c.b16 %v366, %v363
  %v532 = vpack.c.b16 %v367, %v364
  %v533 = vpack.c.b16 %v371, %v368
  %v534 = vpack.c.b16 %v372, %v369
  %v535 = vpack.c.b16 %v373, %v370
  %v536 = vpack.c.b16 %v377, %v374
  %v537 = vpack.c.b16 %v378, %v375
  %v538 = vpack.c.b16 %v379, %v376
  %v539 = vpack.c.b16 %v383, %v380
  %v540 = vpack.c.b16 %v384, %v381
  %v541 = vpack.c.b16 %v385, %v382
  %v542 = vpack.c.b16 %v389, %v386
  %v543 = vpack.c.b16 %v390, %v387
  %v544 = vpack.c.b16 %v391, %v388
  %v545 = vpack.c.b16 %v395, %v392
  %v546 = vpack.c.b16 %v396, %v393
  %v547 = vpack.c.b16 %v397, %v394
  %v548 = vpack.c.b16 %v401, %v398
  %v549 = vpack.c.b16 %v402, %v399
  %v550 = vpack.c.b16 %v403, %v400
  %v551 = vpack.c.b16 %v407, %v404
  %v552 = vpack.c.b16 %v408, %v405
  %v553 = vpack.c.b16 %v409, %v406
  %v554 = vpack.c.b16 %v413, %v410
  %v555 = vpack.c.b16 %v414, %v411
  %v556 = vpack.c.b16 %v415, %v412
  %v557 = vpack.c.b16 %v419, %v416
  %v558 = vpack.c.b16 %v420, %v417
  %v559 = vpack.c.b16 %v421, %v418
  %v560 = vpack.c.b16 %v425, %v422
  %v561 = vpack.c.b16 %v426, %v423
  %v562 = vpack.c.b16 %v427, %v424
  %v563 = vpack.c.b16 %v431, %v428
  %v564 = vpack.c.b16 %v432, %v429
  %v565 = vpack.c.b16 %v433, %v430
  %v566 = vpack.c.b16 %v437, %v434
  %v567 = vpack.c.b16 %v438, %v435
  %v568 = vpack.c.b16 %v439, %v436
  %v569 = vpack.c.b16 %v443, %v440
  %v570 = vpack.c.b16 %v444, %v441
  %v571 = vpack.c.b16 %v445, %v442
  %v572 = vpack.c.b16 %v449, %v446
  %v573 = vpack.c.b16 %v450, %v447
  %v574 = vpack.c.b16 %v451, %v448
  %v575 = vpack.c.b16 %v455, %v452
  %v576 = vpack.c.b16 %v456, %v453
  %v577 = vpack.c.b16 %v457, %v454
  %v578 = vpack.c.b16 %v461, %v458
  %v579 = vpack.c.b16 %v462, %v459
  %v580 = vpack.c.b16 %v463, %v460
  %v581 = vpack.c.b16 %v467, %v464
  %v582 = vpack.c.b16 %v468, %v465
  %v583 = vpack.c.b16 %v469, %v466
  %v584 = vpack.c.b16 %v473, %v470
  %v585 = vpack.c.b16 %v474, %v471
  %v586 = vpack.c.b16 %v475, %v472
  %v587 = vpack.c.b16 %v479, %v476
  %v588 = vpack.c.b16 %v480, %v477
  %v589 = vpack.c.b16 %v481, %v478
  %v590 = vpack.c.b16 %v485, %v482
  %v591 = vpack.c.b16 %v486, %v483
  %v592 = vpack.c.b16 %v487, %v484
  %v593 = vpack.c.b16 %v491, %v488
  %v594 = vpack.c.b16 %v492, %v489
  %v595 = vpack.c.b16 %v493, %v490
  %v596 = vpack.c.b16 %v497, %v494
  %v597 = vpack.c.b16 %v498, %v495
  %v598 = vpack.c.b16 %v499, %v496
  %v599 = vpack.c.b16 %v503, %v500
  %v600 = vpack.c.b16 %v504, %v501
  %v601 = vpack.c.b16 %v505, %v502
  %v702 = vunpack.c.l.b16 %v143
  %v703 = vunpack.c.l.b16 %v144
  %v704 = vunpack.c.l.b16 %v145
  %v705 = vunpack.c.l.b16 %v146
  %v706 = vunpack.c.l.b16 %v147
  %v707 = vunpack.c.l.b16 %v148
  %v708 = vunpack.c.l.b16 %v149
  %v709 = vunpack.c.l.b16 %v150
  %v710 = vunpack.c.l.b16 %v151
  %v711 = vunpack.c.l.b16 %v152
  %v712 = vunpack.c.l.b16 %v153
  %v713 = vunpack.c.l.b16 %v154
  %v714 = vunpack.c.l.b16 %v155
  %v715 = vunpack.c.l.b16 %v156
  %v716 = vunpack.c.l.b16 %v157
  %v717 = vunpack.c.l.b16 %v158
  %v718 = vunpack.c.l.b16 %v159
  %v719 = vunpack.c.l.b16 %v160
  %v720 = vunpack.c.l.b16 %v161
  %v721 = vunpack.c.l.b16 %v162
  %v722 = vunpack.c.l.b16 %v163
  %v723 = vunpack.c.l.b16 %v164
  %v724 = vunpack.c.l.b16 %v165
  %v725 = vunpack.c.l.b16 %v166
  %v726 = vunpack.c.l.b16 %v167
  %v727 = vunpack.c.l.b16 %v168
  %v728 = vunpack.c.l.b16 %v169
  %v729 = vunpack.c.l.b16 %v170
  %v730 = vunpack.c.l.b16 %v171
  %v731 = vunpack.c.l.b16 %v172
  %v732 = vunpack.c.l.b16 %v173
  %v733 = vunpack.c.l.b16 %v174
  %v734 = vunpack.c.l.b16 %v175
  %v735 = vunpack.c.l.b16 %v176
  %v736 = vunpack.c.l.b16 %v177
  %v737 = vunpack.c.l.b16 %v178
  %v738 = vpack.c.b16 %v703, %v702
  %v739 = vpack.c.b16 %v705, %v704
  %v740 = vpack.c.b16 %v707, %v706
  %v741 = vpack.c.b16 %v709, %v708
  %v742 = vpack.c.b16 %v711, %v710
  %v743 = vpack.c.b16 %v713, %v712
  %v744 = vpack.c.b16 %v715, %v714
  %v745 = vpack.c.b16 %v717, %v716
  %v746 = vpack.c.b16 %v719, %v718
  %v747 = vpack.c.b16 %v721, %v720
  %v748 = vpack.c.b16 %v723, %v722
  %v749 = vpack.c.b16 %v725, %v724
  %v750 = vpack.c.b16 %v727, %v726
  %v751 = vpack.c.b16 %v729, %v728
  %v752 = vpack.c.b16 %v731, %v730
  %v753 = vpack.c.b16 %v733, %v732
  %v754 = vpack.c.b16 %v735, %v734
  %v755 = vpack.c.b16 %v737, %v736
  %vm774 = vcmask 261120
  %v776 = vsel %vm774, %v508, 0
  %v779 = vsel %vm774, %v511, 0
  %v782 = vsel %vm774, %v514, 0
  %v785 = vsel %vm774, %v517, 0
  %v788 = vsel %vm774, %v520, 0
  %v791 = vsel %vm774, %v523, 0
  %v794 = vsel %vm774, %v526, 0
  %v797 = vsel %vm774, %v529, 0
  %v800 = vsel %vm774, %v532, 0
  %v803 = vsel %vm774, %v535, 0
  %v806 = vsel %vm774, %v538, 0
  %v809 = vsel %vm774, %v541, 0
  %v812 = vsel %vm774, %v544, 0
  %v815 = vsel %vm774, %v547, 0
  %v818 = vsel %vm774, %v550, 0
  %v821 = vsel %vm774, %v553, 0
  %v824 = vsel %vm774, %v556, 0
  %v827 = vsel %vm774, %v559, 0
  %v830 = vsel %vm774, %v562, 0
  %v833 = vsel %vm774, %v565, 0
  %v836 = vsel %vm774, %v568, 0
  %v839 = vsel %vm774, %v571, 0
  %v842 = vsel %vm774, %v574, 0
  %v845 = vsel %vm774, %v577, 0
  %v848 = vsel %vm774, %v580, 0
  %v851 = vsel %vm774, %v583, 0
  %v854 = vsel %vm774, %v586, 0
  %v857 = vsel %vm774, %v589, 0
  %v860 = vsel %vm774, %v592, 0
  %v863 = vsel %vm774, %v595, 0
  %v866 = vsel %vm774, %v598, 0
  %v869 = vsel %vm774, %v601, 0
  %871 = vmatprep.subr.bf16.mxu0 0
  %872 = vmatpush1.bf16.msra.mxu0 %v745
  %873 = vmatprep.subr.bf16.mxu0 0
  %874 = vmatpush1.bf16.msra.mxu0 %v744
  %875 = vmatprep.subr.bf16.mxu0 0
  %876 = vmatpush1.bf16.msra.mxu0 %v743
  %877 = vmatprep.subr.bf16.mxu0 0
  %878 = vmatpush1.bf16.msra.mxu0 %v742
  %879 = vmatprep.subr.bf16.mxu0 0
  %880 = vmatpush1.bf16.msra.mxu0 %v741
  %881 = vmatprep.subr.bf16.mxu0 0
  %882 = vmatpush1.bf16.msra.mxu0 %v740
  %883 = vmatprep.subr.bf16.mxu0 0
  %884 = vmatpush1.bf16.msra.mxu0 %v739
  %885 = vmatprep.subr.bf16.mxu0 0
  %886 = vmatpush1.bf16.msra.mxu0 %v738
  %887 = vmatprep.subr.bf16.mxu0 0
  %888 = vmatpush2.bf16.msra.mxu0 %v753
  %889 = vmatprep.subr.bf16.mxu0 0
  %890 = vmatpush2.bf16.msra.mxu0 %v752
  %891 = vmatprep.subr.bf16.mxu0 0
  %892 = vmatpush2.bf16.msra.mxu0 %v751
  %893 = vmatprep.subr.bf16.mxu0 0
  %894 = vmatpush2.bf16.msra.mxu0 %v750
  %895 = vmatprep.subr.bf16.mxu0 0
  %896 = vmatpush2.bf16.msra.mxu0 %v749
  %897 = vmatprep.subr.bf16.mxu0 0
  %898 = vmatpush2.bf16.msra.mxu0 %v748
  %899 = vmatprep.subr.bf16.mxu0 0
  %900 = vmatpush2.bf16.msra.mxu0 %v747
  %901 = vmatprep.subr.bf16.mxu0 0
  %902 = vmatpush2.bf16.msra.mxu0 %v746
  %903 = vmatprep.mubr.bf16.mxu0 %v507
  %904 = vmatmul.mubr.bf16.gmra.mxu0 %v506
  %v905 = vpop.f32.mrf.mxu0
  %v906 = vadd.f32 %v184, %v905
  %v907 = vpop.f32.mrf.mxu0
  %v908 = vpop.f32.mrf.mxu0
  %v909 = vadd.f32 %v184, %v908
  %v910 = vpop.f32.mrf.mxu0
  %911 = vmatprep.mubr.bf16.mxu0 %v510
  %912 = vmatmul.mubr.bf16.gmra.mxu0 %v509
  %v913 = vpop.f32.mrf.mxu0
  %v914 = vadd.f32 %v184, %v913
  %v915 = vpop.f32.mrf.mxu0
  %v916 = vpop.f32.mrf.mxu0
  %v917 = vadd.f32 %v184, %v916
  %v918 = vpop.f32.mrf.mxu0
  %919 = vmatprep.mubr.bf16.mxu0 %v513
  %920 = vmatmul.mubr.bf16.gmra.mxu0 %v512
  %v921 = vpop.f32.mrf.mxu0
  %v922 = vadd.f32 %v184, %v921
  %v923 = vpop.f32.mrf.mxu0
  %v924 = vpop.f32.mrf.mxu0
  %v925 = vadd.f32 %v184, %v924
  %v926 = vpop.f32.mrf.mxu0
  %927 = vmatprep.mubr.bf16.mxu0 %v516
  %928 = vmatmul.mubr.bf16.gmra.mxu0 %v515
  %v929 = vpop.f32.mrf.mxu0
  %v930 = vadd.f32 %v184, %v929
  %v931 = vpop.f32.mrf.mxu0
  %v932 = vpop.f32.mrf.mxu0
  %v933 = vadd.f32 %v184, %v932
  %v934 = vpop.f32.mrf.mxu0
  %935 = vmatprep.mubr.bf16.mxu0 %v519
  %936 = vmatmul.mubr.bf16.gmra.mxu0 %v518
  %v937 = vpop.f32.mrf.mxu0
  %v938 = vadd.f32 %v184, %v937
  %v939 = vpop.f32.mrf.mxu0
  %v940 = vpop.f32.mrf.mxu0
  %v941 = vadd.f32 %v184, %v940
  %v942 = vpop.f32.mrf.mxu0
  %943 = vmatprep.mubr.bf16.mxu0 %v522
  %944 = vmatmul.mubr.bf16.gmra.mxu0 %v521
  %v945 = vpop.f32.mrf.mxu0
  %v946 = vadd.f32 %v184, %v945
  %v947 = vpop.f32.mrf.mxu0
  %v948 = vpop.f32.mrf.mxu0
  %v949 = vadd.f32 %v184, %v948
  %v950 = vpop.f32.mrf.mxu0
  %951 = vmatprep.mubr.bf16.mxu0 %v525
  %952 = vmatmul.mubr.bf16.gmra.mxu0 %v524
  %v953 = vpop.f32.mrf.mxu0
  %v954 = vadd.f32 %v184, %v953
  %v955 = vpop.f32.mrf.mxu0
  %v956 = vpop.f32.mrf.mxu0
  %v957 = vadd.f32 %v184, %v956
  %v958 = vpop.f32.mrf.mxu0
  %959 = vmatprep.mubr.bf16.mxu0 %v528
  %960 = vmatmul.mubr.bf16.gmra.mxu0 %v527
  %v961 = vpop.f32.mrf.mxu0
  %v962 = vadd.f32 %v184, %v961
  %v963 = vpop.f32.mrf.mxu0
  %v964 = vpop.f32.mrf.mxu0
  %v965 = vadd.f32 %v184, %v964
  %v966 = vpop.f32.mrf.mxu0
  %967 = vmatprep.mubr.bf16.mxu0 %v531
  %968 = vmatmul.mubr.bf16.gmra.mxu0 %v530
  %v969 = vpop.f32.mrf.mxu0
  %v970 = vadd.f32 %v184, %v969
  %v971 = vpop.f32.mrf.mxu0
  %v972 = vpop.f32.mrf.mxu0
  %v973 = vadd.f32 %v184, %v972
  %v974 = vpop.f32.mrf.mxu0
  %975 = vmatprep.mubr.bf16.mxu0 %v534
  %976 = vmatmul.mubr.bf16.gmra.mxu0 %v533
  %v977 = vpop.f32.mrf.mxu0
  %v978 = vadd.f32 %v184, %v977
  %v979 = vpop.f32.mrf.mxu0
  %v980 = vpop.f32.mrf.mxu0
  %v981 = vadd.f32 %v184, %v980
  %v982 = vpop.f32.mrf.mxu0
  %983 = vmatprep.mubr.bf16.mxu0 %v537
  %984 = vmatmul.mubr.bf16.gmra.mxu0 %v536
  %v985 = vpop.f32.mrf.mxu0
  %v986 = vadd.f32 %v184, %v985
  %v987 = vpop.f32.mrf.mxu0
  %v988 = vpop.f32.mrf.mxu0
  %v989 = vadd.f32 %v184, %v988
  %v990 = vpop.f32.mrf.mxu0
  %991 = vmatprep.mubr.bf16.mxu0 %v540
  %992 = vmatmul.mubr.bf16.gmra.mxu0 %v539
  %v993 = vpop.f32.mrf.mxu0
  %v994 = vadd.f32 %v184, %v993
  %v995 = vpop.f32.mrf.mxu0
  %v996 = vpop.f32.mrf.mxu0
  %v997 = vadd.f32 %v184, %v996
  %v998 = vpop.f32.mrf.mxu0
  %999 = vmatprep.mubr.bf16.mxu0 %v543
  %1000 = vmatmul.mubr.bf16.gmra.mxu0 %v542
  %v1001 = vpop.f32.mrf.mxu0
  %v1002 = vadd.f32 %v184, %v1001
  %v1003 = vpop.f32.mrf.mxu0
  %v1004 = vpop.f32.mrf.mxu0
  %v1005 = vadd.f32 %v184, %v1004
  %v1006 = vpop.f32.mrf.mxu0
  %1007 = vmatprep.mubr.bf16.mxu0 %v546
  %1008 = vmatmul.mubr.bf16.gmra.mxu0 %v545
  %v1009 = vpop.f32.mrf.mxu0
  %v1010 = vadd.f32 %v184, %v1009
  %v1011 = vpop.f32.mrf.mxu0
  %v1012 = vpop.f32.mrf.mxu0
  %v1013 = vadd.f32 %v184, %v1012
  %v1014 = vpop.f32.mrf.mxu0
  %1015 = vmatprep.mubr.bf16.mxu0 %v549
  %1016 = vmatmul.mubr.bf16.gmra.mxu0 %v548
  %v1017 = vpop.f32.mrf.mxu0
  %v1018 = vadd.f32 %v184, %v1017
  %v1019 = vpop.f32.mrf.mxu0
  %v1020 = vpop.f32.mrf.mxu0
  %v1021 = vadd.f32 %v184, %v1020
  %v1022 = vpop.f32.mrf.mxu0
  %1023 = vmatprep.mubr.bf16.mxu0 %v552
  %1024 = vmatmul.mubr.bf16.gmra.mxu0 %v551
  %v1025 = vpop.f32.mrf.mxu0
  %v1026 = vadd.f32 %v184, %v1025
  %v1027 = vpop.f32.mrf.mxu0
  %v1028 = vpop.f32.mrf.mxu0
  %v1029 = vadd.f32 %v184, %v1028
  %v1030 = vpop.f32.mrf.mxu0
  %1031 = vmatprep.mubr.bf16.mxu0 %v555
  %1032 = vmatmul.mubr.bf16.gmra.mxu0 %v554
  %v1033 = vpop.f32.mrf.mxu0
  %v1034 = vadd.f32 %v184, %v1033
  %v1035 = vpop.f32.mrf.mxu0
  %v1036 = vpop.f32.mrf.mxu0
  %v1037 = vadd.f32 %v184, %v1036
  %v1038 = vpop.f32.mrf.mxu0
  %1039 = vmatprep.mubr.bf16.mxu0 %v558
  %1040 = vmatmul.mubr.bf16.gmra.mxu0 %v557
  %v1041 = vpop.f32.mrf.mxu0
  %v1042 = vadd.f32 %v184, %v1041
  %v1043 = vpop.f32.mrf.mxu0
  %v1044 = vpop.f32.mrf.mxu0
  %v1045 = vadd.f32 %v184, %v1044
  %v1046 = vpop.f32.mrf.mxu0
  %1047 = vmatprep.mubr.bf16.mxu0 %v561
  %1048 = vmatmul.mubr.bf16.gmra.mxu0 %v560
  %v1049 = vpop.f32.mrf.mxu0
  %v1050 = vadd.f32 %v184, %v1049
  %v1051 = vpop.f32.mrf.mxu0
  %v1052 = vpop.f32.mrf.mxu0
  %v1053 = vadd.f32 %v184, %v1052
  %v1054 = vpop.f32.mrf.mxu0
  %1055 = vmatprep.mubr.bf16.mxu0 %v564
  %1056 = vmatmul.mubr.bf16.gmra.mxu0 %v563
  %v1057 = vpop.f32.mrf.mxu0
  %v1058 = vadd.f32 %v184, %v1057
  %v1059 = vpop.f32.mrf.mxu0
  %v1060 = vpop.f32.mrf.mxu0
  %v1061 = vadd.f32 %v184, %v1060
  %v1062 = vpop.f32.mrf.mxu0
  %1063 = vmatprep.mubr.bf16.mxu0 %v567
  %1064 = vmatmul.mubr.bf16.gmra.mxu0 %v566
  %v1065 = vpop.f32.mrf.mxu0
  %v1066 = vadd.f32 %v184, %v1065
  %v1067 = vpop.f32.mrf.mxu0
  %v1068 = vpop.f32.mrf.mxu0
  %v1069 = vadd.f32 %v184, %v1068
  %v1070 = vpop.f32.mrf.mxu0
  %1071 = vmatprep.mubr.bf16.mxu0 %v570
  %1072 = vmatmul.mubr.bf16.gmra.mxu0 %v569
  %v1073 = vpop.f32.mrf.mxu0
  %v1074 = vadd.f32 %v184, %v1073
  %v1075 = vpop.f32.mrf.mxu0
  %v1076 = vpop.f32.mrf.mxu0
  %v1077 = vadd.f32 %v184, %v1076
  %v1078 = vpop.f32.mrf.mxu0
  %1079 = vmatprep.mubr.bf16.mxu0 %v573
  %1080 = vmatmul.mubr.bf16.gmra.mxu0 %v572
  %v1081 = vpop.f32.mrf.mxu0
  %v1082 = vadd.f32 %v184, %v1081
  %v1083 = vpop.f32.mrf.mxu0
  %v1084 = vpop.f32.mrf.mxu0
  %v1085 = vadd.f32 %v184, %v1084
  %v1086 = vpop.f32.mrf.mxu0
  %1087 = vmatprep.mubr.bf16.mxu0 %v576
  %1088 = vmatmul.mubr.bf16.gmra.mxu0 %v575
  %v1089 = vpop.f32.mrf.mxu0
  %v1090 = vadd.f32 %v184, %v1089
  %v1091 = vpop.f32.mrf.mxu0
  %v1092 = vpop.f32.mrf.mxu0
  %v1093 = vadd.f32 %v184, %v1092
  %v1094 = vpop.f32.mrf.mxu0
  %1095 = vmatprep.mubr.bf16.mxu0 %v579
  %1096 = vmatmul.mubr.bf16.gmra.mxu0 %v578
  %v1097 = vpop.f32.mrf.mxu0
  %v1098 = vadd.f32 %v184, %v1097
  %v1099 = vpop.f32.mrf.mxu0
  %v1100 = vpop.f32.mrf.mxu0
  %v1101 = vadd.f32 %v184, %v1100
  %v1102 = vpop.f32.mrf.mxu0
  %1103 = vmatprep.mubr.bf16.mxu0 %v582
  %1104 = vmatmul.mubr.bf16.gmra.mxu0 %v581
  %v1105 = vpop.f32.mrf.mxu0
  %v1106 = vadd.f32 %v184, %v1105
  %v1107 = vpop.f32.mrf.mxu0
  %v1108 = vpop.f32.mrf.mxu0
  %v1109 = vadd.f32 %v184, %v1108
  %v1110 = vpop.f32.mrf.mxu0
  %1111 = vmatprep.mubr.bf16.mxu0 %v585
  %1112 = vmatmul.mubr.bf16.gmra.mxu0 %v584
  %v1113 = vpop.f32.mrf.mxu0
  %v1114 = vadd.f32 %v184, %v1113
  %v1115 = vpop.f32.mrf.mxu0
  %v1116 = vpop.f32.mrf.mxu0
  %v1117 = vadd.f32 %v184, %v1116
  %v1118 = vpop.f32.mrf.mxu0
  %1119 = vmatprep.mubr.bf16.mxu0 %v588
  %1120 = vmatmul.mubr.bf16.gmra.mxu0 %v587
  %v1121 = vpop.f32.mrf.mxu0
  %v1122 = vadd.f32 %v184, %v1121
  %v1123 = vpop.f32.mrf.mxu0
  %v1124 = vpop.f32.mrf.mxu0
  %v1125 = vadd.f32 %v184, %v1124
  %v1126 = vpop.f32.mrf.mxu0
  %1127 = vmatprep.mubr.bf16.mxu0 %v591
  %1128 = vmatmul.mubr.bf16.gmra.mxu0 %v590
  %v1129 = vpop.f32.mrf.mxu0
  %v1130 = vadd.f32 %v184, %v1129
  %v1131 = vpop.f32.mrf.mxu0
  %v1132 = vpop.f32.mrf.mxu0
  %v1133 = vadd.f32 %v184, %v1132
  %v1134 = vpop.f32.mrf.mxu0
  %1135 = vmatprep.mubr.bf16.mxu0 %v594
  %1136 = vmatmul.mubr.bf16.gmra.mxu0 %v593
  %v1137 = vpop.f32.mrf.mxu0
  %v1138 = vadd.f32 %v184, %v1137
  %v1139 = vpop.f32.mrf.mxu0
  %v1140 = vpop.f32.mrf.mxu0
  %v1141 = vadd.f32 %v184, %v1140
  %v1142 = vpop.f32.mrf.mxu0
  %1143 = vmatprep.mubr.bf16.mxu0 %v597
  %1144 = vmatmul.mubr.bf16.gmra.mxu0 %v596
  %v1145 = vpop.f32.mrf.mxu0
  %v1146 = vadd.f32 %v184, %v1145
  %v1147 = vpop.f32.mrf.mxu0
  %v1148 = vpop.f32.mrf.mxu0
  %v1149 = vadd.f32 %v184, %v1148
  %v1150 = vpop.f32.mrf.mxu0
  %1151 = vmatprep.mubr.bf16.mxu0 %v600
  %1152 = vmatmul.mubr.bf16.gmra.mxu0 %v599
  %v1153 = vpop.f32.mrf.mxu0
  %v1154 = vadd.f32 %v184, %v1153
  %v1155 = vpop.f32.mrf.mxu0
  %v1156 = vpop.f32.mrf.mxu0
  %v1157 = vadd.f32 %v184, %v1156
  %v1158 = vpop.f32.mrf.mxu0
  %1159 = vdwg.mxu0
  %1160 = vmatprep.subr.bf16.mxu0 0
  %1161 = vmatpush1.bf16.msra.mxu0 0
  %1162 = vmatprep.subr.bf16.mxu0 0
  %1163 = vmatpush1.bf16.msra.mxu0 0
  %1164 = vmatprep.subr.bf16.mxu0 0
  %1165 = vmatpush1.bf16.msra.mxu0 0
  %1166 = vmatprep.subr.bf16.mxu0 0
  %1167 = vmatpush1.bf16.msra.mxu0 0
  %1168 = vmatprep.subr.bf16.mxu0 0
  %1169 = vmatpush1.bf16.msra.mxu0 0
  %1170 = vmatprep.subr.bf16.mxu0 0
  %1171 = vmatpush1.bf16.msra.mxu0 0
  %1172 = vmatprep.subr.bf16.mxu0 0
  %1173 = vmatpush1.bf16.msra.mxu0 %v755
  %1174 = vmatprep.subr.bf16.mxu0 0
  %1175 = vmatpush1.bf16.msra.mxu0 %v754
  %1176 = vmatprep.subr.bf16.mxu0 0
  %1177 = vmatpush2.bf16.msra.mxu0 0
  %1178 = vmatprep.subr.bf16.mxu0 0
  %1179 = vmatpush2.bf16.msra.mxu0 0
  %1180 = vmatprep.subr.bf16.mxu0 0
  %1181 = vmatpush2.bf16.msra.mxu0 0
  %1182 = vmatprep.subr.bf16.mxu0 0
  %1183 = vmatpush2.bf16.msra.mxu0 0
  %1184 = vmatprep.subr.bf16.mxu0 0
  %1185 = vmatpush2.bf16.msra.mxu0 0
  %1186 = vmatprep.subr.bf16.mxu0 0
  %1187 = vmatpush2.bf16.msra.mxu0 0
  %1188 = vmatprep.subr.bf16.mxu0 0
  %1189 = vmatpush2.bf16.msra.mxu0 0
  %1190 = vmatprep.subr.bf16.mxu0 0
  %1191 = vmatpush2.bf16.msra.mxu0 0
  %1192 = vmatprep.mubr.bf16.mxu0 0
  %1193 = vmatmul.mubr.bf16.gmra.mxu0 %v776
  %v1194 = vpop.f32.mrf.mxu0
  %v1195 = vadd.f32 %v906, %v1194
  %v1196 = vpop.f32.mrf.mxu0
  %v1197 = vpop.f32.mrf.mxu0
  %v1198 = vadd.f32 %v909, %v1197
  %v1199 = vpop.f32.mrf.mxu0
  %1200 = vmatprep.mubr.bf16.mxu0 0
  %1201 = vmatmul.mubr.bf16.gmra.mxu0 %v779
  %v1202 = vpop.f32.mrf.mxu0
  %v1203 = vadd.f32 %v914, %v1202
  %v1204 = vpop.f32.mrf.mxu0
  %v1205 = vpop.f32.mrf.mxu0
  %v1206 = vadd.f32 %v917, %v1205
  %v1207 = vpop.f32.mrf.mxu0
  %1208 = vmatprep.mubr.bf16.mxu0 0
  %1209 = vmatmul.mubr.bf16.gmra.mxu0 %v782
  %v1210 = vpop.f32.mrf.mxu0
  %v1211 = vadd.f32 %v922, %v1210
  %v1212 = vpop.f32.mrf.mxu0
  %v1213 = vpop.f32.mrf.mxu0
  %v1214 = vadd.f32 %v925, %v1213
  %v1215 = vpop.f32.mrf.mxu0
  %1216 = vmatprep.mubr.bf16.mxu0 0
  %1217 = vmatmul.mubr.bf16.gmra.mxu0 %v785
  %v1218 = vpop.f32.mrf.mxu0
  %v1219 = vadd.f32 %v930, %v1218
  %v1220 = vpop.f32.mrf.mxu0
  %v1221 = vpop.f32.mrf.mxu0
  %v1222 = vadd.f32 %v933, %v1221
  %v1223 = vpop.f32.mrf.mxu0
  %1224 = vmatprep.mubr.bf16.mxu0 0
  %1225 = vmatmul.mubr.bf16.gmra.mxu0 %v788
  %v1226 = vpop.f32.mrf.mxu0
  %v1227 = vadd.f32 %v938, %v1226
  %v1228 = vpop.f32.mrf.mxu0
  %v1229 = vpop.f32.mrf.mxu0
  %v1230 = vadd.f32 %v941, %v1229
  %v1231 = vpop.f32.mrf.mxu0
  %1232 = vmatprep.mubr.bf16.mxu0 0
  %1233 = vmatmul.mubr.bf16.gmra.mxu0 %v791
  %v1234 = vpop.f32.mrf.mxu0
  %v1235 = vadd.f32 %v946, %v1234
  %v1236 = vpop.f32.mrf.mxu0
  %v1237 = vpop.f32.mrf.mxu0
  %v1238 = vadd.f32 %v949, %v1237
  %v1239 = vpop.f32.mrf.mxu0
  %1240 = vmatprep.mubr.bf16.mxu0 0
  %1241 = vmatmul.mubr.bf16.gmra.mxu0 %v794
  %v1242 = vpop.f32.mrf.mxu0
  %v1243 = vadd.f32 %v954, %v1242
  %v1244 = vpop.f32.mrf.mxu0
  %v1245 = vpop.f32.mrf.mxu0
  %v1246 = vadd.f32 %v957, %v1245
  %v1247 = vpop.f32.mrf.mxu0
  %1248 = vmatprep.mubr.bf16.mxu0 0
  %1249 = vmatmul.mubr.bf16.gmra.mxu0 %v797
  %v1250 = vpop.f32.mrf.mxu0
  %v1251 = vadd.f32 %v962, %v1250
  %v1252 = vpop.f32.mrf.mxu0
  %v1253 = vpop.f32.mrf.mxu0
  %v1254 = vadd.f32 %v965, %v1253
  %v1255 = vpop.f32.mrf.mxu0
  %1256 = vmatprep.mubr.bf16.mxu0 0
  %1257 = vmatmul.mubr.bf16.gmra.mxu0 %v800
  %v1258 = vpop.f32.mrf.mxu0
  %v1259 = vadd.f32 %v970, %v1258
  %v1260 = vpop.f32.mrf.mxu0
  %v1261 = vpop.f32.mrf.mxu0
  %v1262 = vadd.f32 %v973, %v1261
  %v1263 = vpop.f32.mrf.mxu0
  %1264 = vmatprep.mubr.bf16.mxu0 0
  %1265 = vmatmul.mubr.bf16.gmra.mxu0 %v803
  %v1266 = vpop.f32.mrf.mxu0
  %v1267 = vadd.f32 %v978, %v1266
  %v1268 = vpop.f32.mrf.mxu0
  %v1269 = vpop.f32.mrf.mxu0
  %v1270 = vadd.f32 %v981, %v1269
  %v1271 = vpop.f32.mrf.mxu0
  %1272 = vmatprep.mubr.bf16.mxu0 0
  %1273 = vmatmul.mubr.bf16.gmra.mxu0 %v806
  %v1274 = vpop.f32.mrf.mxu0
  %v1275 = vadd.f32 %v986, %v1274
  %v1276 = vpop.f32.mrf.mxu0
  %v1277 = vpop.f32.mrf.mxu0
  %v1278 = vadd.f32 %v989, %v1277
  %v1279 = vpop.f32.mrf.mxu0
  %1280 = vmatprep.mubr.bf16.mxu0 0
  %1281 = vmatmul.mubr.bf16.gmra.mxu0 %v809
  %v1282 = vpop.f32.mrf.mxu0
  %v1283 = vadd.f32 %v994, %v1282
  %v1284 = vpop.f32.mrf.mxu0
  %v1285 = vpop.f32.mrf.mxu0
  %v1286 = vadd.f32 %v997, %v1285
  %v1287 = vpop.f32.mrf.mxu0
  %1288 = vmatprep.mubr.bf16.mxu0 0
  %1289 = vmatmul.mubr.bf16.gmra.mxu0 %v812
  %v1290 = vpop.f32.mrf.mxu0
  %v1291 = vadd.f32 %v1002, %v1290
  %v1292 = vpop.f32.mrf.mxu0
  %v1293 = vpop.f32.mrf.mxu0
  %v1294 = vadd.f32 %v1005, %v1293
  %v1295 = vpop.f32.mrf.mxu0
  %1296 = vmatprep.mubr.bf16.mxu0 0
  %1297 = vmatmul.mubr.bf16.gmra.mxu0 %v815
  %v1298 = vpop.f32.mrf.mxu0
  %v1299 = vadd.f32 %v1010, %v1298
  %v1300 = vpop.f32.mrf.mxu0
  %v1301 = vpop.f32.mrf.mxu0
  %v1302 = vadd.f32 %v1013, %v1301
  %v1303 = vpop.f32.mrf.mxu0
  %1304 = vmatprep.mubr.bf16.mxu0 0
  %1305 = vmatmul.mubr.bf16.gmra.mxu0 %v818
  %v1306 = vpop.f32.mrf.mxu0
  %v1307 = vadd.f32 %v1018, %v1306
  %v1308 = vpop.f32.mrf.mxu0
  %v1309 = vpop.f32.mrf.mxu0
  %v1310 = vadd.f32 %v1021, %v1309
  %v1311 = vpop.f32.mrf.mxu0
  %1312 = vmatprep.mubr.bf16.mxu0 0
  %1313 = vmatmul.mubr.bf16.gmra.mxu0 %v821
  %v1314 = vpop.f32.mrf.mxu0
  %v1315 = vadd.f32 %v1026, %v1314
  %v1316 = vpop.f32.mrf.mxu0
  %v1317 = vpop.f32.mrf.mxu0
  %v1318 = vadd.f32 %v1029, %v1317
  %v1319 = vpop.f32.mrf.mxu0
  %1320 = vmatprep.mubr.bf16.mxu0 0
  %1321 = vmatmul.mubr.bf16.gmra.mxu0 %v824
  %v1322 = vpop.f32.mrf.mxu0
  %v1323 = vadd.f32 %v1034, %v1322
  %v1324 = vpop.f32.mrf.mxu0
  %v1325 = vpop.f32.mrf.mxu0
  %v1326 = vadd.f32 %v1037, %v1325
  %v1327 = vpop.f32.mrf.mxu0
  %1328 = vmatprep.mubr.bf16.mxu0 0
  %1329 = vmatmul.mubr.bf16.gmra.mxu0 %v827
  %v1330 = vpop.f32.mrf.mxu0
  %v1331 = vadd.f32 %v1042, %v1330
  %v1332 = vpop.f32.mrf.mxu0
  %v1333 = vpop.f32.mrf.mxu0
  %v1334 = vadd.f32 %v1045, %v1333
  %v1335 = vpop.f32.mrf.mxu0
  %1336 = vmatprep.mubr.bf16.mxu0 0
  %1337 = vmatmul.mubr.bf16.gmra.mxu0 %v830
  %v1338 = vpop.f32.mrf.mxu0
  %v1339 = vadd.f32 %v1050, %v1338
  %v1340 = vpop.f32.mrf.mxu0
  %v1341 = vpop.f32.mrf.mxu0
  %v1342 = vadd.f32 %v1053, %v1341
  %v1343 = vpop.f32.mrf.mxu0
  %1344 = vmatprep.mubr.bf16.mxu0 0
  %1345 = vmatmul.mubr.bf16.gmra.mxu0 %v833
  %v1346 = vpop.f32.mrf.mxu0
  %v1347 = vadd.f32 %v1058, %v1346
  %v1348 = vpop.f32.mrf.mxu0
  %v1349 = vpop.f32.mrf.mxu0
  %v1350 = vadd.f32 %v1061, %v1349
  %v1351 = vpop.f32.mrf.mxu0
  %1352 = vmatprep.mubr.bf16.mxu0 0
  %1353 = vmatmul.mubr.bf16.gmra.mxu0 %v836
  %v1354 = vpop.f32.mrf.mxu0
  %v1355 = vadd.f32 %v1066, %v1354
  %v1356 = vpop.f32.mrf.mxu0
  %v1357 = vpop.f32.mrf.mxu0
  %v1358 = vadd.f32 %v1069, %v1357
  %v1359 = vpop.f32.mrf.mxu0
  %1360 = vmatprep.mubr.bf16.mxu0 0
  %1361 = vmatmul.mubr.bf16.gmra.mxu0 %v839
  %v1362 = vpop.f32.mrf.mxu0
  %v1363 = vadd.f32 %v1074, %v1362
  %v1364 = vpop.f32.mrf.mxu0
  %v1365 = vpop.f32.mrf.mxu0
  %v1366 = vadd.f32 %v1077, %v1365
  %v1367 = vpop.f32.mrf.mxu0
  %1368 = vmatprep.mubr.bf16.mxu0 0
  %1369 = vmatmul.mubr.bf16.gmra.mxu0 %v842
  %v1370 = vpop.f32.mrf.mxu0
  %v1371 = vadd.f32 %v1082, %v1370
  %v1372 = vpop.f32.mrf.mxu0
  %v1373 = vpop.f32.mrf.mxu0
  %v1374 = vadd.f32 %v1085, %v1373
  %v1375 = vpop.f32.mrf.mxu0
  %1376 = vmatprep.mubr.bf16.mxu0 0
  %1377 = vmatmul.mubr.bf16.gmra.mxu0 %v845
  %v1378 = vpop.f32.mrf.mxu0
  %v1379 = vadd.f32 %v1090, %v1378
  %v1380 = vpop.f32.mrf.mxu0
  %v1381 = vpop.f32.mrf.mxu0
  %v1382 = vadd.f32 %v1093, %v1381
  %v1383 = vpop.f32.mrf.mxu0
  %1384 = vmatprep.mubr.bf16.mxu0 0
  %1385 = vmatmul.mubr.bf16.gmra.mxu0 %v848
  %v1386 = vpop.f32.mrf.mxu0
  %v1387 = vadd.f32 %v1098, %v1386
  %v1388 = vpop.f32.mrf.mxu0
  %v1389 = vpop.f32.mrf.mxu0
  %v1390 = vadd.f32 %v1101, %v1389
  %v1391 = vpop.f32.mrf.mxu0
  %1392 = vmatprep.mubr.bf16.mxu0 0
  %1393 = vmatmul.mubr.bf16.gmra.mxu0 %v851
  %v1394 = vpop.f32.mrf.mxu0
  %v1395 = vadd.f32 %v1106, %v1394
  %v1396 = vpop.f32.mrf.mxu0
  %v1397 = vpop.f32.mrf.mxu0
  %v1398 = vadd.f32 %v1109, %v1397
  %v1399 = vpop.f32.mrf.mxu0
  %1400 = vmatprep.mubr.bf16.mxu0 0
  %1401 = vmatmul.mubr.bf16.gmra.mxu0 %v854
  %v1402 = vpop.f32.mrf.mxu0
  %v1403 = vadd.f32 %v1114, %v1402
  %v1404 = vpop.f32.mrf.mxu0
  %v1405 = vpop.f32.mrf.mxu0
  %v1406 = vadd.f32 %v1117, %v1405
  %v1407 = vpop.f32.mrf.mxu0
  %1408 = vmatprep.mubr.bf16.mxu0 0
  %1409 = vmatmul.mubr.bf16.gmra.mxu0 %v857
  %v1410 = vpop.f32.mrf.mxu0
  %v1411 = vadd.f32 %v1122, %v1410
  %v1412 = vpop.f32.mrf.mxu0
  %v1413 = vpop.f32.mrf.mxu0
  %v1414 = vadd.f32 %v1125, %v1413
  %v1415 = vpop.f32.mrf.mxu0
  %1416 = vmatprep.mubr.bf16.mxu0 0
  %1417 = vmatmul.mubr.bf16.gmra.mxu0 %v860
  %v1418 = vpop.f32.mrf.mxu0
  %v1419 = vadd.f32 %v1130, %v1418
  %v1420 = vpop.f32.mrf.mxu0
  %v1421 = vpop.f32.mrf.mxu0
  %v1422 = vadd.f32 %v1133, %v1421
  %v1423 = vpop.f32.mrf.mxu0
  %1424 = vmatprep.mubr.bf16.mxu0 0
  %1425 = vmatmul.mubr.bf16.gmra.mxu0 %v863
  %v1426 = vpop.f32.mrf.mxu0
  %v1427 = vadd.f32 %v1138, %v1426
  %v1428 = vpop.f32.mrf.mxu0
  %v1429 = vpop.f32.mrf.mxu0
  %v1430 = vadd.f32 %v1141, %v1429
  %v1431 = vpop.f32.mrf.mxu0
  %1432 = vmatprep.mubr.bf16.mxu0 0
  %1433 = vmatmul.mubr.bf16.gmra.mxu0 %v866
  %v1434 = vpop.f32.mrf.mxu0
  %v1435 = vadd.f32 %v1146, %v1434
  %v1436 = vpop.f32.mrf.mxu0
  %v1437 = vpop.f32.mrf.mxu0
  %v1438 = vadd.f32 %v1149, %v1437
  %v1439 = vpop.f32.mrf.mxu0
  %1440 = vmatprep.mubr.bf16.mxu0 0
  %1441 = vmatmul.mubr.bf16.gmra.mxu0 %v869
  %v1442 = vpop.f32.mrf.mxu0
  %v1443 = vadd.f32 %v1154, %v1442
  %v1444 = vpop.f32.mrf.mxu0
  %v1445 = vpop.f32.mrf.mxu0
  %v1446 = vadd.f32 %v1157, %v1445
  %v1447 = vpop.f32.mrf.mxu0
  %1448 = vdwg.mxu0
  %vm1449 = vcmp.ge.f32.partialorder %v1195, 0.0
  %vm1450 = vcmp.ge.f32.partialorder %v1198, 0.0
  %vm1451 = vcmp.ge.f32.partialorder %v1203, 0.0
  %vm1452 = vcmp.ge.f32.partialorder %v1206, 0.0
  %vm1453 = vcmp.ge.f32.partialorder %v1211, 0.0
  %vm1454 = vcmp.ge.f32.partialorder %v1214, 0.0
  %vm1455 = vcmp.ge.f32.partialorder %v1219, 0.0
  %vm1456 = vcmp.ge.f32.partialorder %v1222, 0.0
  %vm1457 = vcmp.ge.f32.partialorder %v1227, 0.0
  %vm1458 = vcmp.ge.f32.partialorder %v1230, 0.0
  %vm1459 = vcmp.ge.f32.partialorder %v1235, 0.0
  %vm1460 = vcmp.ge.f32.partialorder %v1238, 0.0
  %vm1461 = vcmp.ge.f32.partialorder %v1243, 0.0
  %vm1462 = vcmp.ge.f32.partialorder %v1246, 0.0
  %vm1463 = vcmp.ge.f32.partialorder %v1251, 0.0
  %vm1464 = vcmp.ge.f32.partialorder %v1254, 0.0
  %vm1465 = vcmp.ge.f32.partialorder %v1259, 0.0
  %vm1466 = vcmp.ge.f32.partialorder %v1262, 0.0
  %vm1467 = vcmp.ge.f32.partialorder %v1267, 0.0
  %vm1468 = vcmp.ge.f32.partialorder %v1270, 0.0
  %vm1469 = vcmp.ge.f32.partialorder %v1275, 0.0
  %vm1470 = vcmp.ge.f32.partialorder %v1278, 0.0
  %vm1471 = vcmp.ge.f32.partialorder %v1283, 0.0
  %vm1472 = vcmp.ge.f32.partialorder %v1286, 0.0
  %vm1473 = vcmp.ge.f32.partialorder %v1291, 0.0
  %vm1474 = vcmp.ge.f32.partialorder %v1294, 0.0
  %vm1475 = vcmp.ge.f32.partialorder %v1299, 0.0
  %vm1476 = vcmp.ge.f32.partialorder %v1302, 0.0
  %vm1477 = vcmp.ge.f32.partialorder %v1307, 0.0
  %vm1478 = vcmp.ge.f32.partialorder %v1310, 0.0
  %vm1479 = vcmp.ge.f32.partialorder %v1315, 0.0
  %vm1480 = vcmp.ge.f32.partialorder %v1318, 0.0
  %vm1481 = vcmp.ge.f32.partialorder %v1323, 0.0
  %vm1482 = vcmp.ge.f32.partialorder %v1326, 0.0
  %vm1483 = vcmp.ge.f32.partialorder %v1331, 0.0
  %vm1484 = vcmp.ge.f32.partialorder %v1334, 0.0
  %vm1485 = vcmp.ge.f32.partialorder %v1339, 0.0
  %vm1486 = vcmp.ge.f32.partialorder %v1342, 0.0
  %vm1487 = vcmp.ge.f32.partialorder %v1347, 0.0
  %vm1488 = vcmp.ge.f32.partialorder %v1350, 0.0
  %vm1489 = vcmp.ge.f32.partialorder %v1355, 0.0
  %vm1490 = vcmp.ge.f32.partialorder %v1358, 0.0
  %vm1491 = vcmp.ge.f32.partialorder %v1363, 0.0
  %vm1492 = vcmp.ge.f32.partialorder %v1366, 0.0
  %vm1493 = vcmp.ge.f32.partialorder %v1371, 0.0
  %vm1494 = vcmp.ge.f32.partialorder %v1374, 0.0
  %vm1495 = vcmp.ge.f32.partialorder %v1379, 0.0
  %vm1496 = vcmp.ge.f32.partialorder %v1382, 0.0
  %vm1497 = vcmp.ge.f32.partialorder %v1387, 0.0
  %vm1498 = vcmp.ge.f32.partialorder %v1390, 0.0
  %vm1499 = vcmp.ge.f32.partialorder %v1395, 0.0
  %vm1500 = vcmp.ge.f32.partialorder %v1398, 0.0
  %vm1501 = vcmp.ge.f32.partialorder %v1403, 0.0
  %vm1502 = vcmp.ge.f32.partialorder %v1406, 0.0
  %vm1503 = vcmp.ge.f32.partialorder %v1411, 0.0
  %vm1504 = vcmp.ge.f32.partialorder %v1414, 0.0
  %vm1505 = vcmp.ge.f32.partialorder %v1419, 0.0
  %vm1506 = vcmp.ge.f32.partialorder %v1422, 0.0
  %vm1507 = vcmp.ge.f32.partialorder %v1427, 0.0
  %vm1508 = vcmp.ge.f32.partialorder %v1430, 0.0
  %vm1509 = vcmp.ge.f32.partialorder %v1435, 0.0
  %vm1510 = vcmp.ge.f32.partialorder %v1438, 0.0
  %vm1511 = vcmp.ge.f32.partialorder %v1443, 0.0
  %vm1512 = vcmp.ge.f32.partialorder %v1446, 0.0
  %v1513 = vmul.f32 %v1195, 0.2
  %v1514 = vmul.f32 %v1198, 0.2
  %v1515 = vmul.f32 %v1203, 0.2
  %v1516 = vmul.f32 %v1206, 0.2
  %v1517 = vmul.f32 %v1211, 0.2
  %v1518 = vmul.f32 %v1214, 0.2
  %v1519 = vmul.f32 %v1219, 0.2
  %v1520 = vmul.f32 %v1222, 0.2
  %v1521 = vmul.f32 %v1227, 0.2
  %v1522 = vmul.f32 %v1230, 0.2
  %v1523 = vmul.f32 %v1235, 0.2
  %v1524 = vmul.f32 %v1238, 0.2
  %v1525 = vmul.f32 %v1243, 0.2
  %v1526 = vmul.f32 %v1246, 0.2
  %v1527 = vmul.f32 %v1251, 0.2
  %v1528 = vmul.f32 %v1254, 0.2
  %v1529 = vmul.f32 %v1259, 0.2
  %v1530 = vmul.f32 %v1262, 0.2
  %v1531 = vmul.f32 %v1267, 0.2
  %v1532 = vmul.f32 %v1270, 0.2
  %v1533 = vmul.f32 %v1275, 0.2
  %v1534 = vmul.f32 %v1278, 0.2
  %v1535 = vmul.f32 %v1283, 0.2
  %v1536 = vmul.f32 %v1286, 0.2
  %v1537 = vmul.f32 %v1291, 0.2
  %v1538 = vmul.f32 %v1294, 0.2
  %v1539 = vmul.f32 %v1299, 0.2
  %v1540 = vmul.f32 %v1302, 0.2
  %v1541 = vmul.f32 %v1307, 0.2
  %v1542 = vmul.f32 %v1310, 0.2
  %v1543 = vmul.f32 %v1315, 0.2
  %v1544 = vmul.f32 %v1318, 0.2
  %v1545 = vmul.f32 %v1323, 0.2
  %v1546 = vmul.f32 %v1326, 0.2
  %v1547 = vmul.f32 %v1331, 0.2
  %v1548 = vmul.f32 %v1334, 0.2
  %v1549 = vmul.f32 %v1339, 0.2
  %v1550 = vmul.f32 %v1342, 0.2
  %v1551 = vmul.f32 %v1347, 0.2
  %v1552 = vmul.f32 %v1350, 0.2
  %v1553 = vmul.f32 %v1355, 0.2
  %v1554 = vmul.f32 %v1358, 0.2
  %v1555 = vmul.f32 %v1363, 0.2
  %v1556 = vmul.f32 %v1366, 0.2
  %v1557 = vmul.f32 %v1371, 0.2
  %v1558 = vmul.f32 %v1374, 0.2
  %v1559 = vmul.f32 %v1379, 0.2
  %v1560 = vmul.f32 %v1382, 0.2
  %v1561 = vmul.f32 %v1387, 0.2
  %v1562 = vmul.f32 %v1390, 0.2
  %v1563 = vmul.f32 %v1395, 0.2
  %v1564 = vmul.f32 %v1398, 0.2
  %v1565 = vmul.f32 %v1403, 0.2
  %v1566 = vmul.f32 %v1406, 0.2
  %v1567 = vmul.f32 %v1411, 0.2
  %v1568 = vmul.f32 %v1414, 0.2
  %v1569 = vmul.f32 %v1419, 0.2
  %v1570 = vmul.f32 %v1422, 0.2
  %v1571 = vmul.f32 %v1427, 0.2
  %v1572 = vmul.f32 %v1430, 0.2
  %v1573 = vmul.f32 %v1435, 0.2
  %v1574 = vmul.f32 %v1438, 0.2
  %v1575 = vmul.f32 %v1443, 0.2
  %v1576 = vmul.f32 %v1446, 0.2
  %v1577 = vsel %vm1449, %v1195, %v1513
  %v1578 = vsel %vm1450, %v1198, %v1514
  %v1579 = vsel %vm1451, %v1203, %v1515
  %v1580 = vsel %vm1452, %v1206, %v1516
  %v1581 = vsel %vm1453, %v1211, %v1517
  %v1582 = vsel %vm1454, %v1214, %v1518
  %v1583 = vsel %vm1455, %v1219, %v1519
  %v1584 = vsel %vm1456, %v1222, %v1520
  %v1585 = vsel %vm1457, %v1227, %v1521
  %v1586 = vsel %vm1458, %v1230, %v1522
  %v1587 = vsel %vm1459, %v1235, %v1523
  %v1588 = vsel %vm1460, %v1238, %v1524
  %v1589 = vsel %vm1461, %v1243, %v1525
  %v1590 = vsel %vm1462, %v1246, %v1526
  %v1591 = vsel %vm1463, %v1251, %v1527
  %v1592 = vsel %vm1464, %v1254, %v1528
  %v1593 = vsel %vm1465, %v1259, %v1529
  %v1594 = vsel %vm1466, %v1262, %v1530
  %v1595 = vsel %vm1467, %v1267, %v1531
  %v1596 = vsel %vm1468, %v1270, %v1532
  %v1597 = vsel %vm1469, %v1275, %v1533
  %v1598 = vsel %vm1470, %v1278, %v1534
  %v1599 = vsel %vm1471, %v1283, %v1535
  %v1600 = vsel %vm1472, %v1286, %v1536
  %v1601 = vsel %vm1473, %v1291, %v1537
  %v1602 = vsel %vm1474, %v1294, %v1538
  %v1603 = vsel %vm1475, %v1299, %v1539
  %v1604 = vsel %vm1476, %v1302, %v1540
  %v1605 = vsel %vm1477, %v1307, %v1541
  %v1606 = vsel %vm1478, %v1310, %v1542
  %v1607 = vsel %vm1479, %v1315, %v1543
  %v1608 = vsel %vm1480, %v1318, %v1544
  %v1609 = vsel %vm1481, %v1323, %v1545
  %v1610 = vsel %vm1482, %v1326, %v1546
  %v1611 = vsel %vm1483, %v1331, %v1547
  %v1612 = vsel %vm1484, %v1334, %v1548
  %v1613 = vsel %vm1485, %v1339, %v1549
  %v1614 = vsel %vm1486, %v1342, %v1550
  %v1615 = vsel %vm1487, %v1347, %v1551
  %v1616 = vsel %vm1488, %v1350, %v1552
  %v1617 = vsel %vm1489, %v1355, %v1553
  %v1618 = vsel %vm1490, %v1358, %v1554
  %v1619 = vsel %vm1491, %v1363, %v1555
  %v1620 = vsel %vm1492, %v1366, %v1556
  %v1621 = vsel %vm1493, %v1371, %v1557
  %v1622 = vsel %vm1494, %v1374, %v1558
  %v1623 = vsel %vm1495, %v1379, %v1559
  %v1624 = vsel %vm1496, %v1382, %v1560
  %v1625 = vsel %vm1497, %v1387, %v1561
  %v1626 = vsel %vm1498, %v1390, %v1562
  %v1627 = vsel %vm1499, %v1395, %v1563
  %v1628 = vsel %vm1500, %v1398, %v1564
  %v1629 = vsel %vm1501, %v1403, %v1565
  %v1630 = vsel %vm1502, %v1406, %v1566
  %v1631 = vsel %vm1503, %v1411, %v1567
  %v1632 = vsel %vm1504, %v1414, %v1568
  %v1633 = vsel %vm1505, %v1419, %v1569
  %v1634 = vsel %vm1506, %v1422, %v1570
  %v1635 = vsel %vm1507, %v1427, %v1571
  %v1636 = vsel %vm1508, %v1430, %v1572
  %v1637 = vsel %vm1509, %v1435, %v1573
  %v1638 = vsel %vm1510, %v1438, %v1574
  %v1639 = vsel %vm1511, %v1443, %v1575
  %v1640 = vsel %vm1512, %v1446, %v1576
  %v1641 = vpack.c.bf16 %v1578, %v1577
  %v1642 = vpack.c.bf16 %v1580, %v1579
  %v1643 = vpack.c.bf16 %v1582, %v1581
  %v1644 = vpack.c.bf16 %v1584, %v1583
  %v1645 = vpack.c.bf16 %v1586, %v1585
  %v1646 = vpack.c.bf16 %v1588, %v1587
  %v1647 = vpack.c.bf16 %v1590, %v1589
  %v1648 = vpack.c.bf16 %v1592, %v1591
  %v1649 = vpack.c.bf16 %v1594, %v1593
  %v1650 = vpack.c.bf16 %v1596, %v1595
  %v1651 = vpack.c.bf16 %v1598, %v1597
  %v1652 = vpack.c.bf16 %v1600, %v1599
  %v1653 = vpack.c.bf16 %v1602, %v1601
  %v1654 = vpack.c.bf16 %v1604, %v1603
  %v1655 = vpack.c.bf16 %v1606, %v1605
  %v1656 = vpack.c.bf16 %v1608, %v1607
  %v1657 = vpack.c.bf16 %v1610, %v1609
  %v1658 = vpack.c.bf16 %v1612, %v1611
  %v1659 = vpack.c.bf16 %v1614, %v1613
  %v1660 = vpack.c.bf16 %v1616, %v1615
  %v1661 = vpack.c.bf16 %v1618, %v1617
  %v1662 = vpack.c.bf16 %v1620, %v1619
  %v1663 = vpack.c.bf16 %v1622, %v1621
  %v1664 = vpack.c.bf16 %v1624, %v1623
  %v1665 = vpack.c.bf16 %v1626, %v1625
  %v1666 = vpack.c.bf16 %v1628, %v1627
  %v1667 = vpack.c.bf16 %v1630, %v1629
  %v1668 = vpack.c.bf16 %v1632, %v1631
  %v1669 = vpack.c.bf16 %v1634, %v1633
  %v1670 = vpack.c.bf16 %v1636, %v1635
  %v1671 = vpack.c.bf16 %v1638, %v1637
  %v1672 = vpack.c.bf16 %v1640, %v1639
  %v1705 = vunpack.c.l.b16 %v1641
  %v1706 = vunpack.c.h.b16 %v1641
  %v1707 = vunpack.c.l.b16 %v1642
  %v1708 = vunpack.c.h.b16 %v1642
  %v1709 = vunpack.c.l.b16 %v1643
  %v1710 = vunpack.c.h.b16 %v1643
  %v1711 = vunpack.c.l.b16 %v1644
  %v1712 = vunpack.c.h.b16 %v1644
  %v1713 = vunpack.c.l.b16 %v1645
  %v1714 = vunpack.c.h.b16 %v1645
  %v1715 = vunpack.c.l.b16 %v1646
  %v1716 = vunpack.c.h.b16 %v1646
  %v1717 = vunpack.c.l.b16 %v1647
  %v1718 = vunpack.c.h.b16 %v1647
  %v1719 = vunpack.c.l.b16 %v1648
  %v1720 = vunpack.c.h.b16 %v1648
  %v1721 = vunpack.c.l.b16 %v1649
  %v1722 = vunpack.c.h.b16 %v1649
  %v1723 = vunpack.c.l.b16 %v1650
  %v1724 = vunpack.c.h.b16 %v1650
  %v1725 = vunpack.c.l.b16 %v1651
  %v1726 = vunpack.c.h.b16 %v1651
  %v1727 = vunpack.c.l.b16 %v1652
  %v1728 = vunpack.c.h.b16 %v1652
  %v1729 = vunpack.c.l.b16 %v1653
  %v1730 = vunpack.c.h.b16 %v1653
  %v1731 = vunpack.c.l.b16 %v1654
  %v1732 = vunpack.c.h.b16 %v1654
  %v1733 = vunpack.c.l.b16 %v1655
  %v1734 = vunpack.c.h.b16 %v1655
  %v1735 = vunpack.c.l.b16 %v1656
  %v1736 = vunpack.c.h.b16 %v1656
  %v1737 = vunpack.c.l.b16 %v1657
  %v1738 = vunpack.c.h.b16 %v1657
  %v1739 = vunpack.c.l.b16 %v1658
  %v1740 = vunpack.c.h.b16 %v1658
  %v1741 = vunpack.c.l.b16 %v1659
  %v1742 = vunpack.c.h.b16 %v1659
  %v1743 = vunpack.c.l.b16 %v1660
  %v1744 = vunpack.c.h.b16 %v1660
  %v1745 = vunpack.c.l.b16 %v1661
  %v1746 = vunpack.c.h.b16 %v1661
  %v1747 = vunpack.c.l.b16 %v1662
  %v1748 = vunpack.c.h.b16 %v1662
  %v1749 = vunpack.c.l.b16 %v1663
  %v1750 = vunpack.c.h.b16 %v1663
  %v1751 = vunpack.c.l.b16 %v1664
  %v1752 = vunpack.c.h.b16 %v1664
  %v1753 = vunpack.c.l.b16 %v1665
  %v1754 = vunpack.c.h.b16 %v1665
  %v1755 = vunpack.c.l.b16 %v1666
  %v1756 = vunpack.c.h.b16 %v1666
  %v1757 = vunpack.c.l.b16 %v1667
  %v1758 = vunpack.c.h.b16 %v1667
  %v1759 = vunpack.c.l.b16 %v1668
  %v1760 = vunpack.c.h.b16 %v1668
  %v1761 = vunpack.c.l.b16 %v1669
  %v1762 = vunpack.c.h.b16 %v1669
  %v1763 = vunpack.c.l.b16 %v1670
  %v1764 = vunpack.c.h.b16 %v1670
  %v1765 = vunpack.c.l.b16 %v1671
  %v1766 = vunpack.c.h.b16 %v1671
  %v1767 = vunpack.c.l.b16 %v1672
  %v1768 = vunpack.c.h.b16 %v1672
  %v1769 = vpack.c.b16 %v1705, %v1705
  %v1770 = vpack.c.b16 %v1706, %v1706
  %v1771 = vpack.c.b16 %v1707, %v1707
  %v1772 = vpack.c.b16 %v1708, %v1708
  %v1773 = vpack.c.b16 %v1709, %v1709
  %v1774 = vpack.c.b16 %v1710, %v1710
  %v1775 = vpack.c.b16 %v1711, %v1711
  %v1776 = vpack.c.b16 %v1712, %v1712
  %v1777 = vpack.c.b16 %v1713, %v1713
  %v1778 = vpack.c.b16 %v1714, %v1714
  %v1779 = vpack.c.b16 %v1715, %v1715
  %v1780 = vpack.c.b16 %v1716, %v1716
  %v1781 = vpack.c.b16 %v1717, %v1717
  %v1782 = vpack.c.b16 %v1718, %v1718
  %v1783 = vpack.c.b16 %v1719, %v1719
  %v1784 = vpack.c.b16 %v1720, %v1720
  %v1785 = vpack.c.b16 %v1721, %v1721
  %v1786 = vpack.c.b16 %v1722, %v1722
  %v1787 = vpack.c.b16 %v1723, %v1723
  %v1788 = vpack.c.b16 %v1724, %v1724
  %v1789 = vpack.c.b16 %v1725, %v1725
  %v1790 = vpack.c.b16 %v1726, %v1726
  %v1791 = vpack.c.b16 %v1727, %v1727
  %v1792 = vpack.c.b16 %v1728, %v1728
  %v1793 = vpack.c.b16 %v1729, %v1729
  %v1794 = vpack.c.b16 %v1730, %v1730
  %v1795 = vpack.c.b16 %v1731, %v1731
  %v1796 = vpack.c.b16 %v1732, %v1732
  %v1797 = vpack.c.b16 %v1733, %v1733
  %v1798 = vpack.c.b16 %v1734, %v1734
  %v1799 = vpack.c.b16 %v1735, %v1735
  %v1800 = vpack.c.b16 %v1736, %v1736
  %v1801 = vpack.c.b16 %v1737, %v1737
  %v1802 = vpack.c.b16 %v1738, %v1738
  %v1803 = vpack.c.b16 %v1739, %v1739
  %v1804 = vpack.c.b16 %v1740, %v1740
  %v1805 = vpack.c.b16 %v1741, %v1741
  %v1806 = vpack.c.b16 %v1742, %v1742
  %v1807 = vpack.c.b16 %v1743, %v1743
  %v1808 = vpack.c.b16 %v1744, %v1744
  %v1809 = vpack.c.b16 %v1745, %v1745
  %v1810 = vpack.c.b16 %v1746, %v1746
  %v1811 = vpack.c.b16 %v1747, %v1747
  %v1812 = vpack.c.b16 %v1748, %v1748
  %v1813 = vpack.c.b16 %v1749, %v1749
  %v1814 = vpack.c.b16 %v1750, %v1750
  %v1815 = vpack.c.b16 %v1751, %v1751
  %v1816 = vpack.c.b16 %v1752, %v1752
  %v1817 = vpack.c.b16 %v1753, %v1753
  %v1818 = vpack.c.b16 %v1754, %v1754
  %v1819 = vpack.c.b16 %v1755, %v1755
  %v1820 = vpack.c.b16 %v1756, %v1756
  %v1821 = vpack.c.b16 %v1757, %v1757
  %v1822 = vpack.c.b16 %v1758, %v1758
  %v1823 = vpack.c.b16 %v1759, %v1759
  %v1824 = vpack.c.b16 %v1760, %v1760
  %v1825 = vpack.c.b16 %v1761, %v1761
  %v1826 = vpack.c.b16 %v1762, %v1762
  %v1827 = vpack.c.b16 %v1763, %v1763
  %v1828 = vpack.c.b16 %v1764, %v1764
  %v1829 = vpack.c.b16 %v1765, %v1765
  %v1830 = vpack.c.b16 %v1766, %v1766
  %v1831 = vpack.c.b16 %v1767, %v1767
  %v1832 = vpack.c.b16 %v1768, %v1768
  %vm1897 = vcmask 519168
  %1898 = vst.msk [vmem:[%s3] sm:$0xf] %vm1897, %v1769
  %1899 = vst.msk [vmem:[%s3 + $0x4] sm:$0xf] %vm1897, %v1770
  %1900 = vst.msk [vmem:[%s3 + $0x8] sm:$0xf] %vm1897, %v1771
  %1901 = vst.msk [vmem:[%s3 + $0xc] sm:$0xf] %vm1897, %v1772
  %1902 = vst.msk [vmem:[%s3 + $0x10] sm:$0xf] %vm1897, %v1773
  %1903 = vst.msk [vmem:[%s3 + $0x14] sm:$0xf] %vm1897, %v1774
  %1904 = vst.msk [vmem:[%s3 + $0x18] sm:$0xf] %vm1897, %v1775
  %1905 = vst.msk [vmem:[%s3 + $0x1c] sm:$0xf] %vm1897, %v1776
  %1906 = vst.msk [vmem:[%s3 + $0x20] sm:$0xf] %vm1897, %v1777
  %1907 = vst.msk [vmem:[%s3 + $0x24] sm:$0xf] %vm1897, %v1778
  %1908 = vst.msk [vmem:[%s3 + $0x28] sm:$0xf] %vm1897, %v1779
  %1909 = vst.msk [vmem:[%s3 + $0x2c] sm:$0xf] %vm1897, %v1780
  %1910 = vst.msk [vmem:[%s3 + $0x30] sm:$0xf] %vm1897, %v1781
  %1911 = vst.msk [vmem:[%s3 + $0x34] sm:$0xf] %vm1897, %v1782
  %1912 = vst.msk [vmem:[%s3 + $0x38] sm:$0xf] %vm1897, %v1783
  %1913 = vst.msk [vmem:[%s3 + $0x3c] sm:$0xf] %vm1897, %v1784
  %1914 = vst.msk [vmem:[%s3 + $0x40] sm:$0xf] %vm1897, %v1785
  %1915 = vst.msk [vmem:[%s3 + $0x44] sm:$0xf] %vm1897, %v1786
  %1916 = vst.msk [vmem:[%s3 + $0x48] sm:$0xf] %vm1897, %v1787
  %1917 = vst.msk [vmem:[%s3 + $0x4c] sm:$0xf] %vm1897, %v1788
  %1918 = vst.msk [vmem:[%s3 + $0x50] sm:$0xf] %vm1897, %v1789
  %1919 = vst.msk [vmem:[%s3 + $0x54] sm:$0xf] %vm1897, %v1790
  %1920 = vst.msk [vmem:[%s3 + $0x58] sm:$0xf] %vm1897, %v1791
  %1921 = vst.msk [vmem:[%s3 + $0x5c] sm:$0xf] %vm1897, %v1792
  %1922 = vst.msk [vmem:[%s3 + $0x60] sm:$0xf] %vm1897, %v1793
  %1923 = vst.msk [vmem:[%s3 + $0x64] sm:$0xf] %vm1897, %v1794
  %1924 = vst.msk [vmem:[%s3 + $0x68] sm:$0xf] %vm1897, %v1795
  %1925 = vst.msk [vmem:[%s3 + $0x6c] sm:$0xf] %vm1897, %v1796
  %1926 = vst.msk [vmem:[%s3 + $0x70] sm:$0xf] %vm1897, %v1797
  %1927 = vst.msk [vmem:[%s3 + $0x74] sm:$0xf] %vm1897, %v1798
  %1928 = vst.msk [vmem:[%s3 + $0x78] sm:$0xf] %vm1897, %v1799
  %1929 = vst.msk [vmem:[%s3 + $0x7c] sm:$0xf] %vm1897, %v1800
  %1930 = vst.msk [vmem:[%s3 + $0x80] sm:$0xf] %vm1897, %v1801
  %1931 = vst.msk [vmem:[%s3 + $0x84] sm:$0xf] %vm1897, %v1802
  %1932 = vst.msk [vmem:[%s3 + $0x88] sm:$0xf] %vm1897, %v1803
  %1933 = vst.msk [vmem:[%s3 + $0x8c] sm:$0xf] %vm1897, %v1804
  %1934 = vst.msk [vmem:[%s3 + $0x90] sm:$0xf] %vm1897, %v1805
  %1935 = vst.msk [vmem:[%s3 + $0x94] sm:$0xf] %vm1897, %v1806
  %1936 = vst.msk [vmem:[%s3 + $0x98] sm:$0xf] %vm1897, %v1807
  %1937 = vst.msk [vmem:[%s3 + $0x9c] sm:$0xf] %vm1897, %v1808
  %1938 = vst.msk [vmem:[%s3 + $0xa0] sm:$0xf] %vm1897, %v1809
  %1939 = vst.msk [vmem:[%s3 + $0xa4] sm:$0xf] %vm1897, %v1810
  %1940 = vst.msk [vmem:[%s3 + $0xa8] sm:$0xf] %vm1897, %v1811
  %1941 = vst.msk [vmem:[%s3 + $0xac] sm:$0xf] %vm1897, %v1812
  %1942 = vst.msk [vmem:[%s3 + $0xb0] sm:$0xf] %vm1897, %v1813
  %1943 = vst.msk [vmem:[%s3 + $0xb4] sm:$0xf] %vm1897, %v1814
  %1944 = vst.msk [vmem:[%s3 + $0xb8] sm:$0xf] %vm1897, %v1815
  %1945 = vst.msk [vmem:[%s3 + $0xbc] sm:$0xf] %vm1897, %v1816
  %1946 = vst.msk [vmem:[%s3 + $0xc0] sm:$0xf] %vm1897, %v1817
  %1947 = vst.msk [vmem:[%s3 + $0xc4] sm:$0xf] %vm1897, %v1818
  %1948 = vst.msk [vmem:[%s3 + $0xc8] sm:$0xf] %vm1897, %v1819
  %1949 = vst.msk [vmem:[%s3 + $0xcc] sm:$0xf] %vm1897, %v1820
  %1950 = vst.msk [vmem:[%s3 + $0xd0] sm:$0xf] %vm1897, %v1821
  %1951 = vst.msk [vmem:[%s3 + $0xd4] sm:$0xf] %vm1897, %v1822
  %1952 = vst.msk [vmem:[%s3 + $0xd8] sm:$0xf] %vm1897, %v1823
  %1953 = vst.msk [vmem:[%s3 + $0xdc] sm:$0xf] %vm1897, %v1824
  %1954 = vst.msk [vmem:[%s3 + $0xe0] sm:$0xf] %vm1897, %v1825
  %1955 = vst.msk [vmem:[%s3 + $0xe4] sm:$0xf] %vm1897, %v1826
  %1956 = vst.msk [vmem:[%s3 + $0xe8] sm:$0xf] %vm1897, %v1827
  %1957 = vst.msk [vmem:[%s3 + $0xec] sm:$0xf] %vm1897, %v1828
  %1958 = vst.msk [vmem:[%s3 + $0xf0] sm:$0xf] %vm1897, %v1829
  %1959 = vst.msk [vmem:[%s3 + $0xf4] sm:$0xf] %vm1897, %v1830
  %1960 = vst.msk [vmem:[%s3 + $0xf8] sm:$0xf] %vm1897, %v1831
  %1961 = vst.msk [vmem:[%s3 + $0xfc] sm:$0xf] %vm1897, %v1832
  // Predicated region
  $region14: #{discriminator_forward.5} parent=0 // pred_check
    _
  $region15: #{discriminator_forward.5} parent=0 // pred_check_branch
    %1963 = sbr.rel (0) target = $region17
  $region16: #{discriminator_forward.5} parent=0 // pred_region
    _
  $region17: #{discriminator_forward.5} parent=0 // pred_fallthru
    _
  // Predicated region
  $region18: #{discriminator_forward.5} parent=0 // pred_check
    _
  $region19: #{discriminator_forward.5} parent=0 // pred_check_branch
    %1965 = sbr.rel (0) target = $region21
  $region20: #{discriminator_forward.5} parent=0 // pred_region
    _
  $region21: #{discriminator_forward.5} parent=0 // pred_fallthru
    _

// kernel: discriminator_forward.6
$region0: #{discriminator_forward.6}
  #allocation0 [shape = 'u32[]', space=smem, size = 0x4, offset = 0x4, fixed_abs, tag = 'smem constant byte address 0x4 - core index']
  #allocation1 [shape = 'u32[144,128]{1,0:T(1,128)}', space=vmem, size = 0x12000, scoped, tag = 'internal scratch']
  %s0 = inlined_call_operand.vmem [shape: bf16[128,576], index: 0, kind: input, shape index: {}]
  %s1 = inlined_call_operand.vmem [shape: bf16[576,128], index: 1, kind: input, shape index: {}]
  %s2 = inlined_call_operand.vmem [shape: f32[1,128], index: 2, kind: input, shape index: {}]
  %s3 = inlined_call_operand.vmem [shape: bf16[128,128], index: 3, kind: output, shape index: {}]
  %s4 = sld [smem:[#allocation0]]
  $region22: #{discriminator_forward.6} parent=0
    _
  %s6 = ssub.s32 1, %s4
  %s7 = scalar_select 0, %s6, %s4
  // Predicated region
  $region2: #{discriminator_forward.6} parent=0 // pred_check
    _
  $region3: #{discriminator_forward.6} parent=0 // pred_check_branch
    %9 = sbr.rel (0) target = $region5
  $region4: #{discriminator_forward.6} parent=0 // pred_region
    _
  $region5: #{discriminator_forward.6} parent=0 // pred_fallthru
    _
  // Predicated region
  $region6: #{discriminator_forward.6} parent=0 // pred_check
    _
  $region7: #{discriminator_forward.6} parent=0 // pred_check_branch
    %11 = sbr.rel (0) target = $region9
  $region8: #{discriminator_forward.6} parent=0 // pred_region
    _
  $region9: #{discriminator_forward.6} parent=0 // pred_fallthru
    _
  // Predicated region
  $region10: #{discriminator_forward.6} parent=0 // pred_check
    _
  $region11: #{discriminator_forward.6} parent=0 // pred_check_branch
    %13 = sbr.rel (0) target = $region13
  $region12: #{discriminator_forward.6} parent=0 // pred_region
    _
  $region13: #{discriminator_forward.6} parent=0 // pred_fallthru
    _
  %v15 = vld [vmem:[%s0] sm:$0xff]
  %v16 = vld [vmem:[%s0 + $0x8] sm:$0xff]
  %v17 = vld [vmem:[%s0 + $0x10] sm:$0xf]
  %v18 = vld [vmem:[%s0 + $0x14] sm:$0xff]
  %v19 = vld [vmem:[%s0 + $0x1c] sm:$0xff]
  %v20 = vld [vmem:[%s0 + $0x24] sm:$0xf]
  %v21 = vld [vmem:[%s0 + $0x28] sm:$0xff]
  %v22 = vld [vmem:[%s0 + $0x30] sm:$0xff]
  %v23 = vld [vmem:[%s0 + $0x38] sm:$0xf]
  %v24 = vld [vmem:[%s0 + $0x3c] sm:$0xff]
  %v25 = vld [vmem:[%s0 + $0x44] sm:$0xff]
  %v26 = vld [vmem:[%s0 + $0x4c] sm:$0xf]
  %v27 = vld [vmem:[%s0 + $0x50] sm:$0xff]
  %v28 = vld [vmem:[%s0 + $0x58] sm:$0xff]
  %v29 = vld [vmem:[%s0 + $0x60] sm:$0xf]
  %v30 = vld [vmem:[%s0 + $0x64] sm:$0xff]
  %v31 = vld [vmem:[%s0 + $0x6c] sm:$0xff]
  %v32 = vld [vmem:[%s0 + $0x74] sm:$0xf]
  %v33 = vld [vmem:[%s0 + $0x78] sm:$0xff]
  %v34 = vld [vmem:[%s0 + $0x80] sm:$0xff]
  %v35 = vld [vmem:[%s0 + $0x88] sm:$0xf]
  %v36 = vld [vmem:[%s0 + $0x8c] sm:$0xff]
  %v37 = vld [vmem:[%s0 + $0x94] sm:$0xff]
  %v38 = vld [vmem:[%s0 + $0x9c] sm:$0xf]
  %v39 = vld [vmem:[%s0 + $0xa0] sm:$0xff]
  %v40 = vld [vmem:[%s0 + $0xa8] sm:$0xff]
  %v41 = vld [vmem:[%s0 + $0xb0] sm:$0xf]
  %v42 = vld [vmem:[%s0 + $0xb4] sm:$0xff]
  %v43 = vld [vmem:[%s0 + $0xbc] sm:$0xff]
  %v44 = vld [vmem:[%s0 + $0xc4] sm:$0xf]
  %v45 = vld [vmem:[%s0 + $0xc8] sm:$0xff]
  %v46 = vld [vmem:[%s0 + $0xd0] sm:$0xff]
  %v47 = vld [vmem:[%s0 + $0xd8] sm:$0xf]
  %v48 = vld [vmem:[%s0 + $0xdc] sm:$0xff]
  %v49 = vld [vmem:[%s0 + $0xe4] sm:$0xff]
  %v50 = vld [vmem:[%s0 + $0xec] sm:$0xf]
  %v51 = vld [vmem:[%s0 + $0xf0] sm:$0xff]
  %v52 = vld [vmem:[%s0 + $0xf8] sm:$0xff]
  %v53 = vld [vmem:[%s0 + $0x100] sm:$0xf]
  %v54 = vld [vmem:[%s0 + $0x104] sm:$0xff]
  %v55 = vld [vmem:[%s0 + $0x10c] sm:$0xff]
  %v56 = vld [vmem:[%s0 + $0x114] sm:$0xf]
  %v57 = vld [vmem:[%s0 + $0x118] sm:$0xff]
  %v58 = vld [vmem:[%s0 + $0x120] sm:$0xff]
  %v59 = vld [vmem:[%s0 + $0x128] sm:$0xf]
  %v60 = vld [vmem:[%s0 + $0x12c] sm:$0xff]
  %v61 = vld [vmem:[%s0 + $0x134] sm:$0xff]
  %v62 = vld [vmem:[%s0 + $0x13c] sm:$0xf]
  %v63 = vld [vmem:[%s1] sm:$0xf]
  %v64 = vld [vmem:[%s1 + $0x4] sm:$0xf]
  %v65 = vld [vmem:[%s1 + $0x8] sm:$0xf]
  %v66 = vld [vmem:[%s1 + $0xc] sm:$0xf]
  %v67 = vld [vmem:[%s1 + $0x10] sm:$0xf]
  %v68 = vld [vmem:[%s1 + $0x14] sm:$0xf]
  %v69 = vld [vmem:[%s1 + $0x18] sm:$0xf]
  %v70 = vld [vmem:[%s1 + $0x1c] sm:$0xf]
  %v71 = vld [vmem:[%s1 + $0x20] sm:$0xf]
  %v72 = vld [vmem:[%s1 + $0x24] sm:$0xf]
  %v73 = vld [vmem:[%s1 + $0x28] sm:$0xf]
  %v74 = vld [vmem:[%s1 + $0x2c] sm:$0xf]
  %v75 = vld [vmem:[%s1 + $0x30] sm:$0xf]
  %v76 = vld [vmem:[%s1 + $0x34] sm:$0xf]
  %v77 = vld [vmem:[%s1 + $0x38] sm:$0xf]
  %v78 = vld [vmem:[%s1 + $0x3c] sm:$0xf]
  %v79 = vld [vmem:[%s1 + $0x40] sm:$0xf]
  %v80 = vld [vmem:[%s1 + $0x44] sm:$0xf]
  %v81 = vld [vmem:[%s1 + $0x48] sm:$0xf]
  %v82 = vld [vmem:[%s1 + $0x4c] sm:$0xf]
  %v83 = vld [vmem:[%s1 + $0x50] sm:$0xf]
  %v84 = vld [vmem:[%s1 + $0x54] sm:$0xf]
  %v85 = vld [vmem:[%s1 + $0x58] sm:$0xf]
  %v86 = vld [vmem:[%s1 + $0x5c] sm:$0xf]
  %v87 = vld [vmem:[%s1 + $0x60] sm:$0xf]
  %v88 = vld [vmem:[%s1 + $0x64] sm:$0xf]
  %v89 = vld [vmem:[%s1 + $0x68] sm:$0xf]
  %v90 = vld [vmem:[%s1 + $0x6c] sm:$0xf]
  %v91 = vld [vmem:[%s1 + $0x70] sm:$0xf]
  %v92 = vld [vmem:[%s1 + $0x74] sm:$0xf]
  %v93 = vld [vmem:[%s1 + $0x78] sm:$0xf]
  %v94 = vld [vmem:[%s1 + $0x7c] sm:$0xf]
  %v95 = vld [vmem:[%s1 + $0x80] sm:$0xf]
  %v96 = vld [vmem:[%s1 + $0x84] sm:$0xf]
  %v97 = vld [vmem:[%s1 + $0x88] sm:$0xf]
  %v98 = vld [vmem:[%s1 + $0x8c] sm:$0xf]
  %v99 = vld [vmem:[%s1 + $0x90] sm:$0xf]
  %v100 = vld [vmem:[%s1 + $0x94] sm:$0xf]
  %v101 = vld [vmem:[%s1 + $0x98] sm:$0xf]
  %v102 = vld [vmem:[%s1 + $0x9c] sm:$0xf]
  %v103 = vld [vmem:[%s1 + $0xa0] sm:$0xf]
  %v104 = vld [vmem:[%s1 + $0xa4] sm:$0xf]
  %v105 = vld [vmem:[%s1 + $0xa8] sm:$0xf]
  %v106 = vld [vmem:[%s1 + $0xac] sm:$0xf]
  %v107 = vld [vmem:[%s1 + $0xb0] sm:$0xf]
  %v108 = vld [vmem:[%s1 + $0xb4] sm:$0xf]
  %v109 = vld [vmem:[%s1 + $0xb8] sm:$0xf]
  %v110 = vld [vmem:[%s1 + $0xbc] sm:$0xf]
  %v111 = vld [vmem:[%s1 + $0xc0] sm:$0xf]
  %v112 = vld [vmem:[%s1 + $0xc4] sm:$0xf]
  %v113 = vld [vmem:[%s1 + $0xc8] sm:$0xf]
  %v114 = vld [vmem:[%s1 + $0xcc] sm:$0xf]
  %v115 = vld [vmem:[%s1 + $0xd0] sm:$0xf]
  %v116 = vld [vmem:[%s1 + $0xd4] sm:$0xf]
  %v117 = vld [vmem:[%s1 + $0xd8] sm:$0xf]
  %v118 = vld [vmem:[%s1 + $0xdc] sm:$0xf]
  %v119 = vld [vmem:[%s1 + $0xe0] sm:$0xf]
  %v120 = vld [vmem:[%s1 + $0xe4] sm:$0xf]
  %v121 = vld [vmem:[%s1 + $0xe8] sm:$0xf]
  %v122 = vld [vmem:[%s1 + $0xec] sm:$0xf]
  %v123 = vld [vmem:[%s1 + $0xf0] sm:$0xf]
  %v124 = vld [vmem:[%s1 + $0xf4] sm:$0xf]
  %v125 = vld [vmem:[%s1 + $0xf8] sm:$0xf]
  %v126 = vld [vmem:[%s1 + $0xfc] sm:$0xf]
  %v127 = vld [vmem:[%s1 + $0x100] sm:$0xf]
  %v128 = vld [vmem:[%s1 + $0x104] sm:$0xf]
  %v129 = vld [vmem:[%s1 + $0x108] sm:$0xf]
  %v130 = vld [vmem:[%s1 + $0x10c] sm:$0xf]
  %v131 = vld [vmem:[%s1 + $0x110] sm:$0xf]
  %v132 = vld [vmem:[%s1 + $0x114] sm:$0xf]
  %v133 = vld [vmem:[%s1 + $0x118] sm:$0xf]
  %v134 = vld [vmem:[%s1 + $0x11c] sm:$0xf]
  %v135 = vld [vmem:[%s2] sm:$0x1]
  %v137 = vlaneseq
  %v138 = vshrl.u32 %v137, 7
  %v139 = vsub.s32 0, %v138
  %v140 = vrot.slane %v135, %v139
  %v190 = vunpack.c.l.b16 %v15
  %v191 = vunpack.c.h.b16 %v15
  %v192 = vunpack.c.l.b16 %v16
  %v193 = vunpack.c.h.b16 %v16
  %v194 = vunpack.c.l.b16 %v17
  %v195 = vunpack.c.l.b16 %v18
  %v196 = vunpack.c.h.b16 %v18
  %v197 = vunpack.c.l.b16 %v19
  %v198 = vunpack.c.h.b16 %v19
  %v199 = vunpack.c.l.b16 %v20
  %v200 = vunpack.c.l.b16 %v21
  %v201 = vunpack.c.h.b16 %v21
  %v202 = vunpack.c.l.b16 %v22
  %v203 = vunpack.c.h.b16 %v22
  %v204 = vunpack.c.l.b16 %v23
  %v205 = vunpack.c.l.b16 %v24
  %v206 = vunpack.c.h.b16 %v24
  %v207 = vunpack.c.l.b16 %v25
  %v208 = vunpack.c.h.b16 %v25
  %v209 = vunpack.c.l.b16 %v26
  %v210 = vunpack.c.l.b16 %v27
  %v211 = vunpack.c.h.b16 %v27
  %v212 = vunpack.c.l.b16 %v28
  %v213 = vunpack.c.h.b16 %v28
  %v214 = vunpack.c.l.b16 %v29
  %v215 = vunpack.c.l.b16 %v30
  %v216 = vunpack.c.h.b16 %v30
  %v217 = vunpack.c.l.b16 %v31
  %v218 = vunpack.c.h.b16 %v31
  %v219 = vunpack.c.l.b16 %v32
  %v220 = vunpack.c.l.b16 %v33
  %v221 = vunpack.c.h.b16 %v33
  %v222 = vunpack.c.l.b16 %v34
  %v223 = vunpack.c.h.b16 %v34
  %v224 = vunpack.c.l.b16 %v35
  %v225 = vunpack.c.l.b16 %v36
  %v226 = vunpack.c.h.b16 %v36
  %v227 = vunpack.c.l.b16 %v37
  %v228 = vunpack.c.h.b16 %v37
  %v229 = vunpack.c.l.b16 %v38
  %v230 = vunpack.c.l.b16 %v39
  %v231 = vunpack.c.h.b16 %v39
  %v232 = vunpack.c.l.b16 %v40
  %v233 = vunpack.c.h.b16 %v40
  %v234 = vunpack.c.l.b16 %v41
  %v235 = vunpack.c.l.b16 %v42
  %v236 = vunpack.c.h.b16 %v42
  %v237 = vunpack.c.l.b16 %v43
  %v238 = vunpack.c.h.b16 %v43
  %v239 = vunpack.c.l.b16 %v44
  %v240 = vunpack.c.l.b16 %v45
  %v241 = vunpack.c.h.b16 %v45
  %v242 = vunpack.c.l.b16 %v46
  %v243 = vunpack.c.h.b16 %v46
  %v244 = vunpack.c.l.b16 %v47
  %v245 = vunpack.c.l.b16 %v48
  %v246 = vunpack.c.h.b16 %v48
  %v247 = vunpack.c.l.b16 %v49
  %v248 = vunpack.c.h.b16 %v49
  %v249 = vunpack.c.l.b16 %v50
  %v250 = vunpack.c.l.b16 %v51
  %v251 = vunpack.c.h.b16 %v51
  %v252 = vunpack.c.l.b16 %v52
  %v253 = vunpack.c.h.b16 %v52
  %v254 = vunpack.c.l.b16 %v53
  %v255 = vunpack.c.l.b16 %v54
  %v256 = vunpack.c.h.b16 %v54
  %v257 = vunpack.c.l.b16 %v55
  %v258 = vunpack.c.h.b16 %v55
  %v259 = vunpack.c.l.b16 %v56
  %v260 = vunpack.c.l.b16 %v57
  %v261 = vunpack.c.h.b16 %v57
  %v262 = vunpack.c.l.b16 %v58
  %v263 = vunpack.c.h.b16 %v58
  %v264 = vunpack.c.l.b16 %v59
  %v265 = vunpack.c.l.b16 %v60
  %v266 = vunpack.c.h.b16 %v60
  %v267 = vunpack.c.l.b16 %v61
  %v268 = vunpack.c.h.b16 %v61
  %v269 = vunpack.c.l.b16 %v62
  %v270 = vpack.c.b16 %v195, %v190
  %v271 = vpack.c.b16 %v196, %v191
  %v272 = vpack.c.b16 %v197, %v192
  %v273 = vpack.c.b16 %v198, %v193
  %v274 = vpack.c.b16 %v199, %v194
  %v275 = vpack.c.b16 %v205, %v200
  %v276 = vpack.c.b16 %v206, %v201
  %v277 = vpack.c.b16 %v207, %v202
  %v278 = vpack.c.b16 %v208, %v203
  %v279 = vpack.c.b16 %v209, %v204
  %v280 = vpack.c.b16 %v215, %v210
  %v281 = vpack.c.b16 %v216, %v211
  %v282 = vpack.c.b16 %v217, %v212
  %v283 = vpack.c.b16 %v218, %v213
  %v284 = vpack.c.b16 %v219, %v214
  %v285 = vpack.c.b16 %v225, %v220
  %v286 = vpack.c.b16 %v226, %v221
  %v287 = vpack.c.b16 %v227, %v222
  %v288 = vpack.c.b16 %v228, %v223
  %v289 = vpack.c.b16 %v229, %v224
  %v290 = vpack.c.b16 %v235, %v230
  %v291 = vpack.c.b16 %v236, %v231
  %v292 = vpack.c.b16 %v237, %v232
  %v293 = vpack.c.b16 %v238, %v233
  %v294 = vpack.c.b16 %v239, %v234
  %v295 = vpack.c.b16 %v245, %v240
  %v296 = vpack.c.b16 %v246, %v241
  %v297 = vpack.c.b16 %v247, %v242
  %v298 = vpack.c.b16 %v248, %v243
  %v299 = vpack.c.b16 %v249, %v244
  %v300 = vpack.c.b16 %v255, %v250
  %v301 = vpack.c.b16 %v256, %v251
  %v302 = vpack.c.b16 %v257, %v252
  %v303 = vpack.c.b16 %v258, %v253
  %v304 = vpack.c.b16 %v259, %v254
  %v305 = vpack.c.b16 %v265, %v260
  %v306 = vpack.c.b16 %v266, %v261
  %v307 = vpack.c.b16 %v267, %v262
  %v308 = vpack.c.b16 %v268, %v263
  %v309 = vpack.c.b16 %v269, %v264
  %v414 = vunpack.c.l.b16 %v63
  %v415 = vunpack.c.l.b16 %v64
  %v416 = vunpack.c.l.b16 %v65
  %v417 = vunpack.c.l.b16 %v66
  %v418 = vunpack.c.l.b16 %v67
  %v419 = vunpack.c.l.b16 %v68
  %v420 = vunpack.c.l.b16 %v69
  %v421 = vunpack.c.l.b16 %v70
  %v422 = vunpack.c.l.b16 %v71
  %v423 = vunpack.c.l.b16 %v72
  %v424 = vunpack.c.l.b16 %v73
  %v425 = vunpack.c.l.b16 %v74
  %v426 = vunpack.c.l.b16 %v75
  %v427 = vunpack.c.l.b16 %v76
  %v428 = vunpack.c.l.b16 %v77
  %v429 = vunpack.c.l.b16 %v78
  %v430 = vunpack.c.l.b16 %v79
  %v431 = vunpack.c.l.b16 %v80
  %v432 = vunpack.c.l.b16 %v81
  %v433 = vunpack.c.l.b16 %v82
  %v434 = vunpack.c.l.b16 %v83
  %v435 = vunpack.c.l.b16 %v84
  %v436 = vunpack.c.l.b16 %v85
  %v437 = vunpack.c.l.b16 %v86
  %v438 = vunpack.c.l.b16 %v87
  %v439 = vunpack.c.l.b16 %v88
  %v440 = vunpack.c.l.b16 %v89
  %v441 = vunpack.c.l.b16 %v90
  %v442 = vunpack.c.l.b16 %v91
  %v443 = vunpack.c.l.b16 %v92
  %v444 = vunpack.c.l.b16 %v93
  %v445 = vunpack.c.l.b16 %v94
  %v446 = vunpack.c.l.b16 %v95
  %v447 = vunpack.c.l.b16 %v96
  %v448 = vunpack.c.l.b16 %v97
  %v449 = vunpack.c.l.b16 %v98
  %v450 = vunpack.c.l.b16 %v99
  %v451 = vunpack.c.l.b16 %v100
  %v452 = vunpack.c.l.b16 %v101
  %v453 = vunpack.c.l.b16 %v102
  %v454 = vunpack.c.l.b16 %v103
  %v455 = vunpack.c.l.b16 %v104
  %v456 = vunpack.c.l.b16 %v105
  %v457 = vunpack.c.l.b16 %v106
  %v458 = vunpack.c.l.b16 %v107
  %v459 = vunpack.c.l.b16 %v108
  %v460 = vunpack.c.l.b16 %v109
  %v461 = vunpack.c.l.b16 %v110
  %v462 = vunpack.c.l.b16 %v111
  %v463 = vunpack.c.l.b16 %v112
  %v464 = vunpack.c.l.b16 %v113
  %v465 = vunpack.c.l.b16 %v114
  %v466 = vunpack.c.l.b16 %v115
  %v467 = vunpack.c.l.b16 %v116
  %v468 = vunpack.c.l.b16 %v117
  %v469 = vunpack.c.l.b16 %v118
  %v470 = vunpack.c.l.b16 %v119
  %v471 = vunpack.c.l.b16 %v120
  %v472 = vunpack.c.l.b16 %v121
  %v473 = vunpack.c.l.b16 %v122
  %v474 = vunpack.c.l.b16 %v123
  %v475 = vunpack.c.l.b16 %v124
  %v476 = vunpack.c.l.b16 %v125
  %v477 = vunpack.c.l.b16 %v126
  %v478 = vunpack.c.l.b16 %v127
  %v479 = vunpack.c.l.b16 %v128
  %v480 = vunpack.c.l.b16 %v129
  %v481 = vunpack.c.l.b16 %v130
  %v482 = vunpack.c.l.b16 %v131
  %v483 = vunpack.c.l.b16 %v132
  %v484 = vunpack.c.l.b16 %v133
  %v485 = vunpack.c.l.b16 %v134
  %v486 = vpack.c.b16 %v415, %v414
  %v487 = vpack.c.b16 %v417, %v416
  %v488 = vpack.c.b16 %v419, %v418
  %v489 = vpack.c.b16 %v421, %v420
  %v490 = vpack.c.b16 %v423, %v422
  %v491 = vpack.c.b16 %v425, %v424
  %v492 = vpack.c.b16 %v427, %v426
  %v493 = vpack.c.b16 %v429, %v428
  %v494 = vpack.c.b16 %v431, %v430
  %v495 = vpack.c.b16 %v433, %v432
  %v496 = vpack.c.b16 %v435, %v434
  %v497 = vpack.c.b16 %v437, %v436
  %v498 = vpack.c.b16 %v439, %v438
  %v499 = vpack.c.b16 %v441, %v440
  %v500 = vpack.c.b16 %v443, %v442
  %v501 = vpack.c.b16 %v445, %v444
  %v502 = vpack.c.b16 %v447, %v446
  %v503 = vpack.c.b16 %v449, %v448
  %v504 = vpack.c.b16 %v451, %v450
  %v505 = vpack.c.b16 %v453, %v452
  %v506 = vpack.c.b16 %v455, %v454
  %v507 = vpack.c.b16 %v457, %v456
  %v508 = vpack.c.b16 %v459, %v458
  %v509 = vpack.c.b16 %v461, %v460
  %v510 = vpack.c.b16 %v463, %v462
  %v511 = vpack.c.b16 %v465, %v464
  %v512 = vpack.c.b16 %v467, %v466
  %v513 = vpack.c.b16 %v469, %v468
  %v514 = vpack.c.b16 %v471, %v470
  %v515 = vpack.c.b16 %v473, %v472
  %v516 = vpack.c.b16 %v475, %v474
  %v517 = vpack.c.b16 %v477, %v476
  %v518 = vpack.c.b16 %v479, %v478
  %v519 = vpack.c.b16 %v481, %v480
  %v520 = vpack.c.b16 %v483, %v482
  %v521 = vpack.c.b16 %v485, %v484
  %vm558 = vcmask 523264
  %v560 = vsel %vm558, %v274, 0
  %v563 = vsel %vm558, %v279, 0
  %v566 = vsel %vm558, %v284, 0
  %v569 = vsel %vm558, %v289, 0
  %v572 = vsel %vm558, %v294, 0
  %v575 = vsel %vm558, %v299, 0
  %v578 = vsel %vm558, %v304, 0
  %v581 = vsel %vm558, %v309, 0
  %583 = vmatprep.subr.bf16.mxu0 0
  %584 = vmatpush1.bf16.msra.mxu0 %v493
  %585 = vmatprep.subr.bf16.mxu0 0
  %586 = vmatpush1.bf16.msra.mxu0 %v492
  %587 = vmatprep.subr.bf16.mxu0 0
  %588 = vmatpush1.bf16.msra.mxu0 %v491
  %589 = vmatprep.subr.bf16.mxu0 0
  %590 = vmatpush1.bf16.msra.mxu0 %v490
  %591 = vmatprep.subr.bf16.mxu0 0
  %592 = vmatpush1.bf16.msra.mxu0 %v489
  %593 = vmatprep.subr.bf16.mxu0 0
  %594 = vmatpush1.bf16.msra.mxu0 %v488
  %595 = vmatprep.subr.bf16.mxu0 0
  %596 = vmatpush1.bf16.msra.mxu0 %v487
  %597 = vmatprep.subr.bf16.mxu0 0
  %598 = vmatpush1.bf16.msra.mxu0 %v486
  %599 = vmatprep.subr.bf16.mxu0 0
  %600 = vmatpush2.bf16.msra.mxu0 %v501
  %601 = vmatprep.subr.bf16.mxu0 0
  %602 = vmatpush2.bf16.msra.mxu0 %v500
  %603 = vmatprep.subr.bf16.mxu0 0
  %604 = vmatpush2.bf16.msra.mxu0 %v499
  %605 = vmatprep.subr.bf16.mxu0 0
  %606 = vmatpush2.bf16.msra.mxu0 %v498
  %607 = vmatprep.subr.bf16.mxu0 0
  %608 = vmatpush2.bf16.msra.mxu0 %v497
  %609 = vmatprep.subr.bf16.mxu0 0
  %610 = vmatpush2.bf16.msra.mxu0 %v496
  %611 = vmatprep.subr.bf16.mxu0 0
  %612 = vmatpush2.bf16.msra.mxu0 %v495
  %613 = vmatprep.subr.bf16.mxu0 0
  %614 = vmatpush2.bf16.msra.mxu0 %v494
  %615 = vmatprep.mubr.bf16.mxu0 %v271
  %616 = vmatmul.mubr.bf16.gmra.mxu0 %v270
  %v617 = vpop.f32.mrf.mxu0
  %v618 = vadd.f32 %v140, %v617
  %v619 = vpop.f32.mrf.mxu0
  %v620 = vpop.f32.mrf.mxu0
  %v621 = vadd.f32 %v140, %v620
  %v622 = vpop.f32.mrf.mxu0
  %623 = vmatprep.mubr.bf16.mxu0 %v276
  %624 = vmatmul.mubr.bf16.gmra.mxu0 %v275
  %v625 = vpop.f32.mrf.mxu0
  %v626 = vadd.f32 %v140, %v625
  %v627 = vpop.f32.mrf.mxu0
  %v628 = vpop.f32.mrf.mxu0
  %v629 = vadd.f32 %v140, %v628
  %v630 = vpop.f32.mrf.mxu0
  %631 = vmatprep.mubr.bf16.mxu0 %v281
  %632 = vmatmul.mubr.bf16.gmra.mxu0 %v280
  %v633 = vpop.f32.mrf.mxu0
  %v634 = vadd.f32 %v140, %v633
  %v635 = vpop.f32.mrf.mxu0
  %v636 = vpop.f32.mrf.mxu0
  %v637 = vadd.f32 %v140, %v636
  %v638 = vpop.f32.mrf.mxu0
  %639 = vmatprep.mubr.bf16.mxu0 %v286
  %640 = vmatmul.mubr.bf16.gmra.mxu0 %v285
  %v641 = vpop.f32.mrf.mxu0
  %v642 = vadd.f32 %v140, %v641
  %v643 = vpop.f32.mrf.mxu0
  %v644 = vpop.f32.mrf.mxu0
  %v645 = vadd.f32 %v140, %v644
  %v646 = vpop.f32.mrf.mxu0
  %647 = vmatprep.mubr.bf16.mxu0 %v291
  %648 = vmatmul.mubr.bf16.gmra.mxu0 %v290
  %v649 = vpop.f32.mrf.mxu0
  %v650 = vadd.f32 %v140, %v649
  %v651 = vpop.f32.mrf.mxu0
  %v652 = vpop.f32.mrf.mxu0
  %v653 = vadd.f32 %v140, %v652
  %v654 = vpop.f32.mrf.mxu0
  %655 = vmatprep.mubr.bf16.mxu0 %v296
  %656 = vmatmul.mubr.bf16.gmra.mxu0 %v295
  %v657 = vpop.f32.mrf.mxu0
  %v658 = vadd.f32 %v140, %v657
  %v659 = vpop.f32.mrf.mxu0
  %v660 = vpop.f32.mrf.mxu0
  %v661 = vadd.f32 %v140, %v660
  %v662 = vpop.f32.mrf.mxu0
  %663 = vmatprep.mubr.bf16.mxu0 %v301
  %664 = vmatmul.mubr.bf16.gmra.mxu0 %v300
  %v665 = vpop.f32.mrf.mxu0
  %v666 = vadd.f32 %v140, %v665
  %v667 = vpop.f32.mrf.mxu0
  %v668 = vpop.f32.mrf.mxu0
  %v669 = vadd.f32 %v140, %v668
  %v670 = vpop.f32.mrf.mxu0
  %671 = vmatprep.mubr.bf16.mxu0 %v306
  %672 = vmatmul.mubr.bf16.gmra.mxu0 %v305
  %v673 = vpop.f32.mrf.mxu0
  %v674 = vadd.f32 %v140, %v673
  %v675 = vpop.f32.mrf.mxu0
  %v676 = vpop.f32.mrf.mxu0
  %v677 = vadd.f32 %v140, %v676
  %v678 = vpop.f32.mrf.mxu0
  %679 = vdwg.mxu0
  %680 = vmatprep.subr.bf16.mxu0 0
  %681 = vmatpush1.bf16.msra.mxu0 %v509
  %682 = vmatprep.subr.bf16.mxu0 0
  %683 = vmatpush1.bf16.msra.mxu0 %v508
  %684 = vmatprep.subr.bf16.mxu0 0
  %685 = vmatpush1.bf16.msra.mxu0 %v507
  %686 = vmatprep.subr.bf16.mxu0 0
  %687 = vmatpush1.bf16.msra.mxu0 %v506
  %688 = vmatprep.subr.bf16.mxu0 0
  %689 = vmatpush1.bf16.msra.mxu0 %v505
  %690 = vmatprep.subr.bf16.mxu0 0
  %691 = vmatpush1.bf16.msra.mxu0 %v504
  %692 = vmatprep.subr.bf16.mxu0 0
  %693 = vmatpush1.bf16.msra.mxu0 %v503
  %694 = vmatprep.subr.bf16.mxu0 0
  %695 = vmatpush1.bf16.msra.mxu0 %v502
  %696 = vmatprep.subr.bf16.mxu0 0
  %697 = vmatpush2.bf16.msra.mxu0 %v517
  %698 = vmatprep.subr.bf16.mxu0 0
  %699 = vmatpush2.bf16.msra.mxu0 %v516
  %700 = vmatprep.subr.bf16.mxu0 0
  %701 = vmatpush2.bf16.msra.mxu0 %v515
  %702 = vmatprep.subr.bf16.mxu0 0
  %703 = vmatpush2.bf16.msra.mxu0 %v514
  %704 = vmatprep.subr.bf16.mxu0 0
  %705 = vmatpush2.bf16.msra.mxu0 %v513
  %706 = vmatprep.subr.bf16.mxu0 0
  %707 = vmatpush2.bf16.msra.mxu0 %v512
  %708 = vmatprep.subr.bf16.mxu0 0
  %709 = vmatpush2.bf16.msra.mxu0 %v511
  %710 = vmatprep.subr.bf16.mxu0 0
  %711 = vmatpush2.bf16.msra.mxu0 %v510
  %712 = vmatprep.mubr.bf16.mxu0 %v273
  %713 = vmatmul.mubr.bf16.gmra.mxu0 %v272
  %v714 = vpop.f32.mrf.mxu0
  %v715 = vadd.f32 %v618, %v714
  %v716 = vpop.f32.mrf.mxu0
  %v717 = vpop.f32.mrf.mxu0
  %v718 = vadd.f32 %v621, %v717
  %v719 = vpop.f32.mrf.mxu0
  %720 = vmatprep.mubr.bf16.mxu0 %v278
  %721 = vmatmul.mubr.bf16.gmra.mxu0 %v277
  %v722 = vpop.f32.mrf.mxu0
  %v723 = vadd.f32 %v626, %v722
  %v724 = vpop.f32.mrf.mxu0
  %v725 = vpop.f32.mrf.mxu0
  %v726 = vadd.f32 %v629, %v725
  %v727 = vpop.f32.mrf.mxu0
  %728 = vmatprep.mubr.bf16.mxu0 %v283
  %729 = vmatmul.mubr.bf16.gmra.mxu0 %v282
  %v730 = vpop.f32.mrf.mxu0
  %v731 = vadd.f32 %v634, %v730
  %v732 = vpop.f32.mrf.mxu0
  %v733 = vpop.f32.mrf.mxu0
  %v734 = vadd.f32 %v637, %v733
  %v735 = vpop.f32.mrf.mxu0
  %736 = vmatprep.mubr.bf16.mxu0 %v288
  %737 = vmatmul.mubr.bf16.gmra.mxu0 %v287
  %v738 = vpop.f32.mrf.mxu0
  %v739 = vadd.f32 %v642, %v738
  %v740 = vpop.f32.mrf.mxu0
  %v741 = vpop.f32.mrf.mxu0
  %v742 = vadd.f32 %v645, %v741
  %v743 = vpop.f32.mrf.mxu0
  %744 = vmatprep.mubr.bf16.mxu0 %v293
  %745 = vmatmul.mubr.bf16.gmra.mxu0 %v292
  %v746 = vpop.f32.mrf.mxu0
  %v747 = vadd.f32 %v650, %v746
  %v748 = vpop.f32.mrf.mxu0
  %v749 = vpop.f32.mrf.mxu0
  %v750 = vadd.f32 %v653, %v749
  %v751 = vpop.f32.mrf.mxu0
  %752 = vmatprep.mubr.bf16.mxu0 %v298
  %753 = vmatmul.mubr.bf16.gmra.mxu0 %v297
  %v754 = vpop.f32.mrf.mxu0
  %v755 = vadd.f32 %v658, %v754
  %v756 = vpop.f32.mrf.mxu0
  %v757 = vpop.f32.mrf.mxu0
  %v758 = vadd.f32 %v661, %v757
  %v759 = vpop.f32.mrf.mxu0
  %760 = vmatprep.mubr.bf16.mxu0 %v303
  %761 = vmatmul.mubr.bf16.gmra.mxu0 %v302
  %v762 = vpop.f32.mrf.mxu0
  %v763 = vadd.f32 %v666, %v762
  %v764 = vpop.f32.mrf.mxu0
  %v765 = vpop.f32.mrf.mxu0
  %v766 = vadd.f32 %v669, %v765
  %v767 = vpop.f32.mrf.mxu0
  %768 = vmatprep.mubr.bf16.mxu0 %v308
  %769 = vmatmul.mubr.bf16.gmra.mxu0 %v307
  %v770 = vpop.f32.mrf.mxu0
  %v771 = vadd.f32 %v674, %v770
  %v772 = vpop.f32.mrf.mxu0
  %v773 = vpop.f32.mrf.mxu0
  %v774 = vadd.f32 %v677, %v773
  %v775 = vpop.f32.mrf.mxu0
  %776 = vdwg.mxu0
  %777 = vmatprep.subr.bf16.mxu0 0
  %778 = vmatpush1.bf16.msra.mxu0 0
  %779 = vmatprep.subr.bf16.mxu0 0
  %780 = vmatpush1.bf16.msra.mxu0 0
  %781 = vmatprep.subr.bf16.mxu0 0
  %782 = vmatpush1.bf16.msra.mxu0 0
  %783 = vmatprep.subr.bf16.mxu0 0
  %784 = vmatpush1.bf16.msra.mxu0 0
  %785 = vmatprep.subr.bf16.mxu0 0
  %786 = vmatpush1.bf16.msra.mxu0 %v521
  %787 = vmatprep.subr.bf16.mxu0 0
  %788 = vmatpush1.bf16.msra.mxu0 %v520
  %789 = vmatprep.subr.bf16.mxu0 0
  %790 = vmatpush1.bf16.msra.mxu0 %v519
  %791 = vmatprep.subr.bf16.mxu0 0
  %792 = vmatpush1.bf16.msra.mxu0 %v518
  %793 = vmatprep.subr.bf16.mxu0 0
  %794 = vmatpush2.bf16.msra.mxu0 0
  %795 = vmatprep.subr.bf16.mxu0 0
  %796 = vmatpush2.bf16.msra.mxu0 0
  %797 = vmatprep.subr.bf16.mxu0 0
  %798 = vmatpush2.bf16.msra.mxu0 0
  %799 = vmatprep.subr.bf16.mxu0 0
  %800 = vmatpush2.bf16.msra.mxu0 0
  %801 = vmatprep.subr.bf16.mxu0 0
  %802 = vmatpush2.bf16.msra.mxu0 0
  %803 = vmatprep.subr.bf16.mxu0 0
  %804 = vmatpush2.bf16.msra.mxu0 0
  %805 = vmatprep.subr.bf16.mxu0 0
  %806 = vmatpush2.bf16.msra.mxu0 0
  %807 = vmatprep.subr.bf16.mxu0 0
  %808 = vmatpush2.bf16.msra.mxu0 0
  %809 = vmatprep.mubr.bf16.mxu0 0
  %810 = vmatmul.mubr.bf16.gmra.mxu0 %v560
  %v811 = vpop.f32.mrf.mxu0
  %v812 = vadd.f32 %v715, %v811
  %v813 = vpop.f32.mrf.mxu0
  %v814 = vpop.f32.mrf.mxu0
  %v815 = vadd.f32 %v718, %v814
  %v816 = vpop.f32.mrf.mxu0
  %817 = vmatprep.mubr.bf16.mxu0 0
  %818 = vmatmul.mubr.bf16.gmra.mxu0 %v563
  %v819 = vpop.f32.mrf.mxu0
  %v820 = vadd.f32 %v723, %v819
  %v821 = vpop.f32.mrf.mxu0
  %v822 = vpop.f32.mrf.mxu0
  %v823 = vadd.f32 %v726, %v822
  %v824 = vpop.f32.mrf.mxu0
  %825 = vmatprep.mubr.bf16.mxu0 0
  %826 = vmatmul.mubr.bf16.gmra.mxu0 %v566
  %v827 = vpop.f32.mrf.mxu0
  %v828 = vadd.f32 %v731, %v827
  %v829 = vpop.f32.mrf.mxu0
  %v830 = vpop.f32.mrf.mxu0
  %v831 = vadd.f32 %v734, %v830
  %v832 = vpop.f32.mrf.mxu0
  %833 = vmatprep.mubr.bf16.mxu0 0
  %834 = vmatmul.mubr.bf16.gmra.mxu0 %v569
  %v835 = vpop.f32.mrf.mxu0
  %v836 = vadd.f32 %v739, %v835
  %v837 = vpop.f32.mrf.mxu0
  %v838 = vpop.f32.mrf.mxu0
  %v839 = vadd.f32 %v742, %v838
  %v840 = vpop.f32.mrf.mxu0
  %841 = vmatprep.mubr.bf16.mxu0 0
  %842 = vmatmul.mubr.bf16.gmra.mxu0 %v572
  %v843 = vpop.f32.mrf.mxu0
  %v844 = vadd.f32 %v747, %v843
  %v845 = vpop.f32.mrf.mxu0
  %v846 = vpop.f32.mrf.mxu0
  %v847 = vadd.f32 %v750, %v846
  %v848 = vpop.f32.mrf.mxu0
  %849 = vmatprep.mubr.bf16.mxu0 0
  %850 = vmatmul.mubr.bf16.gmra.mxu0 %v575
  %v851 = vpop.f32.mrf.mxu0
  %v852 = vadd.f32 %v755, %v851
  %v853 = vpop.f32.mrf.mxu0
  %v854 = vpop.f32.mrf.mxu0
  %v855 = vadd.f32 %v758, %v854
  %v856 = vpop.f32.mrf.mxu0
  %857 = vmatprep.mubr.bf16.mxu0 0
  %858 = vmatmul.mubr.bf16.gmra.mxu0 %v578
  %v859 = vpop.f32.mrf.mxu0
  %v860 = vadd.f32 %v763, %v859
  %v861 = vpop.f32.mrf.mxu0
  %v862 = vpop.f32.mrf.mxu0
  %v863 = vadd.f32 %v766, %v862
  %v864 = vpop.f32.mrf.mxu0
  %865 = vmatprep.mubr.bf16.mxu0 0
  %866 = vmatmul.mubr.bf16.gmra.mxu0 %v581
  %v867 = vpop.f32.mrf.mxu0
  %v868 = vadd.f32 %v771, %v867
  %v869 = vpop.f32.mrf.mxu0
  %v870 = vpop.f32.mrf.mxu0
  %v871 = vadd.f32 %v774, %v870
  %v872 = vpop.f32.mrf.mxu0
  %873 = vdwg.mxu0
  %vm874 = vcmp.ge.f32.partialorder %v812, 0.0
  %vm875 = vcmp.ge.f32.partialorder %v815, 0.0
  %vm876 = vcmp.ge.f32.partialorder %v820, 0.0
  %vm877 = vcmp.ge.f32.partialorder %v823, 0.0
  %vm878 = vcmp.ge.f32.partialorder %v828, 0.0
  %vm879 = vcmp.ge.f32.partialorder %v831, 0.0
  %vm880 = vcmp.ge.f32.partialorder %v836, 0.0
  %vm881 = vcmp.ge.f32.partialorder %v839, 0.0
  %vm882 = vcmp.ge.f32.partialorder %v844, 0.0
  %vm883 = vcmp.ge.f32.partialorder %v847, 0.0
  %vm884 = vcmp.ge.f32.partialorder %v852, 0.0
  %vm885 = vcmp.ge.f32.partialorder %v855, 0.0
  %vm886 = vcmp.ge.f32.partialorder %v860, 0.0
  %vm887 = vcmp.ge.f32.partialorder %v863, 0.0
  %vm888 = vcmp.ge.f32.partialorder %v868, 0.0
  %vm889 = vcmp.ge.f32.partialorder %v871, 0.0
  %v890 = vmul.f32 %v812, 0.2
  %v891 = vmul.f32 %v815, 0.2
  %v892 = vmul.f32 %v820, 0.2
  %v893 = vmul.f32 %v823, 0.2
  %v894 = vmul.f32 %v828, 0.2
  %v895 = vmul.f32 %v831, 0.2
  %v896 = vmul.f32 %v836, 0.2
  %v897 = vmul.f32 %v839, 0.2
  %v898 = vmul.f32 %v844, 0.2
  %v899 = vmul.f32 %v847, 0.2
  %v900 = vmul.f32 %v852, 0.2
  %v901 = vmul.f32 %v855, 0.2
  %v902 = vmul.f32 %v860, 0.2
  %v903 = vmul.f32 %v863, 0.2
  %v904 = vmul.f32 %v868, 0.2
  %v905 = vmul.f32 %v871, 0.2
  %v906 = vsel %vm874, %v812, %v890
  %v907 = vsel %vm875, %v815, %v891
  %v908 = vsel %vm876, %v820, %v892
  %v909 = vsel %vm877, %v823, %v893
  %v910 = vsel %vm878, %v828, %v894
  %v911 = vsel %vm879, %v831, %v895
  %v912 = vsel %vm880, %v836, %v896
  %v913 = vsel %vm881, %v839, %v897
  %v914 = vsel %vm882, %v844, %v898
  %v915 = vsel %vm883, %v847, %v899
  %v916 = vsel %vm884, %v852, %v900
  %v917 = vsel %vm885, %v855, %v901
  %v918 = vsel %vm886, %v860, %v902
  %v919 = vsel %vm887, %v863, %v903
  %v920 = vsel %vm888, %v868, %v904
  %v921 = vsel %vm889, %v871, %v905
  %v922 = vpack.c.bf16 %v907, %v906
  %v923 = vpack.c.bf16 %v909, %v908
  %v924 = vpack.c.bf16 %v911, %v910
  %v925 = vpack.c.bf16 %v913, %v912
  %v926 = vpack.c.bf16 %v915, %v914
  %v927 = vpack.c.bf16 %v917, %v916
  %v928 = vpack.c.bf16 %v919, %v918
  %v929 = vpack.c.bf16 %v921, %v920
  %v938 = vunpack.c.l.b16 %v922
  %v939 = vunpack.c.h.b16 %v922
  %v940 = vunpack.c.l.b16 %v923
  %v941 = vunpack.c.h.b16 %v923
  %v942 = vunpack.c.l.b16 %v924
  %v943 = vunpack.c.h.b16 %v924
  %v944 = vunpack.c.l.b16 %v925
  %v945 = vunpack.c.h.b16 %v925
  %v946 = vunpack.c.l.b16 %v926
  %v947 = vunpack.c.h.b16 %v926
  %v948 = vunpack.c.l.b16 %v927
  %v949 = vunpack.c.h.b16 %v927
  %v950 = vunpack.c.l.b16 %v928
  %v951 = vunpack.c.h.b16 %v928
  %v952 = vunpack.c.l.b16 %v929
  %v953 = vunpack.c.h.b16 %v929
  %v954 = vpack.c.b16 %v938, %v938
  %v955 = vpack.c.b16 %v939, %v939
  %v956 = vpack.c.b16 %v940, %v940
  %v957 = vpack.c.b16 %v941, %v941
  %v958 = vpack.c.b16 %v942, %v942
  %v959 = vpack.c.b16 %v943, %v943
  %v960 = vpack.c.b16 %v944, %v944
  %v961 = vpack.c.b16 %v945, %v945
  %v962 = vpack.c.b16 %v946, %v946
  %v963 = vpack.c.b16 %v947, %v947
  %v964 = vpack.c.b16 %v948, %v948
  %v965 = vpack.c.b16 %v949, %v949
  %v966 = vpack.c.b16 %v950, %v950
  %v967 = vpack.c.b16 %v951, %v951
  %v968 = vpack.c.b16 %v952, %v952
  %v969 = vpack.c.b16 %v953, %v953
  %986 = vst [vmem:[%s3] sm:$0xf] %v954
  %987 = vst [vmem:[%s3 + $0x4] sm:$0xf] %v955
  %988 = vst [vmem:[%s3 + $0x8] sm:$0xf] %v956
  %989 = vst [vmem:[%s3 + $0xc] sm:$0xf] %v957
  %990 = vst [vmem:[%s3 + $0x10] sm:$0xf] %v958
  %991 = vst [vmem:[%s3 + $0x14] sm:$0xf] %v959
  %992 = vst [vmem:[%s3 + $0x18] sm:$0xf] %v960
  %993 = vst [vmem:[%s3 + $0x1c] sm:$0xf] %v961
  %994 = vst [vmem:[%s3 + $0x20] sm:$0xf] %v962
  %995 = vst [vmem:[%s3 + $0x24] sm:$0xf] %v963
  %996 = vst [vmem:[%s3 + $0x28] sm:$0xf] %v964
  %997 = vst [vmem:[%s3 + $0x2c] sm:$0xf] %v965
  %998 = vst [vmem:[%s3 + $0x30] sm:$0xf] %v966
  %999 = vst [vmem:[%s3 + $0x34] sm:$0xf] %v967
  %1000 = vst [vmem:[%s3 + $0x38] sm:$0xf] %v968
  %1001 = vst [vmem:[%s3 + $0x3c] sm:$0xf] %v969
  // Predicated region
  $region14: #{discriminator_forward.6} parent=0 // pred_check
    _
  $region15: #{discriminator_forward.6} parent=0 // pred_check_branch
    %1003 = sbr.rel (0) target = $region17
  $region16: #{discriminator_forward.6} parent=0 // pred_region
    _
  $region17: #{discriminator_forward.6} parent=0 // pred_fallthru
    _
  // Predicated region
  $region18: #{discriminator_forward.6} parent=0 // pred_check
    _
  $region19: #{discriminator_forward.6} parent=0 // pred_check_branch
    %1005 = sbr.rel (0) target = $region21
  $region20: #{discriminator_forward.6} parent=0 // pred_region
    _
  $region21: #{discriminator_forward.6} parent=0 // pred_fallthru
    _

// kernel: discriminator_forward.7
$region0: #{discriminator_forward.7}
  #allocation0 [shape = 'u32[]', space=smem, size = 0x4, offset = 0x4, fixed_abs, tag = 'smem constant byte address 0x4 - core index']
  #allocation1 [shape = 'u32[144,128]{1,0:T(1,128)}', space=vmem, size = 0x12000, scoped, tag = 'internal scratch']
  #allocation2 [shape = 'f32[8,256]{1,0:T(8,128)}', space=vmem, size = 0x2000, scoped, tag = 'scratch operand']
  %s0 = inlined_call_operand.vmem [shape: bf16[8,8192], index: 0, kind: input, shape index: {}]
  %s1 = inlined_call_operand.vmem [shape: bf16[8192,256], index: 1, kind: input, shape index: {}]
  %s2 = inlined_call_operand.vmem [shape: f32[1,256], index: 2, kind: input, shape index: {}]
  %s3 = inlined_call_operand.vmem [shape: bf16[256,128], index: 3, kind: input, shape index: {}]
  %s4 = inlined_call_operand.vmem [shape: f32[1,128], index: 4, kind: input, shape index: {}]
  %s5 = inlined_call_operand.vmem [shape: f32[8,128], index: 5, kind: output, shape index: {}]
  %s6 = sld [smem:[#allocation0]]
  $region61: #{discriminator_forward.7} parent=0
    _
  %s8 = ssub.s32 1, %s6
  %s9 = scalar_select 0, %s8, %s6
  loop: start=0, step=1, limit=6
  $region2: #{discriminator_forward.7} parent=0 // loop_pre_header
    _
  $region3: #{discriminator_forward.7} parent=0 // loop_header
    %s11 = sphi 0, %s15
    %p12 = scmp.ge.s32.totalorder %s11, 6
    %s18 = sphi 0, %s30
    %s19 = sphi 0, %s26
    %s20 = sphi 0, %s18
    %s21 = sphi 0, %s19
    %s22 = sphi 0, %s20
    %s23 = sphi 0, %s21
    %s35 = sphi 0, %s37
    %s38 = sphi 0, %s35
    %s39 = sphi 0, %s38
    %s55 = sphi 0, %s39
    %s61 = sphi 0, %s63
    %s64 = sphi 0, %s61
    %s65 = sphi 0, %s64
    %s81 = sphi 0, %s65
    %s85 = sphi 0, %s85
    %s87 = sphi 0, %s85
    %s88 = sphi 0, %s87
    %s102 = sphi 0, %s88
    %s106 = sphi 0, %s106
    %s108 = sphi 0, %s106
    %s109 = sphi 0, %s108
    %s123 = sphi 0, %s109
    %s127 = sphi 0, %s127
    %s129 = sphi 0, %s127
    %s130 = sphi 0, %s129
    %s144 = sphi 0, %s130
    %s150 = sphi 0, %s152
    %s153 = sphi 0, %s150
    %s154 = sphi 0, %s153
    %s170 = sphi 0, %s154
  $region4: #{discriminator_forward.7} parent=0 // loop_header_branch
    %14 = sbr.rel (%p12) target = $region8
  $region5: #{discriminator_forward.7} parent=0 // loop_body
    %s16 = ssub.s32 %s11, 1
    %s17 = ssub.s32 %s11, 2
    %s24 = sadd.s32 1, %s19
    %p25 = scmp.ge.s32.totalorder %s24, 4
    %s26 = scalar_select %p25, 0, %s24
    %s27 = sadd.s32 1, %s18
    %s28 = scalar_select %p25, %s27, %s18
    %p29 = scmp.ge.s32.totalorder %s28, 1
    %s30 = scalar_select %p29, 0, %s28
    %s31 = ssub.s32 %s18, %s30
    %s32 = ssub.s32 %s19, %s26
    %s33 = sor.u32 %s31, %s32
    %p34 = scmp.eq.s32.totalorder %s33, 0
    %s36 = sadd.s32 %s35, 1
    %s37 = scalar_select %p34, %s35, %s36
    %p40 = pneg %p34
    %p41 = scmp.eq.s32.totalorder %s11, 3
    %p42 = por %p40, %p41
    %p43 = scmp.ne.s32.totalorder %s35, %s38
    %p44 = scmp.eq.s32.totalorder %s11, 0
    %p45 = por %p43, %p44
    %p46 = scmp.ne.s32.totalorder %s35, %s38
    %p47 = scmp.eq.s32.totalorder %s16, 3
    %p48 = por %p46, %p47
    %p49 = scmp.ne.s32.totalorder %s38, %s39
    %p50 = scmp.eq.s32.totalorder %s16, 0
    %p51 = por %p49, %p50
    %p52 = scmp.ne.s32.totalorder %s38, %s39
    %p53 = scmp.eq.s32.totalorder %s17, 3
    %p54 = por %p52, %p53
    %p56 = scmp.ne.s32.totalorder %s39, %s55
    %p57 = scmp.eq.s32.totalorder %s17, 0
    %p58 = por %p56, %p57
    %s59 = ssub.s32 %s19, %s26
    %p60 = scmp.eq.s32.totalorder %s59, 0
    %s62 = sadd.s32 %s61, 1
    %s63 = scalar_select %p60, %s61, %s62
    %p66 = pneg %p60
    %p67 = scmp.eq.s32.totalorder %s11, 3
    %p68 = por %p66, %p67
    %p69 = scmp.ne.s32.totalorder %s61, %s64
    %p70 = scmp.eq.s32.totalorder %s11, 0
    %p71 = por %p69, %p70
    %p72 = scmp.ne.s32.totalorder %s61, %s64
    %p73 = scmp.eq.s32.totalorder %s16, 3
    %p74 = por %p72, %p73
    %p75 = scmp.ne.s32.totalorder %s64, %s65
    %p76 = scmp.eq.s32.totalorder %s16, 0
    %p77 = por %p75, %p76
    %p78 = scmp.ne.s32.totalorder %s64, %s65
    %p79 = scmp.eq.s32.totalorder %s17, 3
    %p80 = por %p78, %p79
    %p82 = scmp.ne.s32.totalorder %s65, %s81
    %p83 = scmp.eq.s32.totalorder %s17, 0
    %p84 = por %p82, %p83
    %s86 = sadd.s32 %s85, 1
    %p89 = scmp.eq.s32.totalorder %s11, 3
    %p90 = scmp.ne.s32.totalorder %s85, %s87
    %p91 = scmp.eq.s32.totalorder %s11, 0
    %p92 = por %p90, %p91
    %p93 = scmp.ne.s32.totalorder %s85, %s87
    %p94 = scmp.eq.s32.totalorder %s16, 3
    %p95 = por %p93, %p94
    %p96 = scmp.ne.s32.totalorder %s87, %s88
    %p97 = scmp.eq.s32.totalorder %s16, 0
    %p98 = por %p96, %p97
    %p99 = scmp.ne.s32.totalorder %s87, %s88
    %p100 = scmp.eq.s32.totalorder %s17, 3
    %p101 = por %p99, %p100
    %p103 = scmp.ne.s32.totalorder %s88, %s102
    %p104 = scmp.eq.s32.totalorder %s17, 0
    %p105 = por %p103, %p104
    %s107 = sadd.s32 %s106, 1
    %p110 = scmp.eq.s32.totalorder %s11, 3
    %p111 = scmp.ne.s32.totalorder %s106, %s108
    %p112 = scmp.eq.s32.totalorder %s11, 0
    %p113 = por %p111, %p112
    %p114 = scmp.ne.s32.totalorder %s106, %s108
    %p115 = scmp.eq.s32.totalorder %s16, 3
    %p116 = por %p114, %p115
    %p117 = scmp.ne.s32.totalorder %s108, %s109
    %p118 = scmp.eq.s32.totalorder %s16, 0
    %p119 = por %p117, %p118
    %p120 = scmp.ne.s32.totalorder %s108, %s109
    %p121 = scmp.eq.s32.totalorder %s17, 3
    %p122 = por %p120, %p121
    %p124 = scmp.ne.s32.totalorder %s109, %s123
    %p125 = scmp.eq.s32.totalorder %s17, 0
    %p126 = por %p124, %p125
    %s128 = sadd.s32 %s127, 1
    %p131 = scmp.eq.s32.totalorder %s11, 3
    %p132 = scmp.ne.s32.totalorder %s127, %s129
    %p133 = scmp.eq.s32.totalorder %s11, 0
    %p134 = por %p132, %p133
    %p135 = scmp.ne.s32.totalorder %s127, %s129
    %p136 = scmp.eq.s32.totalorder %s16, 3
    %p137 = por %p135, %p136
    %p138 = scmp.ne.s32.totalorder %s129, %s130
    %p139 = scmp.eq.s32.totalorder %s16, 0
    %p140 = por %p138, %p139
    %p141 = scmp.ne.s32.totalorder %s129, %s130
    %p142 = scmp.eq.s32.totalorder %s17, 3
    %p143 = por %p141, %p142
    %p145 = scmp.ne.s32.totalorder %s130, %s144
    %p146 = scmp.eq.s32.totalorder %s17, 0
    %p147 = por %p145, %p146
    %s148 = ssub.s32 %s18, %s30
    %p149 = scmp.eq.s32.totalorder %s148, 0
    %s151 = sadd.s32 %s150, 1
    %s152 = scalar_select %p149, %s150, %s151
    %p155 = pneg %p149
    %p156 = scmp.eq.s32.totalorder %s11, 3
    %p157 = por %p155, %p156
    %p158 = scmp.ne.s32.totalorder %s150, %s153
    %p159 = scmp.eq.s32.totalorder %s11, 0
    %p160 = por %p158, %p159
    %p161 = scmp.ne.s32.totalorder %s150, %s153
    %p162 = scmp.eq.s32.totalorder %s16, 3
    %p163 = por %p161, %p162
    %p164 = scmp.ne.s32.totalorder %s153, %s154
    %p165 = scmp.eq.s32.totalorder %s16, 0
    %p166 = por %p164, %p165
    %p167 = scmp.ne.s32.totalorder %s153, %s154
    %p168 = scmp.eq.s32.totalorder %s17, 3
    %p169 = por %p167, %p168
    %p171 = scmp.ne.s32.totalorder %s154, %s170
    %p172 = scmp.eq.s32.totalorder %s17, 0
    %p173 = por %p171, %p172
    %p174 = scmp.le.s32.totalorder 1, %s11
    %p175 = scmp.lt.s32.totalorder %s11, 5
    %p176 = pnand %p174, %p175
    %p177 = pneg %p176
    // Predicated region
    $region9: #{discriminator_forward.7} parent=5 // pred_check
      _
    $region10: #{discriminator_forward.7} parent=5 // pred_check_branch
      %179 = sbr.rel (%p176) target = $region12
    $region11: #{discriminator_forward.7} parent=5 // pred_region
      %s180 = ssub.s32 %s11, 1
      // Predicated region
      $region13: #{discriminator_forward.7} parent=11 // pred_check
        %p181 = pneg %p98
      $region14: #{discriminator_forward.7} parent=11 // pred_check_branch
        %183 = sbr.rel (%p181) target = $region16
      $region15: #{discriminator_forward.7} parent=11 // pred_region
        _
      $region16: #{discriminator_forward.7} parent=11 // pred_fallthru
        _
      // Predicated region
      $region17: #{discriminator_forward.7} parent=11 // pred_check
        %p184 = pneg %p119
      $region18: #{discriminator_forward.7} parent=11 // pred_check_branch
        %186 = sbr.rel (%p184) target = $region20
      $region19: #{discriminator_forward.7} parent=11 // pred_region
        _
      $region20: #{discriminator_forward.7} parent=11 // pred_fallthru
        _
      // Predicated region
      $region21: #{discriminator_forward.7} parent=11 // pred_check
        %p187 = pneg %p140
      $region22: #{discriminator_forward.7} parent=11 // pred_check_branch
        %189 = sbr.rel (%p187) target = $region24
      $region23: #{discriminator_forward.7} parent=11 // pred_region
        _
      $region24: #{discriminator_forward.7} parent=11 // pred_fallthru
        _
    $region12: #{discriminator_forward.7} parent=5 // pred_fallthru
      _
    %p190 = scmp.lt.s32.totalorder %s11, 4
    // Predicated region
    $region25: #{discriminator_forward.7} parent=5 // pred_check
      %p191 = pneg %p190
    $region26: #{discriminator_forward.7} parent=5 // pred_check_branch
      %193 = sbr.rel (%p191) target = $region28
    $region27: #{discriminator_forward.7} parent=5 // pred_region
      // Predicated region
      $region29: #{discriminator_forward.7} parent=27 // pred_check
        %p194 = pneg %p45
      $region30: #{discriminator_forward.7} parent=27 // pred_check_branch
        %196 = sbr.rel (%p194) target = $region32
      $region31: #{discriminator_forward.7} parent=27 // pred_region
        %s197 = smul.u32 16, %s19
        %p198 = scmp.lt.s32.totalorder %s18, 0
        %s199 = scalar_select %p198, %s18, 0
        %p200 = scmp.lt.s32.totalorder %s197, 63
        %s201 = scalar_select %p200, %s197, 63
        %s202 = smul.addr %s199, 64
        %s203 = sadd.s32 %s201, %s202
        %s204 = smul.addr %s203, 4
        %s205 = scalar_lea.vmem %s0, %s204
        %s206 = smul.u32 16, %s19
      $region32: #{discriminator_forward.7} parent=27 // pred_fallthru
        _
      // Predicated region
      $region33: #{discriminator_forward.7} parent=27 // pred_check
        %p207 = pneg %p71
      $region34: #{discriminator_forward.7} parent=27 // pred_check_branch
        %209 = sbr.rel (%p207) target = $region36
      $region35: #{discriminator_forward.7} parent=27 // pred_region
        %s210 = smul.u32 256, %s19
        %p211 = scmp.lt.s32.totalorder %s210, 1023
        %s212 = scalar_select %p211, %s210, 1023
        %s213 = smul.addr %s212, 2
        %s214 = smul.addr %s213, 4
        %s215 = scalar_lea.vmem %s1, %s214
        %s216 = smul.u32 256, %s19
      $region36: #{discriminator_forward.7} parent=27 // pred_fallthru
        _
    $region28: #{discriminator_forward.7} parent=5 // pred_fallthru
      _
    %p217 = scmp.le.s32.totalorder 1, %s11
    %p218 = scmp.lt.s32.totalorder %s11, 5
    %p219 = pnand %p217, %p218
    %p220 = pneg %p219
    // Predicated region
    $region37: #{discriminator_forward.7} parent=5 // pred_check
      _
    $region38: #{discriminator_forward.7} parent=5 // pred_check_branch
      %222 = sbr.rel (%p219) target = $region40
    $region39: #{discriminator_forward.7} parent=5 // pred_region
      %s223 = ssub.s32 %s11, 1
      %s224 = smul.u32 16, %s21
      %p225 = scmp.lt.s32.totalorder %s20, 0
      %s226 = scalar_select %p225, %s20, 0
      %p227 = scmp.lt.s32.totalorder %s224, 63
      %s228 = scalar_select %p227, %s224, 63
      %s229 = smul.addr %s226, 64
      %s230 = sadd.s32 %s228, %s229
      %s231 = smul.addr %s230, 4
      %s232 = scalar_lea.vmem %s0, %s231
      %p233 = pneg %p51
      %p234 = pneg %p48
      %s235 = smul.u32 256, %s21
      %p236 = scmp.lt.s32.totalorder %s235, 1023
      %s237 = scalar_select %p236, %s235, 1023
      %s238 = smul.addr %s237, 2
      %s239 = smul.addr %s238, 4
      %s240 = scalar_lea.vmem %s1, %s239
      %p241 = pneg %p77
      %p242 = pneg %p74
      %p243 = pneg %p98
      %p244 = pneg %p95
      %p245 = pneg %p119
      %p246 = pneg %p116
      %p247 = pneg %p140
      %p248 = pneg %p137
      %p249 = pneg %p166
      %p250 = pneg %p163
      %p251 = scmp.lt.s32.totalorder %s20, 0
      %s252 = scalar_select %p251, %s20, 0
      %s253 = smul.addr %s252, 8
      %s254 = scalar_lea.vmem %s5, %s253
      %s255 = smul.u32 16, %s21
      %p256 = scmp.lt.s32.totalorder %s20, 0
      %s257 = scalar_select %p256, %s20, 0
      %p258 = scmp.lt.s32.totalorder %s255, 63
      %s259 = scalar_select %p258, %s255, 63
      %s260 = smul.addr %s257, 64
      %s261 = sadd.s32 %s259, %s260
      %s262 = smul.addr %s261, 4
      %s263 = scalar_lea.vmem %s0, %s262
      %s264 = smul.u32 16, %s21
      %s265 = smul.u32 256, %s21
      %p266 = scmp.lt.s32.totalorder %s265, 1023
      %s267 = scalar_select %p266, %s265, 1023
      %s268 = smul.addr %s267, 2
      %s269 = smul.addr %s268, 4
      %s270 = scalar_lea.vmem %s1, %s269
      %s271 = smul.u32 256, %s21
      %p272 = scmp.lt.s32.totalorder %s20, 0
      %s273 = scalar_select %p272, %s20, 0
      %s274 = smul.addr %s273, 8
      %s275 = scalar_lea.vmem %s5, %s274
      %p277 = scmp.eq.s32.totalorder %s21, 0
      // Predicated region
      $region41: #{discriminator_forward.7} parent=39 // pred_check
        %p278 = pneg %p277
      $region42: #{discriminator_forward.7} parent=39 // pred_check_branch
        %280 = sbr.rel (%p278) target = $region44
      $region43: #{discriminator_forward.7} parent=39 // pred_region
        %281 = vst [vmem:[#allocation2] sm:$0xff] 0.0
        %282 = vst [vmem:[#allocation2 + $0x8] sm:$0xff] 0.0
      $region44: #{discriminator_forward.7} parent=39 // pred_fallthru
        _
      %v283 = vld [vmem:[#allocation2] sm:$0xff]
      %v284 = vld [vmem:[#allocation2 + $0x8] sm:$0xff]
      %v285 = vld [vmem:[%s263] sm:$0xff]
      %v286 = vld [vmem:[%s263 + $0x8] sm:$0xff]
      %v287 = vld [vmem:[%s263 + $0x10] sm:$0xff]
      %v288 = vld [vmem:[%s263 + $0x18] sm:$0xff]
      %v289 = vld [vmem:[%s263 + $0x20] sm:$0xff]
      %v290 = vld [vmem:[%s263 + $0x28] sm:$0xff]
      %v291 = vld [vmem:[%s263 + $0x30] sm:$0xff]
      %v292 = vld [vmem:[%s263 + $0x38] sm:$0xff]
      %v293 = vld [vmem:[%s270] sm:$0xff]
      %v294 = vld [vmem:[%s270 + $0x8] sm:$0xff]
      %v295 = vld [vmem:[%s270 + $0x10] sm:$0xff]
      %v296 = vld [vmem:[%s270 + $0x18] sm:$0xff]
      %v297 = vld [vmem:[%s270 + $0x20] sm:$0xff]
      %v298 = vld [vmem:[%s270 + $0x28] sm:$0xff]
      %v299 = vld [vmem:[%s270 + $0x30] sm:$0xff]
      %v300 = vld [vmem:[%s270 + $0x38] sm:$0xff]
      %v301 = vld [vmem:[%s270 + $0x40] sm:$0xff]
      %v302 = vld [vmem:[%s270 + $0x48] sm:$0xff]
      %v303 = vld [vmem:[%s270 + $0x50] sm:$0xff]
      %v304 = vld [vmem:[%s270 + $0x58] sm:$0xff]
      %v305 = vld [vmem:[%s270 + $0x60] sm:$0xff]
      %v306 = vld [vmem:[%s270 + $0x68] sm:$0xff]
      %v307 = vld [vmem:[%s270 + $0x70] sm:$0xff]
      %v308 = vld [vmem:[%s270 + $0x78] sm:$0xff]
      %v309 = vld [vmem:[%s270 + $0x80] sm:$0xff]
      %v310 = vld [vmem:[%s270 + $0x88] sm:$0xff]
      %v311 = vld [vmem:[%s270 + $0x90] sm:$0xff]
      %v312 = vld [vmem:[%s270 + $0x98] sm:$0xff]
      %v313 = vld [vmem:[%s270 + $0xa0] sm:$0xff]
      %v314 = vld [vmem:[%s270 + $0xa8] sm:$0xff]
      %v315 = vld [vmem:[%s270 + $0xb0] sm:$0xff]
      %v316 = vld [vmem:[%s270 + $0xb8] sm:$0xff]
      %v317 = vld [vmem:[%s270 + $0xc0] sm:$0xff]
      %v318 = vld [vmem:[%s270 + $0xc8] sm:$0xff]
      %v319 = vld [vmem:[%s270 + $0xd0] sm:$0xff]
      %v320 = vld [vmem:[%s270 + $0xd8] sm:$0xff]
      %v321 = vld [vmem:[%s270 + $0xe0] sm:$0xff]
      %v322 = vld [vmem:[%s270 + $0xe8] sm:$0xff]
      %v323 = vld [vmem:[%s270 + $0xf0] sm:$0xff]
      %v324 = vld [vmem:[%s270 + $0xf8] sm:$0xff]
      %v325 = vld [vmem:[%s270 + $0x100] sm:$0xff]
      %v326 = vld [vmem:[%s270 + $0x108] sm:$0xff]
      %v327 = vld [vmem:[%s270 + $0x110] sm:$0xff]
      %v328 = vld [vmem:[%s270 + $0x118] sm:$0xff]
      %v329 = vld [vmem:[%s270 + $0x120] sm:$0xff]
      %v330 = vld [vmem:[%s270 + $0x128] sm:$0xff]
      %v331 = vld [vmem:[%s270 + $0x130] sm:$0xff]
      %v332 = vld [vmem:[%s270 + $0x138] sm:$0xff]
      %v333 = vld [vmem:[%s270 + $0x140] sm:$0xff]
      %v334 = vld [vmem:[%s270 + $0x148] sm:$0xff]
      %v335 = vld [vmem:[%s270 + $0x150] sm:$0xff]
      %v336 = vld [vmem:[%s270 + $0x158] sm:$0xff]
      %v337 = vld [vmem:[%s270 + $0x160] sm:$0xff]
      %v338 = vld [vmem:[%s270 + $0x168] sm:$0xff]
      %v339 = vld [vmem:[%s270 + $0x170] sm:$0xff]
      %v340 = vld [vmem:[%s270 + $0x178] sm:$0xff]
      %v341 = vld [vmem:[%s270 + $0x180] sm:$0xff]
      %v342 = vld [vmem:[%s270 + $0x188] sm:$0xff]
      %v343 = vld [vmem:[%s270 + $0x190] sm:$0xff]
      %v344 = vld [vmem:[%s270 + $0x198] sm:$0xff]
      %v345 = vld [vmem:[%s270 + $0x1a0] sm:$0xff]
      %v346 = vld [vmem:[%s270 + $0x1a8] sm:$0xff]
      %v347 = vld [vmem:[%s270 + $0x1b0] sm:$0xff]
      %v348 = vld [vmem:[%s270 + $0x1b8] sm:$0xff]
      %v349 = vld [vmem:[%s270 + $0x1c0] sm:$0xff]
      %v350 = vld [vmem:[%s270 + $0x1c8] sm:$0xff]
      %v351 = vld [vmem:[%s270 + $0x1d0] sm:$0xff]
      %v352 = vld [vmem:[%s270 + $0x1d8] sm:$0xff]
      %v353 = vld [vmem:[%s270 + $0x1e0] sm:$0xff]
      %v354 = vld [vmem:[%s270 + $0x1e8] sm:$0xff]
      %v355 = vld [vmem:[%s270 + $0x1f0] sm:$0xff]
      %v356 = vld [vmem:[%s270 + $0x1f8] sm:$0xff]
      %v357 = vld [vmem:[%s270 + $0x200] sm:$0xff]
      %v358 = vld [vmem:[%s270 + $0x208] sm:$0xff]
      %v359 = vld [vmem:[%s270 + $0x210] sm:$0xff]
      %v360 = vld [vmem:[%s270 + $0x218] sm:$0xff]
      %v361 = vld [vmem:[%s270 + $0x220] sm:$0xff]
      %v362 = vld [vmem:[%s270 + $0x228] sm:$0xff]
      %v363 = vld [vmem:[%s270 + $0x230] sm:$0xff]
      %v364 = vld [vmem:[%s270 + $0x238] sm:$0xff]
      %v365 = vld [vmem:[%s270 + $0x240] sm:$0xff]
      %v366 = vld [vmem:[%s270 + $0x248] sm:$0xff]
      %v367 = vld [vmem:[%s270 + $0x250] sm:$0xff]
      %v368 = vld [vmem:[%s270 + $0x258] sm:$0xff]
      %v369 = vld [vmem:[%s270 + $0x260] sm:$0xff]
      %v370 = vld [vmem:[%s270 + $0x268] sm:$0xff]
      %v371 = vld [vmem:[%s270 + $0x270] sm:$0xff]
      %v372 = vld [vmem:[%s270 + $0x278] sm:$0xff]
      %v373 = vld [vmem:[%s270 + $0x280] sm:$0xff]
      %v374 = vld [vmem:[%s270 + $0x288] sm:$0xff]
      %v375 = vld [vmem:[%s270 + $0x290] sm:$0xff]
      %v376 = vld [vmem:[%s270 + $0x298] sm:$0xff]
      %v377 = vld [vmem:[%s270 + $0x2a0] sm:$0xff]
      %v378 = vld [vmem:[%s270 + $0x2a8] sm:$0xff]
      %v379 = vld [vmem:[%s270 + $0x2b0] sm:$0xff]
      %v380 = vld [vmem:[%s270 + $0x2b8] sm:$0xff]
      %v381 = vld [vmem:[%s270 + $0x2c0] sm:$0xff]
      %v382 = vld [vmem:[%s270 + $0x2c8] sm:$0xff]
      %v383 = vld [vmem:[%s270 + $0x2d0] sm:$0xff]
      %v384 = vld [vmem:[%s270 + $0x2d8] sm:$0xff]
      %v385 = vld [vmem:[%s270 + $0x2e0] sm:$0xff]
      %v386 = vld [vmem:[%s270 + $0x2e8] sm:$0xff]
      %v387 = vld [vmem:[%s270 + $0x2f0] sm:$0xff]
      %v388 = vld [vmem:[%s270 + $0x2f8] sm:$0xff]
      %v389 = vld [vmem:[%s270 + $0x300] sm:$0xff]
      %v390 = vld [vmem:[%s270 + $0x308] sm:$0xff]
      %v391 = vld [vmem:[%s270 + $0x310] sm:$0xff]
      %v392 = vld [vmem:[%s270 + $0x318] sm:$0xff]
      %v393 = vld [vmem:[%s270 + $0x320] sm:$0xff]
      %v394 = vld [vmem:[%s270 + $0x328] sm:$0xff]
      %v395 = vld [vmem:[%s270 + $0x330] sm:$0xff]
      %v396 = vld [vmem:[%s270 + $0x338] sm:$0xff]
      %v397 = vld [vmem:[%s270 + $0x340] sm:$0xff]
      %v398 = vld [vmem:[%s270 + $0x348] sm:$0xff]
      %v399 = vld [vmem:[%s270 + $0x350] sm:$0xff]
      %v400 = vld [vmem:[%s270 + $0x358] sm:$0xff]
      %v401 = vld [vmem:[%s270 + $0x360] sm:$0xff]
      %v402 = vld [vmem:[%s270 + $0x368] sm:$0xff]
      %v403 = vld [vmem:[%s270 + $0x370] sm:$0xff]
      %v404 = vld [vmem:[%s270 + $0x378] sm:$0xff]
      %v405 = vld [vmem:[%s270 + $0x380] sm:$0xff]
      %v406 = vld [vmem:[%s270 + $0x388] sm:$0xff]
      %v407 = vld [vmem:[%s270 + $0x390] sm:$0xff]
      %v408 = vld [vmem:[%s270 + $0x398] sm:$0xff]
      %v409 = vld [vmem:[%s270 + $0x3a0] sm:$0xff]
      %v410 = vld [vmem:[%s270 + $0x3a8] sm:$0xff]
      %v411 = vld [vmem:[%s270 + $0x3b0] sm:$0xff]
      %v412 = vld [vmem:[%s270 + $0x3b8] sm:$0xff]
      %v413 = vld [vmem:[%s270 + $0x3c0] sm:$0xff]
      %v414 = vld [vmem:[%s270 + $0x3c8] sm:$0xff]
      %v415 = vld [vmem:[%s270 + $0x3d0] sm:$0xff]
      %v416 = vld [vmem:[%s270 + $0x3d8] sm:$0xff]
      %v417 = vld [vmem:[%s270 + $0x3e0] sm:$0xff]
      %v418 = vld [vmem:[%s270 + $0x3e8] sm:$0xff]
      %v419 = vld [vmem:[%s270 + $0x3f0] sm:$0xff]
      %v420 = vld [vmem:[%s270 + $0x3f8] sm:$0xff]
      %v421 = vld [vmem:[%s270 + $0x400] sm:$0xff]
      %v422 = vld [vmem:[%s270 + $0x408] sm:$0xff]
      %v423 = vld [vmem:[%s270 + $0x410] sm:$0xff]
      %v424 = vld [vmem:[%s270 + $0x418] sm:$0xff]
      %v425 = vld [vmem:[%s270 + $0x420] sm:$0xff]
      %v426 = vld [vmem:[%s270 + $0x428] sm:$0xff]
      %v427 = vld [vmem:[%s270 + $0x430] sm:$0xff]
      %v428 = vld [vmem:[%s270 + $0x438] sm:$0xff]
      %v429 = vld [vmem:[%s270 + $0x440] sm:$0xff]
      %v430 = vld [vmem:[%s270 + $0x448] sm:$0xff]
      %v431 = vld [vmem:[%s270 + $0x450] sm:$0xff]
      %v432 = vld [vmem:[%s270 + $0x458] sm:$0xff]
      %v433 = vld [vmem:[%s270 + $0x460] sm:$0xff]
      %v434 = vld [vmem:[%s270 + $0x468] sm:$0xff]
      %v435 = vld [vmem:[%s270 + $0x470] sm:$0xff]
      %v436 = vld [vmem:[%s270 + $0x478] sm:$0xff]
      %v437 = vld [vmem:[%s270 + $0x480] sm:$0xff]
      %v438 = vld [vmem:[%s270 + $0x488] sm:$0xff]
      %v439 = vld [vmem:[%s270 + $0x490] sm:$0xff]
      %v440 = vld [vmem:[%s270 + $0x498] sm:$0xff]
      %v441 = vld [vmem:[%s270 + $0x4a0] sm:$0xff]
      %v442 = vld [vmem:[%s270 + $0x4a8] sm:$0xff]
      %v443 = vld [vmem:[%s270 + $0x4b0] sm:$0xff]
      %v444 = vld [vmem:[%s270 + $0x4b8] sm:$0xff]
      %v445 = vld [vmem:[%s270 + $0x4c0] sm:$0xff]
      %v446 = vld [vmem:[%s270 + $0x4c8] sm:$0xff]
      %v447 = vld [vmem:[%s270 + $0x4d0] sm:$0xff]
      %v448 = vld [vmem:[%s270 + $0x4d8] sm:$0xff]
      %v449 = vld [vmem:[%s270 + $0x4e0] sm:$0xff]
      %v450 = vld [vmem:[%s270 + $0x4e8] sm:$0xff]
      %v451 = vld [vmem:[%s270 + $0x4f0] sm:$0xff]
      %v452 = vld [vmem:[%s270 + $0x4f8] sm:$0xff]
      %v453 = vld [vmem:[%s270 + $0x500] sm:$0xff]
      %v454 = vld [vmem:[%s270 + $0x508] sm:$0xff]
      %v455 = vld [vmem:[%s270 + $0x510] sm:$0xff]
      %v456 = vld [vmem:[%s270 + $0x518] sm:$0xff]
      %v457 = vld [vmem:[%s270 + $0x520] sm:$0xff]
      %v458 = vld [vmem:[%s270 + $0x528] sm:$0xff]
      %v459 = vld [vmem:[%s270 + $0x530] sm:$0xff]
      %v460 = vld [vmem:[%s270 + $0x538] sm:$0xff]
      %v461 = vld [vmem:[%s270 + $0x540] sm:$0xff]
      %v462 = vld [vmem:[%s270 + $0x548] sm:$0xff]
      %v463 = vld [vmem:[%s270 + $0x550] sm:$0xff]
      %v464 = vld [vmem:[%s270 + $0x558] sm:$0xff]
      %v465 = vld [vmem:[%s270 + $0x560] sm:$0xff]
      %v466 = vld [vmem:[%s270 + $0x568] sm:$0xff]
      %v467 = vld [vmem:[%s270 + $0x570] sm:$0xff]
      %v468 = vld [vmem:[%s270 + $0x578] sm:$0xff]
      %v469 = vld [vmem:[%s270 + $0x580] sm:$0xff]
      %v470 = vld [vmem:[%s270 + $0x588] sm:$0xff]
      %v471 = vld [vmem:[%s270 + $0x590] sm:$0xff]
      %v472 = vld [vmem:[%s270 + $0x598] sm:$0xff]
      %v473 = vld [vmem:[%s270 + $0x5a0] sm:$0xff]
      %v474 = vld [vmem:[%s270 + $0x5a8] sm:$0xff]
      %v475 = vld [vmem:[%s270 + $0x5b0] sm:$0xff]
      %v476 = vld [vmem:[%s270 + $0x5b8] sm:$0xff]
      %v477 = vld [vmem:[%s270 + $0x5c0] sm:$0xff]
      %v478 = vld [vmem:[%s270 + $0x5c8] sm:$0xff]
      %v479 = vld [vmem:[%s270 + $0x5d0] sm:$0xff]
      %v480 = vld [vmem:[%s270 + $0x5d8] sm:$0xff]
      %v481 = vld [vmem:[%s270 + $0x5e0] sm:$0xff]
      %v482 = vld [vmem:[%s270 + $0x5e8] sm:$0xff]
      %v483 = vld [vmem:[%s270 + $0x5f0] sm:$0xff]
      %v484 = vld [vmem:[%s270 + $0x5f8] sm:$0xff]
      %v485 = vld [vmem:[%s270 + $0x600] sm:$0xff]
      %v486 = vld [vmem:[%s270 + $0x608] sm:$0xff]
      %v487 = vld [vmem:[%s270 + $0x610] sm:$0xff]
      %v488 = vld [vmem:[%s270 + $0x618] sm:$0xff]
      %v489 = vld [vmem:[%s270 + $0x620] sm:$0xff]
      %v490 = vld [vmem:[%s270 + $0x628] sm:$0xff]
      %v491 = vld [vmem:[%s270 + $0x630] sm:$0xff]
      %v492 = vld [vmem:[%s270 + $0x638] sm:$0xff]
      %v493 = vld [vmem:[%s270 + $0x640] sm:$0xff]
      %v494 = vld [vmem:[%s270 + $0x648] sm:$0xff]
      %v495 = vld [vmem:[%s270 + $0x650] sm:$0xff]
      %v496 = vld [vmem:[%s270 + $0x658] sm:$0xff]
      %v497 = vld [vmem:[%s270 + $0x660] sm:$0xff]
      %v498 = vld [vmem:[%s270 + $0x668] sm:$0xff]
      %v499 = vld [vmem:[%s270 + $0x670] sm:$0xff]
      %v500 = vld [vmem:[%s270 + $0x678] sm:$0xff]
      %v501 = vld [vmem:[%s270 + $0x680] sm:$0xff]
      %v502 = vld [vmem:[%s270 + $0x688] sm:$0xff]
      %v503 = vld [vmem:[%s270 + $0x690] sm:$0xff]
      %v504 = vld [vmem:[%s270 + $0x698] sm:$0xff]
      %v505 = vld [vmem:[%s270 + $0x6a0] sm:$0xff]
      %v506 = vld [vmem:[%s270 + $0x6a8] sm:$0xff]
      %v507 = vld [vmem:[%s270 + $0x6b0] sm:$0xff]
      %v508 = vld [vmem:[%s270 + $0x6b8] sm:$0xff]
      %v509 = vld [vmem:[%s270 + $0x6c0] sm:$0xff]
      %v510 = vld [vmem:[%s270 + $0x6c8] sm:$0xff]
      %v511 = vld [vmem:[%s270 + $0x6d0] sm:$0xff]
      %v512 = vld [vmem:[%s270 + $0x6d8] sm:$0xff]
      %v513 = vld [vmem:[%s270 + $0x6e0] sm:$0xff]
      %v514 = vld [vmem:[%s270 + $0x6e8] sm:$0xff]
      %v515 = vld [vmem:[%s270 + $0x6f0] sm:$0xff]
      %v516 = vld [vmem:[%s270 + $0x6f8] sm:$0xff]
      %v517 = vld [vmem:[%s270 + $0x700] sm:$0xff]
      %v518 = vld [vmem:[%s270 + $0x708] sm:$0xff]
      %v519 = vld [vmem:[%s270 + $0x710] sm:$0xff]
      %v520 = vld [vmem:[%s270 + $0x718] sm:$0xff]
      %v521 = vld [vmem:[%s270 + $0x720] sm:$0xff]
      %v522 = vld [vmem:[%s270 + $0x728] sm:$0xff]
      %v523 = vld [vmem:[%s270 + $0x730] sm:$0xff]
      %v524 = vld [vmem:[%s270 + $0x738] sm:$0xff]
      %v525 = vld [vmem:[%s270 + $0x740] sm:$0xff]
      %v526 = vld [vmem:[%s270 + $0x748] sm:$0xff]
      %v527 = vld [vmem:[%s270 + $0x750] sm:$0xff]
      %v528 = vld [vmem:[%s270 + $0x758] sm:$0xff]
      %v529 = vld [vmem:[%s270 + $0x760] sm:$0xff]
      %v530 = vld [vmem:[%s270 + $0x768] sm:$0xff]
      %v531 = vld [vmem:[%s270 + $0x770] sm:$0xff]
      %v532 = vld [vmem:[%s270 + $0x778] sm:$0xff]
      %v533 = vld [vmem:[%s270 + $0x780] sm:$0xff]
      %v534 = vld [vmem:[%s270 + $0x788] sm:$0xff]
      %v535 = vld [vmem:[%s270 + $0x790] sm:$0xff]
      %v536 = vld [vmem:[%s270 + $0x798] sm:$0xff]
      %v537 = vld [vmem:[%s270 + $0x7a0] sm:$0xff]
      %v538 = vld [vmem:[%s270 + $0x7a8] sm:$0xff]
      %v539 = vld [vmem:[%s270 + $0x7b0] sm:$0xff]
      %v540 = vld [vmem:[%s270 + $0x7b8] sm:$0xff]
      %v541 = vld [vmem:[%s270 + $0x7c0] sm:$0xff]
      %v542 = vld [vmem:[%s270 + $0x7c8] sm:$0xff]
      %v543 = vld [vmem:[%s270 + $0x7d0] sm:$0xff]
      %v544 = vld [vmem:[%s270 + $0x7d8] sm:$0xff]
      %v545 = vld [vmem:[%s270 + $0x7e0] sm:$0xff]
      %v546 = vld [vmem:[%s270 + $0x7e8] sm:$0xff]
      %v547 = vld [vmem:[%s270 + $0x7f0] sm:$0xff]
      %v548 = vld [vmem:[%s270 + $0x7f8] sm:$0xff]
      %v557 = vunpack.c.l.b16 %v285
      %v558 = vunpack.c.h.b16 %v285
      %v559 = vunpack.c.l.b16 %v286
      %v560 = vunpack.c.h.b16 %v286
      %v561 = vunpack.c.l.b16 %v287
      %v562 = vunpack.c.h.b16 %v287
      %v563 = vunpack.c.l.b16 %v288
      %v564 = vunpack.c.h.b16 %v288
      %v565 = vunpack.c.l.b16 %v289
      %v566 = vunpack.c.h.b16 %v289
      %v567 = vunpack.c.l.b16 %v290
      %v568 = vunpack.c.h.b16 %v290
      %v569 = vunpack.c.l.b16 %v291
      %v570 = vunpack.c.h.b16 %v291
      %v571 = vunpack.c.l.b16 %v292
      %v572 = vunpack.c.h.b16 %v292
      %v573 = vpack.c.b16 %v557, %v557
      %v574 = vpack.c.b16 %v558, %v558
      %v575 = vpack.c.b16 %v559, %v559
      %v576 = vpack.c.b16 %v560, %v560
      %v577 = vpack.c.b16 %v561, %v561
      %v578 = vpack.c.b16 %v562, %v562
      %v579 = vpack.c.b16 %v563, %v563
      %v580 = vpack.c.b16 %v564, %v564
      %v581 = vpack.c.b16 %v565, %v565
      %v582 = vpack.c.b16 %v566, %v566
      %v583 = vpack.c.b16 %v567, %v567
      %v584 = vpack.c.b16 %v568, %v568
      %v585 = vpack.c.b16 %v569, %v569
      %v586 = vpack.c.b16 %v570, %v570
      %v587 = vpack.c.b16 %v571, %v571
      %v588 = vpack.c.b16 %v572, %v572
      %v861 = vunpack.c.l.b16 %v293
      %v862 = vunpack.c.h.b16 %v293
      %v863 = vunpack.c.l.b16 %v294
      %v864 = vunpack.c.h.b16 %v294
      %v865 = vunpack.c.l.b16 %v295
      %v866 = vunpack.c.h.b16 %v295
      %v867 = vunpack.c.l.b16 %v296
      %v868 = vunpack.c.h.b16 %v296
      %v869 = vunpack.c.l.b16 %v297
      %v870 = vunpack.c.h.b16 %v297
      %v871 = vunpack.c.l.b16 %v298
      %v872 = vunpack.c.h.b16 %v298
      %v873 = vunpack.c.l.b16 %v299
      %v874 = vunpack.c.h.b16 %v299
      %v875 = vunpack.c.l.b16 %v300
      %v876 = vunpack.c.h.b16 %v300
      %v877 = vunpack.c.l.b16 %v301
      %v878 = vunpack.c.h.b16 %v301
      %v879 = vunpack.c.l.b16 %v302
      %v880 = vunpack.c.h.b16 %v302
      %v881 = vunpack.c.l.b16 %v303
      %v882 = vunpack.c.h.b16 %v303
      %v883 = vunpack.c.l.b16 %v304
      %v884 = vunpack.c.h.b16 %v304
      %v885 = vunpack.c.l.b16 %v305
      %v886 = vunpack.c.h.b16 %v305
      %v887 = vunpack.c.l.b16 %v306
      %v888 = vunpack.c.h.b16 %v306
      %v889 = vunpack.c.l.b16 %v307
      %v890 = vunpack.c.h.b16 %v307
      %v891 = vunpack.c.l.b16 %v308
      %v892 = vunpack.c.h.b16 %v308
      %v893 = vunpack.c.l.b16 %v309
      %v894 = vunpack.c.h.b16 %v309
      %v895 = vunpack.c.l.b16 %v310
      %v896 = vunpack.c.h.b16 %v310
      %v897 = vunpack.c.l.b16 %v311
      %v898 = vunpack.c.h.b16 %v311
      %v899 = vunpack.c.l.b16 %v312
      %v900 = vunpack.c.h.b16 %v312
      %v901 = vunpack.c.l.b16 %v313
      %v902 = vunpack.c.h.b16 %v313
      %v903 = vunpack.c.l.b16 %v314
      %v904 = vunpack.c.h.b16 %v314
      %v905 = vunpack.c.l.b16 %v315
      %v906 = vunpack.c.h.b16 %v315
      %v907 = vunpack.c.l.b16 %v316
      %v908 = vunpack.c.h.b16 %v316
      %v909 = vunpack.c.l.b16 %v317
      %v910 = vunpack.c.h.b16 %v317
      %v911 = vunpack.c.l.b16 %v318
      %v912 = vunpack.c.h.b16 %v318
      %v913 = vunpack.c.l.b16 %v319
      %v914 = vunpack.c.h.b16 %v319
      %v915 = vunpack.c.l.b16 %v320
      %v916 = vunpack.c.h.b16 %v320
      %v917 = vunpack.c.l.b16 %v321
      %v918 = vunpack.c.h.b16 %v321
      %v919 = vunpack.c.l.b16 %v322
      %v920 = vunpack.c.h.b16 %v322
      %v921 = vunpack.c.l.b16 %v323
      %v922 = vunpack.c.h.b16 %v323
      %v923 = vunpack.c.l.b16 %v324
      %v924 = vunpack.c.h.b16 %v324
      %v925 = vunpack.c.l.b16 %v325
      %v926 = vunpack.c.h.b16 %v325
      %v927 = vunpack.c.l.b16 %v326
      %v928 = vunpack.c.h.b16 %v326
      %v929 = vunpack.c.l.b16 %v327
      %v930 = vunpack.c.h.b16 %v327
      %v931 = vunpack.c.l.b16 %v328
      %v932 = vunpack.c.h.b16 %v328
      %v933 = vunpack.c.l.b16 %v329
      %v934 = vunpack.c.h.b16 %v329
      %v935 = vunpack.c.l.b16 %v330
      %v936 = vunpack.c.h.b16 %v330
      %v937 = vunpack.c.l.b16 %v331
      %v938 = vunpack.c.h.b16 %v331
      %v939 = vunpack.c.l.b16 %v332
      %v940 = vunpack.c.h.b16 %v332
      %v941 = vunpack.c.l.b16 %v333
      %v942 = vunpack.c.h.b16 %v333
      %v943 = vunpack.c.l.b16 %v334
      %v944 = vunpack.c.h.b16 %v334
      %v945 = vunpack.c.l.b16 %v335
      %v946 = vunpack.c.h.b16 %v335
      %v947 = vunpack.c.l.b16 %v336
      %v948 = vunpack.c.h.b16 %v336
      %v949 = vunpack.c.l.b16 %v337
      %v950 = vunpack.c.h.b16 %v337
      %v951 = vunpack.c.l.b16 %v338
      %v952 = vunpack.c.h.b16 %v338
      %v953 = vunpack.c.l.b16 %v339
      %v954 = vunpack.c.h.b16 %v339
      %v955 = vunpack.c.l.b16 %v340
      %v956 = vunpack.c.h.b16 %v340
      %v957 = vunpack.c.l.b16 %v341
      %v958 = vunpack.c.h.b16 %v341
      %v959 = vunpack.c.l.b16 %v342
      %v960 = vunpack.c.h.b16 %v342
      %v961 = vunpack.c.l.b16 %v343
      %v962 = vunpack.c.h.b16 %v343
      %v963 = vunpack.c.l.b16 %v344
      %v964 = vunpack.c.h.b16 %v344
      %v965 = vunpack.c.l.b16 %v345
      %v966 = vunpack.c.h.b16 %v345
      %v967 = vunpack.c.l.b16 %v346
      %v968 = vunpack.c.h.b16 %v346
      %v969 = vunpack.c.l.b16 %v347
      %v970 = vunpack.c.h.b16 %v347
      %v971 = vunpack.c.l.b16 %v348
      %v972 = vunpack.c.h.b16 %v348
      %v973 = vunpack.c.l.b16 %v349
      %v974 = vunpack.c.h.b16 %v349
      %v975 = vunpack.c.l.b16 %v350
      %v976 = vunpack.c.h.b16 %v350
      %v977 = vunpack.c.l.b16 %v351
      %v978 = vunpack.c.h.b16 %v351
      %v979 = vunpack.c.l.b16 %v352
      %v980 = vunpack.c.h.b16 %v352
      %v981 = vunpack.c.l.b16 %v353
      %v982 = vunpack.c.h.b16 %v353
      %v983 = vunpack.c.l.b16 %v354
      %v984 = vunpack.c.h.b16 %v354
      %v985 = vunpack.c.l.b16 %v355
      %v986 = vunpack.c.h.b16 %v355
      %v987 = vunpack.c.l.b16 %v356
      %v988 = vunpack.c.h.b16 %v356
      %v989 = vunpack.c.l.b16 %v357
      %v990 = vunpack.c.h.b16 %v357
      %v991 = vunpack.c.l.b16 %v358
      %v992 = vunpack.c.h.b16 %v358
      %v993 = vunpack.c.l.b16 %v359
      %v994 = vunpack.c.h.b16 %v359
      %v995 = vunpack.c.l.b16 %v360
      %v996 = vunpack.c.h.b16 %v360
      %v997 = vunpack.c.l.b16 %v361
      %v998 = vunpack.c.h.b16 %v361
      %v999 = vunpack.c.l.b16 %v362
      %v1000 = vunpack.c.h.b16 %v362
      %v1001 = vunpack.c.l.b16 %v363
      %v1002 = vunpack.c.h.b16 %v363
      %v1003 = vunpack.c.l.b16 %v364
      %v1004 = vunpack.c.h.b16 %v364
      %v1005 = vunpack.c.l.b16 %v365
      %v1006 = vunpack.c.h.b16 %v365
      %v1007 = vunpack.c.l.b16 %v366
      %v1008 = vunpack.c.h.b16 %v366
      %v1009 = vunpack.c.l.b16 %v367
      %v1010 = vunpack.c.h.b16 %v367
      %v1011 = vunpack.c.l.b16 %v368
      %v1012 = vunpack.c.h.b16 %v368
      %v1013 = vunpack.c.l.b16 %v369
      %v1014 = vunpack.c.h.b16 %v369
      %v1015 = vunpack.c.l.b16 %v370
      %v1016 = vunpack.c.h.b16 %v370
      %v1017 = vunpack.c.l.b16 %v371
      %v1018 = vunpack.c.h.b16 %v371
      %v1019 = vunpack.c.l.b16 %v372
      %v1020 = vunpack.c.h.b16 %v372
      %v1021 = vunpack.c.l.b16 %v373
      %v1022 = vunpack.c.h.b16 %v373
      %v1023 = vunpack.c.l.b16 %v374
      %v1024 = vunpack.c.h.b16 %v374
      %v1025 = vunpack.c.l.b16 %v375
      %v1026 = vunpack.c.h.b16 %v375
      %v1027 = vunpack.c.l.b16 %v376
      %v1028 = vunpack.c.h.b16 %v376
      %v1029 = vunpack.c.l.b16 %v377
      %v1030 = vunpack.c.h.b16 %v377
      %v1031 = vunpack.c.l.b16 %v378
      %v1032 = vunpack.c.h.b16 %v378
      %v1033 = vunpack.c.l.b16 %v379
      %v1034 = vunpack.c.h.b16 %v379
      %v1035 = vunpack.c.l.b16 %v380
      %v1036 = vunpack.c.h.b16 %v380
      %v1037 = vunpack.c.l.b16 %v381
      %v1038 = vunpack.c.h.b16 %v381
      %v1039 = vunpack.c.l.b16 %v382
      %v1040 = vunpack.c.h.b16 %v382
      %v1041 = vunpack.c.l.b16 %v383
      %v1042 = vunpack.c.h.b16 %v383
      %v1043 = vunpack.c.l.b16 %v384
      %v1044 = vunpack.c.h.b16 %v384
      %v1045 = vunpack.c.l.b16 %v385
      %v1046 = vunpack.c.h.b16 %v385
      %v1047 = vunpack.c.l.b16 %v386
      %v1048 = vunpack.c.h.b16 %v386
      %v1049 = vunpack.c.l.b16 %v387
      %v1050 = vunpack.c.h.b16 %v387
      %v1051 = vunpack.c.l.b16 %v388
      %v1052 = vunpack.c.h.b16 %v388
      %v1053 = vunpack.c.l.b16 %v389
      %v1054 = vunpack.c.h.b16 %v389
      %v1055 = vunpack.c.l.b16 %v390
      %v1056 = vunpack.c.h.b16 %v390
      %v1057 = vunpack.c.l.b16 %v391
      %v1058 = vunpack.c.h.b16 %v391
      %v1059 = vunpack.c.l.b16 %v392
      %v1060 = vunpack.c.h.b16 %v392
      %v1061 = vunpack.c.l.b16 %v393
      %v1062 = vunpack.c.h.b16 %v393
      %v1063 = vunpack.c.l.b16 %v394
      %v1064 = vunpack.c.h.b16 %v394
      %v1065 = vunpack.c.l.b16 %v395
      %v1066 = vunpack.c.h.b16 %v395
      %v1067 = vunpack.c.l.b16 %v396
      %v1068 = vunpack.c.h.b16 %v396
      %v1069 = vunpack.c.l.b16 %v397
      %v1070 = vunpack.c.h.b16 %v397
      %v1071 = vunpack.c.l.b16 %v398
      %v1072 = vunpack.c.h.b16 %v398
      %v1073 = vunpack.c.l.b16 %v399
      %v1074 = vunpack.c.h.b16 %v399
      %v1075 = vunpack.c.l.b16 %v400
      %v1076 = vunpack.c.h.b16 %v400
      %v1077 = vunpack.c.l.b16 %v401
      %v1078 = vunpack.c.h.b16 %v401
      %v1079 = vunpack.c.l.b16 %v402
      %v1080 = vunpack.c.h.b16 %v402
      %v1081 = vunpack.c.l.b16 %v403
      %v1082 = vunpack.c.h.b16 %v403
      %v1083 = vunpack.c.l.b16 %v404
      %v1084 = vunpack.c.h.b16 %v404
      %v1085 = vunpack.c.l.b16 %v405
      %v1086 = vunpack.c.h.b16 %v405
      %v1087 = vunpack.c.l.b16 %v406
      %v1088 = vunpack.c.h.b16 %v406
      %v1089 = vunpack.c.l.b16 %v407
      %v1090 = vunpack.c.h.b16 %v407
      %v1091 = vunpack.c.l.b16 %v408
      %v1092 = vunpack.c.h.b16 %v408
      %v1093 = vunpack.c.l.b16 %v409
      %v1094 = vunpack.c.h.b16 %v409
      %v1095 = vunpack.c.l.b16 %v410
      %v1096 = vunpack.c.h.b16 %v410
      %v1097 = vunpack.c.l.b16 %v411
      %v1098 = vunpack.c.h.b16 %v411
      %v1099 = vunpack.c.l.b16 %v412
      %v1100 = vunpack.c.h.b16 %v412
      %v1101 = vunpack.c.l.b16 %v413
      %v1102 = vunpack.c.h.b16 %v413
      %v1103 = vunpack.c.l.b16 %v414
      %v1104 = vunpack.c.h.b16 %v414
      %v1105 = vunpack.c.l.b16 %v415
      %v1106 = vunpack.c.h.b16 %v415
      %v1107 = vunpack.c.l.b16 %v416
      %v1108 = vunpack.c.h.b16 %v416
      %v1109 = vunpack.c.l.b16 %v417
      %v1110 = vunpack.c.h.b16 %v417
      %v1111 = vunpack.c.l.b16 %v418
      %v1112 = vunpack.c.h.b16 %v418
      %v1113 = vunpack.c.l.b16 %v419
      %v1114 = vunpack.c.h.b16 %v419
      %v1115 = vunpack.c.l.b16 %v420
      %v1116 = vunpack.c.h.b16 %v420
      %v1117 = vunpack.c.l.b16 %v421
      %v1118 = vunpack.c.h.b16 %v421
      %v1119 = vunpack.c.l.b16 %v422
      %v1120 = vunpack.c.h.b16 %v422
      %v1121 = vunpack.c.l.b16 %v423
      %v1122 = vunpack.c.h.b16 %v423
      %v1123 = vunpack.c.l.b16 %v424
      %v1124 = vunpack.c.h.b16 %v424
      %v1125 = vunpack.c.l.b16 %v425
      %v1126 = vunpack.c.h.b16 %v425
      %v1127 = vunpack.c.l.b16 %v426
      %v1128 = vunpack.c.h.b16 %v426
      %v1129 = vunpack.c.l.b16 %v427
      %v1130 = vunpack.c.h.b16 %v427
      %v1131 = vunpack.c.l.b16 %v428
      %v1132 = vunpack.c.h.b16 %v428
      %v1133 = vunpack.c.l.b16 %v429
      %v1134 = vunpack.c.h.b16 %v429
      %v1135 = vunpack.c.l.b16 %v430
      %v1136 = vunpack.c.h.b16 %v430
      %v1137 = vunpack.c.l.b16 %v431
      %v1138 = vunpack.c.h.b16 %v431
      %v1139 = vunpack.c.l.b16 %v432
      %v1140 = vunpack.c.h.b16 %v432
      %v1141 = vunpack.c.l.b16 %v433
      %v1142 = vunpack.c.h.b16 %v433
      %v1143 = vunpack.c.l.b16 %v434
      %v1144 = vunpack.c.h.b16 %v434
      %v1145 = vunpack.c.l.b16 %v435
      %v1146 = vunpack.c.h.b16 %v435
      %v1147 = vunpack.c.l.b16 %v436
      %v1148 = vunpack.c.h.b16 %v436
      %v1149 = vunpack.c.l.b16 %v437
      %v1150 = vunpack.c.h.b16 %v437
      %v1151 = vunpack.c.l.b16 %v438
      %v1152 = vunpack.c.h.b16 %v438
      %v1153 = vunpack.c.l.b16 %v439
      %v1154 = vunpack.c.h.b16 %v439
      %v1155 = vunpack.c.l.b16 %v440
      %v1156 = vunpack.c.h.b16 %v440
      %v1157 = vunpack.c.l.b16 %v441
      %v1158 = vunpack.c.h.b16 %v441
      %v1159 = vunpack.c.l.b16 %v442
      %v1160 = vunpack.c.h.b16 %v442
      %v1161 = vunpack.c.l.b16 %v443
      %v1162 = vunpack.c.h.b16 %v443
      %v1163 = vunpack.c.l.b16 %v444
      %v1164 = vunpack.c.h.b16 %v444
      %v1165 = vunpack.c.l.b16 %v445
      %v1166 = vunpack.c.h.b16 %v445
      %v1167 = vunpack.c.l.b16 %v446
      %v1168 = vunpack.c.h.b16 %v446
      %v1169 = vunpack.c.l.b16 %v447
      %v1170 = vunpack.c.h.b16 %v447
      %v1171 = vunpack.c.l.b16 %v448
      %v1172 = vunpack.c.h.b16 %v448
      %v1173 = vunpack.c.l.b16 %v449
      %v1174 = vunpack.c.h.b16 %v449
      %v1175 = vunpack.c.l.b16 %v450
      %v1176 = vunpack.c.h.b16 %v450
      %v1177 = vunpack.c.l.b16 %v451
      %v1178 = vunpack.c.h.b16 %v451
      %v1179 = vunpack.c.l.b16 %v452
      %v1180 = vunpack.c.h.b16 %v452
      %v1181 = vunpack.c.l.b16 %v453
      %v1182 = vunpack.c.h.b16 %v453
      %v1183 = vunpack.c.l.b16 %v454
      %v1184 = vunpack.c.h.b16 %v454
      %v1185 = vunpack.c.l.b16 %v455
      %v1186 = vunpack.c.h.b16 %v455
      %v1187 = vunpack.c.l.b16 %v456
      %v1188 = vunpack.c.h.b16 %v456
      %v1189 = vunpack.c.l.b16 %v457
      %v1190 = vunpack.c.h.b16 %v457
      %v1191 = vunpack.c.l.b16 %v458
      %v1192 = vunpack.c.h.b16 %v458
      %v1193 = vunpack.c.l.b16 %v459
      %v1194 = vunpack.c.h.b16 %v459
      %v1195 = vunpack.c.l.b16 %v460
      %v1196 = vunpack.c.h.b16 %v460
      %v1197 = vunpack.c.l.b16 %v461
      %v1198 = vunpack.c.h.b16 %v461
      %v1199 = vunpack.c.l.b16 %v462
      %v1200 = vunpack.c.h.b16 %v462
      %v1201 = vunpack.c.l.b16 %v463
      %v1202 = vunpack.c.h.b16 %v463
      %v1203 = vunpack.c.l.b16 %v464
      %v1204 = vunpack.c.h.b16 %v464
      %v1205 = vunpack.c.l.b16 %v465
      %v1206 = vunpack.c.h.b16 %v465
      %v1207 = vunpack.c.l.b16 %v466
      %v1208 = vunpack.c.h.b16 %v466
      %v1209 = vunpack.c.l.b16 %v467
      %v1210 = vunpack.c.h.b16 %v467
      %v1211 = vunpack.c.l.b16 %v468
      %v1212 = vunpack.c.h.b16 %v468
      %v1213 = vunpack.c.l.b16 %v469
      %v1214 = vunpack.c.h.b16 %v469
      %v1215 = vunpack.c.l.b16 %v470
      %v1216 = vunpack.c.h.b16 %v470
      %v1217 = vunpack.c.l.b16 %v471
      %v1218 = vunpack.c.h.b16 %v471
      %v1219 = vunpack.c.l.b16 %v472
      %v1220 = vunpack.c.h.b16 %v472
      %v1221 = vunpack.c.l.b16 %v473
      %v1222 = vunpack.c.h.b16 %v473
      %v1223 = vunpack.c.l.b16 %v474
      %v1224 = vunpack.c.h.b16 %v474
      %v1225 = vunpack.c.l.b16 %v475
      %v1226 = vunpack.c.h.b16 %v475
      %v1227 = vunpack.c.l.b16 %v476
      %v1228 = vunpack.c.h.b16 %v476
      %v1229 = vunpack.c.l.b16 %v477
      %v1230 = vunpack.c.h.b16 %v477
      %v1231 = vunpack.c.l.b16 %v478
      %v1232 = vunpack.c.h.b16 %v478
      %v1233 = vunpack.c.l.b16 %v479
      %v1234 = vunpack.c.h.b16 %v479
      %v1235 = vunpack.c.l.b16 %v480
      %v1236 = vunpack.c.h.b16 %v480
      %v1237 = vunpack.c.l.b16 %v481
      %v1238 = vunpack.c.h.b16 %v481
      %v1239 = vunpack.c.l.b16 %v482
      %v1240 = vunpack.c.h.b16 %v482
      %v1241 = vunpack.c.l.b16 %v483
      %v1242 = vunpack.c.h.b16 %v483
      %v1243 = vunpack.c.l.b16 %v484
      %v1244 = vunpack.c.h.b16 %v484
      %v1245 = vunpack.c.l.b16 %v485
      %v1246 = vunpack.c.h.b16 %v485
      %v1247 = vunpack.c.l.b16 %v486
      %v1248 = vunpack.c.h.b16 %v486
      %v1249 = vunpack.c.l.b16 %v487
      %v1250 = vunpack.c.h.b16 %v487
      %v1251 = vunpack.c.l.b16 %v488
      %v1252 = vunpack.c.h.b16 %v488
      %v1253 = vunpack.c.l.b16 %v489
      %v1254 = vunpack.c.h.b16 %v489
      %v1255 = vunpack.c.l.b16 %v490
      %v1256 = vunpack.c.h.b16 %v490
      %v1257 = vunpack.c.l.b16 %v491
      %v1258 = vunpack.c.h.b16 %v491
      %v1259 = vunpack.c.l.b16 %v492
      %v1260 = vunpack.c.h.b16 %v492
      %v1261 = vunpack.c.l.b16 %v493
      %v1262 = vunpack.c.h.b16 %v493
      %v1263 = vunpack.c.l.b16 %v494
      %v1264 = vunpack.c.h.b16 %v494
      %v1265 = vunpack.c.l.b16 %v495
      %v1266 = vunpack.c.h.b16 %v495
      %v1267 = vunpack.c.l.b16 %v496
      %v1268 = vunpack.c.h.b16 %v496
      %v1269 = vunpack.c.l.b16 %v497
      %v1270 = vunpack.c.h.b16 %v497
      %v1271 = vunpack.c.l.b16 %v498
      %v1272 = vunpack.c.h.b16 %v498
      %v1273 = vunpack.c.l.b16 %v499
      %v1274 = vunpack.c.h.b16 %v499
      %v1275 = vunpack.c.l.b16 %v500
      %v1276 = vunpack.c.h.b16 %v500
      %v1277 = vunpack.c.l.b16 %v501
      %v1278 = vunpack.c.h.b16 %v501
      %v1279 = vunpack.c.l.b16 %v502
      %v1280 = vunpack.c.h.b16 %v502
      %v1281 = vunpack.c.l.b16 %v503
      %v1282 = vunpack.c.h.b16 %v503
      %v1283 = vunpack.c.l.b16 %v504
      %v1284 = vunpack.c.h.b16 %v504
      %v1285 = vunpack.c.l.b16 %v505
      %v1286 = vunpack.c.h.b16 %v505
      %v1287 = vunpack.c.l.b16 %v506
      %v1288 = vunpack.c.h.b16 %v506
      %v1289 = vunpack.c.l.b16 %v507
      %v1290 = vunpack.c.h.b16 %v507
      %v1291 = vunpack.c.l.b16 %v508
      %v1292 = vunpack.c.h.b16 %v508
      %v1293 = vunpack.c.l.b16 %v509
      %v1294 = vunpack.c.h.b16 %v509
      %v1295 = vunpack.c.l.b16 %v510
      %v1296 = vunpack.c.h.b16 %v510
      %v1297 = vunpack.c.l.b16 %v511
      %v1298 = vunpack.c.h.b16 %v511
      %v1299 = vunpack.c.l.b16 %v512
      %v1300 = vunpack.c.h.b16 %v512
      %v1301 = vunpack.c.l.b16 %v513
      %v1302 = vunpack.c.h.b16 %v513
      %v1303 = vunpack.c.l.b16 %v514
      %v1304 = vunpack.c.h.b16 %v514
      %v1305 = vunpack.c.l.b16 %v515
      %v1306 = vunpack.c.h.b16 %v515
      %v1307 = vunpack.c.l.b16 %v516
      %v1308 = vunpack.c.h.b16 %v516
      %v1309 = vunpack.c.l.b16 %v517
      %v1310 = vunpack.c.h.b16 %v517
      %v1311 = vunpack.c.l.b16 %v518
      %v1312 = vunpack.c.h.b16 %v518
      %v1313 = vunpack.c.l.b16 %v519
      %v1314 = vunpack.c.h.b16 %v519
      %v1315 = vunpack.c.l.b16 %v520
      %v1316 = vunpack.c.h.b16 %v520
      %v1317 = vunpack.c.l.b16 %v521
      %v1318 = vunpack.c.h.b16 %v521
      %v1319 = vunpack.c.l.b16 %v522
      %v1320 = vunpack.c.h.b16 %v522
      %v1321 = vunpack.c.l.b16 %v523
      %v1322 = vunpack.c.h.b16 %v523
      %v1323 = vunpack.c.l.b16 %v524
      %v1324 = vunpack.c.h.b16 %v524
      %v1325 = vunpack.c.l.b16 %v525
      %v1326 = vunpack.c.h.b16 %v525
      %v1327 = vunpack.c.l.b16 %v526
      %v1328 = vunpack.c.h.b16 %v526
      %v1329 = vunpack.c.l.b16 %v527
      %v1330 = vunpack.c.h.b16 %v527
      %v1331 = vunpack.c.l.b16 %v528
      %v1332 = vunpack.c.h.b16 %v528
      %v1333 = vunpack.c.l.b16 %v529
      %v1334 = vunpack.c.h.b16 %v529
      %v1335 = vunpack.c.l.b16 %v530
      %v1336 = vunpack.c.h.b16 %v530
      %v1337 = vunpack.c.l.b16 %v531
      %v1338 = vunpack.c.h.b16 %v531
      %v1339 = vunpack.c.l.b16 %v532
      %v1340 = vunpack.c.h.b16 %v532
      %v1341 = vunpack.c.l.b16 %v533
      %v1342 = vunpack.c.h.b16 %v533
      %v1343 = vunpack.c.l.b16 %v534
      %v1344 = vunpack.c.h.b16 %v534
      %v1345 = vunpack.c.l.b16 %v535
      %v1346 = vunpack.c.h.b16 %v535
      %v1347 = vunpack.c.l.b16 %v536
      %v1348 = vunpack.c.h.b16 %v536
      %v1349 = vunpack.c.l.b16 %v537
      %v1350 = vunpack.c.h.b16 %v537
      %v1351 = vunpack.c.l.b16 %v538
      %v1352 = vunpack.c.h.b16 %v538
      %v1353 = vunpack.c.l.b16 %v539
      %v1354 = vunpack.c.h.b16 %v539
      %v1355 = vunpack.c.l.b16 %v540
      %v1356 = vunpack.c.h.b16 %v540
      %v1357 = vunpack.c.l.b16 %v541
      %v1358 = vunpack.c.h.b16 %v541
      %v1359 = vunpack.c.l.b16 %v542
      %v1360 = vunpack.c.h.b16 %v542
      %v1361 = vunpack.c.l.b16 %v543
      %v1362 = vunpack.c.h.b16 %v543
      %v1363 = vunpack.c.l.b16 %v544
      %v1364 = vunpack.c.h.b16 %v544
      %v1365 = vunpack.c.l.b16 %v545
      %v1366 = vunpack.c.h.b16 %v545
      %v1367 = vunpack.c.l.b16 %v546
      %v1368 = vunpack.c.h.b16 %v546
      %v1369 = vunpack.c.l.b16 %v547
      %v1370 = vunpack.c.h.b16 %v547
      %v1371 = vunpack.c.l.b16 %v548
      %v1372 = vunpack.c.h.b16 %v548
      %v1373 = vpack.c.b16 %v863, %v861
      %v1374 = vpack.c.b16 %v864, %v862
      %v1375 = vpack.c.b16 %v867, %v865
      %v1376 = vpack.c.b16 %v868, %v866
      %v1377 = vpack.c.b16 %v871, %v869
      %v1378 = vpack.c.b16 %v872, %v870
      %v1379 = vpack.c.b16 %v875, %v873
      %v1380 = vpack.c.b16 %v876, %v874
      %v1381 = vpack.c.b16 %v879, %v877
      %v1382 = vpack.c.b16 %v880, %v878
      %v1383 = vpack.c.b16 %v883, %v881
      %v1384 = vpack.c.b16 %v884, %v882
      %v1385 = vpack.c.b16 %v887, %v885
      %v1386 = vpack.c.b16 %v888, %v886
      %v1387 = vpack.c.b16 %v891, %v889
      %v1388 = vpack.c.b16 %v892, %v890
      %v1389 = vpack.c.b16 %v895, %v893
      %v1390 = vpack.c.b16 %v896, %v894
      %v1391 = vpack.c.b16 %v899, %v897
      %v1392 = vpack.c.b16 %v900, %v898
      %v1393 = vpack.c.b16 %v903, %v901
      %v1394 = vpack.c.b16 %v904, %v902
      %v1395 = vpack.c.b16 %v907, %v905
      %v1396 = vpack.c.b16 %v908, %v906
      %v1397 = vpack.c.b16 %v911, %v909
      %v1398 = vpack.c.b16 %v912, %v910
      %v1399 = vpack.c.b16 %v915, %v913
      %v1400 = vpack.c.b16 %v916, %v914
      %v1401 = vpack.c.b16 %v919, %v917
      %v1402 = vpack.c.b16 %v920, %v918
      %v1403 = vpack.c.b16 %v923, %v921
      %v1404 = vpack.c.b16 %v924, %v922
      %v1405 = vpack.c.b16 %v927, %v925
      %v1406 = vpack.c.b16 %v928, %v926
      %v1407 = vpack.c.b16 %v931, %v929
      %v1408 = vpack.c.b16 %v932, %v930
      %v1409 = vpack.c.b16 %v935, %v933
      %v1410 = vpack.c.b16 %v936, %v934
      %v1411 = vpack.c.b16 %v939, %v937
      %v1412 = vpack.c.b16 %v940, %v938
      %v1413 = vpack.c.b16 %v943, %v941
      %v1414 = vpack.c.b16 %v944, %v942
      %v1415 = vpack.c.b16 %v947, %v945
      %v1416 = vpack.c.b16 %v948, %v946
      %v1417 = vpack.c.b16 %v951, %v949
      %v1418 = vpack.c.b16 %v952, %v950
      %v1419 = vpack.c.b16 %v955, %v953
      %v1420 = vpack.c.b16 %v956, %v954
      %v1421 = vpack.c.b16 %v959, %v957
      %v1422 = vpack.c.b16 %v960, %v958
      %v1423 = vpack.c.b16 %v963, %v961
      %v1424 = vpack.c.b16 %v964, %v962
      %v1425 = vpack.c.b16 %v967, %v965
      %v1426 = vpack.c.b16 %v968, %v966
      %v1427 = vpack.c.b16 %v971, %v969
      %v1428 = vpack.c.b16 %v972, %v970
      %v1429 = vpack.c.b16 %v975, %v973
      %v1430 = vpack.c.b16 %v976, %v974
      %v1431 = vpack.c.b16 %v979, %v977
      %v1432 = vpack.c.b16 %v980, %v978
      %v1433 = vpack.c.b16 %v983, %v981
      %v1434 = vpack.c.b16 %v984, %v982
      %v1435 = vpack.c.b16 %v987, %v985
      %v1436 = vpack.c.b16 %v988, %v986
      %v1437 = vpack.c.b16 %v991, %v989
      %v1438 = vpack.c.b16 %v992, %v990
      %v1439 = vpack.c.b16 %v995, %v993
      %v1440 = vpack.c.b16 %v996, %v994
      %v1441 = vpack.c.b16 %v999, %v997
      %v1442 = vpack.c.b16 %v1000, %v998
      %v1443 = vpack.c.b16 %v1003, %v1001
      %v1444 = vpack.c.b16 %v1004, %v1002
      %v1445 = vpack.c.b16 %v1007, %v1005
      %v1446 = vpack.c.b16 %v1008, %v1006
      %v1447 = vpack.c.b16 %v1011, %v1009
      %v1448 = vpack.c.b16 %v1012, %v1010
      %v1449 = vpack.c.b16 %v1015, %v1013
      %v1450 = vpack.c.b16 %v1016, %v1014
      %v1451 = vpack.c.b16 %v1019, %v1017
      %v1452 = vpack.c.b16 %v1020, %v1018
      %v1453 = vpack.c.b16 %v1023, %v1021
      %v1454 = vpack.c.b16 %v1024, %v1022
      %v1455 = vpack.c.b16 %v1027, %v1025
      %v1456 = vpack.c.b16 %v1028, %v1026
      %v1457 = vpack.c.b16 %v1031, %v1029
      %v1458 = vpack.c.b16 %v1032, %v1030
      %v1459 = vpack.c.b16 %v1035, %v1033
      %v1460 = vpack.c.b16 %v1036, %v1034
      %v1461 = vpack.c.b16 %v1039, %v1037
      %v1462 = vpack.c.b16 %v1040, %v1038
      %v1463 = vpack.c.b16 %v1043, %v1041
      %v1464 = vpack.c.b16 %v1044, %v1042
      %v1465 = vpack.c.b16 %v1047, %v1045
      %v1466 = vpack.c.b16 %v1048, %v1046
      %v1467 = vpack.c.b16 %v1051, %v1049
      %v1468 = vpack.c.b16 %v1052, %v1050
      %v1469 = vpack.c.b16 %v1055, %v1053
      %v1470 = vpack.c.b16 %v1056, %v1054
      %v1471 = vpack.c.b16 %v1059, %v1057
      %v1472 = vpack.c.b16 %v1060, %v1058
      %v1473 = vpack.c.b16 %v1063, %v1061
      %v1474 = vpack.c.b16 %v1064, %v1062
      %v1475 = vpack.c.b16 %v1067, %v1065
      %v1476 = vpack.c.b16 %v1068, %v1066
      %v1477 = vpack.c.b16 %v1071, %v1069
      %v1478 = vpack.c.b16 %v1072, %v1070
      %v1479 = vpack.c.b16 %v1075, %v1073
      %v1480 = vpack.c.b16 %v1076, %v1074
      %v1481 = vpack.c.b16 %v1079, %v1077
      %v1482 = vpack.c.b16 %v1080, %v1078
      %v1483 = vpack.c.b16 %v1083, %v1081
      %v1484 = vpack.c.b16 %v1084, %v1082
      %v1485 = vpack.c.b16 %v1087, %v1085
      %v1486 = vpack.c.b16 %v1088, %v1086
      %v1487 = vpack.c.b16 %v1091, %v1089
      %v1488 = vpack.c.b16 %v1092, %v1090
      %v1489 = vpack.c.b16 %v1095, %v1093
      %v1490 = vpack.c.b16 %v1096, %v1094
      %v1491 = vpack.c.b16 %v1099, %v1097
      %v1492 = vpack.c.b16 %v1100, %v1098
      %v1493 = vpack.c.b16 %v1103, %v1101
      %v1494 = vpack.c.b16 %v1104, %v1102
      %v1495 = vpack.c.b16 %v1107, %v1105
      %v1496 = vpack.c.b16 %v1108, %v1106
      %v1497 = vpack.c.b16 %v1111, %v1109
      %v1498 = vpack.c.b16 %v1112, %v1110
      %v1499 = vpack.c.b16 %v1115, %v1113
      %v1500 = vpack.c.b16 %v1116, %v1114
      %v1501 = vpack.c.b16 %v1119, %v1117
      %v1502 = vpack.c.b16 %v1120, %v1118
      %v1503 = vpack.c.b16 %v1123, %v1121
      %v1504 = vpack.c.b16 %v1124, %v1122
      %v1505 = vpack.c.b16 %v1127, %v1125
      %v1506 = vpack.c.b16 %v1128, %v1126
      %v1507 = vpack.c.b16 %v1131, %v1129
      %v1508 = vpack.c.b16 %v1132, %v1130
      %v1509 = vpack.c.b16 %v1135, %v1133
      %v1510 = vpack.c.b16 %v1136, %v1134
      %v1511 = vpack.c.b16 %v1139, %v1137
      %v1512 = vpack.c.b16 %v1140, %v1138
      %v1513 = vpack.c.b16 %v1143, %v1141
      %v1514 = vpack.c.b16 %v1144, %v1142
      %v1515 = vpack.c.b16 %v1147, %v1145
      %v1516 = vpack.c.b16 %v1148, %v1146
      %v1517 = vpack.c.b16 %v1151, %v1149
      %v1518 = vpack.c.b16 %v1152, %v1150
      %v1519 = vpack.c.b16 %v1155, %v1153
      %v1520 = vpack.c.b16 %v1156, %v1154
      %v1521 = vpack.c.b16 %v1159, %v1157
      %v1522 = vpack.c.b16 %v1160, %v1158
      %v1523 = vpack.c.b16 %v1163, %v1161
      %v1524 = vpack.c.b16 %v1164, %v1162
      %v1525 = vpack.c.b16 %v1167, %v1165
      %v1526 = vpack.c.b16 %v1168, %v1166
      %v1527 = vpack.c.b16 %v1171, %v1169
      %v1528 = vpack.c.b16 %v1172, %v1170
      %v1529 = vpack.c.b16 %v1175, %v1173
      %v1530 = vpack.c.b16 %v1176, %v1174
      %v1531 = vpack.c.b16 %v1179, %v1177
      %v1532 = vpack.c.b16 %v1180, %v1178
      %v1533 = vpack.c.b16 %v1183, %v1181
      %v1534 = vpack.c.b16 %v1184, %v1182
      %v1535 = vpack.c.b16 %v1187, %v1185
      %v1536 = vpack.c.b16 %v1188, %v1186
      %v1537 = vpack.c.b16 %v1191, %v1189
      %v1538 = vpack.c.b16 %v1192, %v1190
      %v1539 = vpack.c.b16 %v1195, %v1193
      %v1540 = vpack.c.b16 %v1196, %v1194
      %v1541 = vpack.c.b16 %v1199, %v1197
      %v1542 = vpack.c.b16 %v1200, %v1198
      %v1543 = vpack.c.b16 %v1203, %v1201
      %v1544 = vpack.c.b16 %v1204, %v1202
      %v1545 = vpack.c.b16 %v1207, %v1205
      %v1546 = vpack.c.b16 %v1208, %v1206
      %v1547 = vpack.c.b16 %v1211, %v1209
      %v1548 = vpack.c.b16 %v1212, %v1210
      %v1549 = vpack.c.b16 %v1215, %v1213
      %v1550 = vpack.c.b16 %v1216, %v1214
      %v1551 = vpack.c.b16 %v1219, %v1217
      %v1552 = vpack.c.b16 %v1220, %v1218
      %v1553 = vpack.c.b16 %v1223, %v1221
      %v1554 = vpack.c.b16 %v1224, %v1222
      %v1555 = vpack.c.b16 %v1227, %v1225
      %v1556 = vpack.c.b16 %v1228, %v1226
      %v1557 = vpack.c.b16 %v1231, %v1229
      %v1558 = vpack.c.b16 %v1232, %v1230
      %v1559 = vpack.c.b16 %v1235, %v1233
      %v1560 = vpack.c.b16 %v1236, %v1234
      %v1561 = vpack.c.b16 %v1239, %v1237
      %v1562 = vpack.c.b16 %v1240, %v1238
      %v1563 = vpack.c.b16 %v1243, %v1241
      %v1564 = vpack.c.b16 %v1244, %v1242
      %v1565 = vpack.c.b16 %v1247, %v1245
      %v1566 = vpack.c.b16 %v1248, %v1246
      %v1567 = vpack.c.b16 %v1251, %v1249
      %v1568 = vpack.c.b16 %v1252, %v1250
      %v1569 = vpack.c.b16 %v1255, %v1253
      %v1570 = vpack.c.b16 %v1256, %v1254
      %v1571 = vpack.c.b16 %v1259, %v1257
      %v1572 = vpack.c.b16 %v1260, %v1258
      %v1573 = vpack.c.b16 %v1263, %v1261
      %v1574 = vpack.c.b16 %v1264, %v1262
      %v1575 = vpack.c.b16 %v1267, %v1265
      %v1576 = vpack.c.b16 %v1268, %v1266
      %v1577 = vpack.c.b16 %v1271, %v1269
      %v1578 = vpack.c.b16 %v1272, %v1270
      %v1579 = vpack.c.b16 %v1275, %v1273
      %v1580 = vpack.c.b16 %v1276, %v1274
      %v1581 = vpack.c.b16 %v1279, %v1277
      %v1582 = vpack.c.b16 %v1280, %v1278
      %v1583 = vpack.c.b16 %v1283, %v1281
      %v1584 = vpack.c.b16 %v1284, %v1282
      %v1585 = vpack.c.b16 %v1287, %v1285
      %v1586 = vpack.c.b16 %v1288, %v1286
      %v1587 = vpack.c.b16 %v1291, %v1289
      %v1588 = vpack.c.b16 %v1292, %v1290
      %v1589 = vpack.c.b16 %v1295, %v1293
      %v1590 = vpack.c.b16 %v1296, %v1294
      %v1591 = vpack.c.b16 %v1299, %v1297
      %v1592 = vpack.c.b16 %v1300, %v1298
      %v1593 = vpack.c.b16 %v1303, %v1301
      %v1594 = vpack.c.b16 %v1304, %v1302
      %v1595 = vpack.c.b16 %v1307, %v1305
      %v1596 = vpack.c.b16 %v1308, %v1306
      %v1597 = vpack.c.b16 %v1311, %v1309
      %v1598 = vpack.c.b16 %v1312, %v1310
      %v1599 = vpack.c.b16 %v1315, %v1313
      %v1600 = vpack.c.b16 %v1316, %v1314
      %v1601 = vpack.c.b16 %v1319, %v1317
      %v1602 = vpack.c.b16 %v1320, %v1318
      %v1603 = vpack.c.b16 %v1323, %v1321
      %v1604 = vpack.c.b16 %v1324, %v1322
      %v1605 = vpack.c.b16 %v1327, %v1325
      %v1606 = vpack.c.b16 %v1328, %v1326
      %v1607 = vpack.c.b16 %v1331, %v1329
      %v1608 = vpack.c.b16 %v1332, %v1330
      %v1609 = vpack.c.b16 %v1335, %v1333
      %v1610 = vpack.c.b16 %v1336, %v1334
      %v1611 = vpack.c.b16 %v1339, %v1337
      %v1612 = vpack.c.b16 %v1340, %v1338
      %v1613 = vpack.c.b16 %v1343, %v1341
      %v1614 = vpack.c.b16 %v1344, %v1342
      %v1615 = vpack.c.b16 %v1347, %v1345
      %v1616 = vpack.c.b16 %v1348, %v1346
      %v1617 = vpack.c.b16 %v1351, %v1349
      %v1618 = vpack.c.b16 %v1352, %v1350
      %v1619 = vpack.c.b16 %v1355, %v1353
      %v1620 = vpack.c.b16 %v1356, %v1354
      %v1621 = vpack.c.b16 %v1359, %v1357
      %v1622 = vpack.c.b16 %v1360, %v1358
      %v1623 = vpack.c.b16 %v1363, %v1361
      %v1624 = vpack.c.b16 %v1364, %v1362
      %v1625 = vpack.c.b16 %v1367, %v1365
      %v1626 = vpack.c.b16 %v1368, %v1366
      %v1627 = vpack.c.b16 %v1371, %v1369
      %v1628 = vpack.c.b16 %v1372, %v1370
      %1885 = vmatprep.subr.bf16.mxu0 %v1388
      %1886 = vmatpush1.bf16.msra.mxu0 %v1387
      %1887 = vmatprep.subr.bf16.mxu0 %v1386
      %1888 = vmatpush1.bf16.msra.mxu0 %v1385
      %1889 = vmatprep.subr.bf16.mxu0 %v1384
      %1890 = vmatpush1.bf16.msra.mxu0 %v1383
      %1891 = vmatprep.subr.bf16.mxu0 %v1382
      %1892 = vmatpush1.bf16.msra.mxu0 %v1381
      %1893 = vmatprep.subr.bf16.mxu0 %v1380
      %1894 = vmatpush1.bf16.msra.mxu0 %v1379
      %1895 = vmatprep.subr.bf16.mxu0 %v1378
      %1896 = vmatpush1.bf16.msra.mxu0 %v1377
      %1897 = vmatprep.subr.bf16.mxu0 %v1376
      %1898 = vmatpush1.bf16.msra.mxu0 %v1375
      %1899 = vmatprep.subr.bf16.mxu0 %v1374
      %1900 = vmatpush1.bf16.msra.mxu0 %v1373
      %1901 = vmatprep.subr.bf16.mxu0 %v1404
      %1902 = vmatpush2.bf16.msra.mxu0 %v1403
      %1903 = vmatprep.subr.bf16.mxu0 %v1402
      %1904 = vmatpush2.bf16.msra.mxu0 %v1401
      %1905 = vmatprep.subr.bf16.mxu0 %v1400
      %1906 = vmatpush2.bf16.msra.mxu0 %v1399
      %1907 = vmatprep.subr.bf16.mxu0 %v1398
      %1908 = vmatpush2.bf16.msra.mxu0 %v1397
      %1909 = vmatprep.subr.bf16.mxu0 %v1396
      %1910 = vmatpush2.bf16.msra.mxu0 %v1395
      %1911 = vmatprep.subr.bf16.mxu0 %v1394
      %1912 = vmatpush2.bf16.msra.mxu0 %v1393
      %1913 = vmatprep.subr.bf16.mxu0 %v1392
      %1914 = vmatpush2.bf16.msra.mxu0 %v1391
      %1915 = vmatprep.subr.bf16.mxu0 %v1390
      %1916 = vmatpush2.bf16.msra.mxu0 %v1389
      %1917 = vmatprep.mubr.bf16.mxu0 %v574
      %1918 = vmatmul.mubr.bf16.gmra.mxu0 %v573
      %v1919 = vpop.f32.mrf.mxu0
      %v1920 = vadd.f32 0.0, %v1919
      %v1921 = vpop.f32.mrf.mxu0
      %v1922 = vadd.f32 0.0, %v1921
      %v1923 = vpop.f32.mrf.mxu0
      %v1924 = vpop.f32.mrf.mxu0
      %1925 = vdwg.mxu0
      %1926 = vmatprep.subr.bf16.mxu0 %v1420
      %1927 = vmatpush1.bf16.msra.mxu0 %v1419
      %1928 = vmatprep.subr.bf16.mxu0 %v1418
      %1929 = vmatpush1.bf16.msra.mxu0 %v1417
      %1930 = vmatprep.subr.bf16.mxu0 %v1416
      %1931 = vmatpush1.bf16.msra.mxu0 %v1415
      %1932 = vmatprep.subr.bf16.mxu0 %v1414
      %1933 = vmatpush1.bf16.msra.mxu0 %v1413
      %1934 = vmatprep.subr.bf16.mxu0 %v1412
      %1935 = vmatpush1.bf16.msra.mxu0 %v1411
      %1936 = vmatprep.subr.bf16.mxu0 %v1410
      %1937 = vmatpush1.bf16.msra.mxu0 %v1409
      %1938 = vmatprep.subr.bf16.mxu0 %v1408
      %1939 = vmatpush1.bf16.msra.mxu0 %v1407
      %1940 = vmatprep.subr.bf16.mxu0 %v1406
      %1941 = vmatpush1.bf16.msra.mxu0 %v1405
      %1942 = vmatprep.subr.bf16.mxu0 %v1436
      %1943 = vmatpush2.bf16.msra.mxu0 %v1435
      %1944 = vmatprep.subr.bf16.mxu0 %v1434
      %1945 = vmatpush2.bf16.msra.mxu0 %v1433
      %1946 = vmatprep.subr.bf16.mxu0 %v1432
      %1947 = vmatpush2.bf16.msra.mxu0 %v1431
      %1948 = vmatprep.subr.bf16.mxu0 %v1430
      %1949 = vmatpush2.bf16.msra.mxu0 %v1429
      %1950 = vmatprep.subr.bf16.mxu0 %v1428
      %1951 = vmatpush2.bf16.msra.mxu0 %v1427
      %1952 = vmatprep.subr.bf16.mxu0 %v1426
      %1953 = vmatpush2.bf16.msra.mxu0 %v1425
      %1954 = vmatprep.subr.bf16.mxu0 %v1424
      %1955 = vmatpush2.bf16.msra.mxu0 %v1423
      %1956 = vmatprep.subr.bf16.mxu0 %v1422
      %1957 = vmatpush2.bf16.msra.mxu0 %v1421
      %1958 = vmatprep.mubr.bf16.mxu0 %v576
      %1959 = vmatmul.mubr.bf16.gmra.mxu0 %v575
      %v1960 = vpop.f32.mrf.mxu0
      %v1961 = vadd.f32 %v1920, %v1960
      %v1962 = vpop.f32.mrf.mxu0
      %v1963 = vadd.f32 %v1922, %v1962
      %v1964 = vpop.f32.mrf.mxu0
      %v1965 = vpop.f32.mrf.mxu0
      %1966 = vdwg.mxu0
      %1967 = vmatprep.subr.bf16.mxu0 %v1452
      %1968 = vmatpush1.bf16.msra.mxu0 %v1451
      %1969 = vmatprep.subr.bf16.mxu0 %v1450
      %1970 = vmatpush1.bf16.msra.mxu0 %v1449
      %1971 = vmatprep.subr.bf16.mxu0 %v1448
      %1972 = vmatpush1.bf16.msra.mxu0 %v1447
      %1973 = vmatprep.subr.bf16.mxu0 %v1446
      %1974 = vmatpush1.bf16.msra.mxu0 %v1445
      %1975 = vmatprep.subr.bf16.mxu0 %v1444
      %1976 = vmatpush1.bf16.msra.mxu0 %v1443
      %1977 = vmatprep.subr.bf16.mxu0 %v1442
      %1978 = vmatpush1.bf16.msra.mxu0 %v1441
      %1979 = vmatprep.subr.bf16.mxu0 %v1440
      %1980 = vmatpush1.bf16.msra.mxu0 %v1439
      %1981 = vmatprep.subr.bf16.mxu0 %v1438
      %1982 = vmatpush1.bf16.msra.mxu0 %v1437
      %1983 = vmatprep.subr.bf16.mxu0 %v1468
      %1984 = vmatpush2.bf16.msra.mxu0 %v1467
      %1985 = vmatprep.subr.bf16.mxu0 %v1466
      %1986 = vmatpush2.bf16.msra.mxu0 %v1465
      %1987 = vmatprep.subr.bf16.mxu0 %v1464
      %1988 = vmatpush2.bf16.msra.mxu0 %v1463
      %1989 = vmatprep.subr.bf16.mxu0 %v1462
      %1990 = vmatpush2.bf16.msra.mxu0 %v1461
      %1991 = vmatprep.subr.bf16.mxu0 %v1460
      %1992 = vmatpush2.bf16.msra.mxu0 %v1459
      %1993 = vmatprep.subr.bf16.mxu0 %v1458
      %1994 = vmatpush2.bf16.msra.mxu0 %v1457
      %1995 = vmatprep.subr.bf16.mxu0 %v1456
      %1996 = vmatpush2.bf16.msra.mxu0 %v1455
      %1997 = vmatprep.subr.bf16.mxu0 %v1454
      %1998 = vmatpush2.bf16.msra.mxu0 %v1453
      %1999 = vmatprep.mubr.bf16.mxu0 %v578
      %2000 = vmatmul.mubr.bf16.gmra.mxu0 %v577
      %v2001 = vpop.f32.mrf.mxu0
      %v2002 = vadd.f32 %v1961, %v2001
      %v2003 = vpop.f32.mrf.mxu0
      %v2004 = vadd.f32 %v1963, %v2003
      %v2005 = vpop.f32.mrf.mxu0
      %v2006 = vpop.f32.mrf.mxu0
      %2007 = vdwg.mxu0
      %2008 = vmatprep.subr.bf16.mxu0 %v1484
      %2009 = vmatpush1.bf16.msra.mxu0 %v1483
      %2010 = vmatprep.subr.bf16.mxu0 %v1482
      %2011 = vmatpush1.bf16.msra.mxu0 %v1481
      %2012 = vmatprep.subr.bf16.mxu0 %v1480
      %2013 = vmatpush1.bf16.msra.mxu0 %v1479
      %2014 = vmatprep.subr.bf16.mxu0 %v1478
      %2015 = vmatpush1.bf16.msra.mxu0 %v1477
      %2016 = vmatprep.subr.bf16.mxu0 %v1476
      %2017 = vmatpush1.bf16.msra.mxu0 %v1475
      %2018 = vmatprep.subr.bf16.mxu0 %v1474
      %2019 = vmatpush1.bf16.msra.mxu0 %v1473
      %2020 = vmatprep.subr.bf16.mxu0 %v1472
      %2021 = vmatpush1.bf16.msra.mxu0 %v1471
      %2022 = vmatprep.subr.bf16.mxu0 %v1470
      %2023 = vmatpush1.bf16.msra.mxu0 %v1469
      %2024 = vmatprep.subr.bf16.mxu0 %v1500
      %2025 = vmatpush2.bf16.msra.mxu0 %v1499
      %2026 = vmatprep.subr.bf16.mxu0 %v1498
      %2027 = vmatpush2.bf16.msra.mxu0 %v1497
      %2028 = vmatprep.subr.bf16.mxu0 %v1496
      %2029 = vmatpush2.bf16.msra.mxu0 %v1495
      %2030 = vmatprep.subr.bf16.mxu0 %v1494
      %2031 = vmatpush2.bf16.msra.mxu0 %v1493
      %2032 = vmatprep.subr.bf16.mxu0 %v1492
      %2033 = vmatpush2.bf16.msra.mxu0 %v1491
      %2034 = vmatprep.subr.bf16.mxu0 %v1490
      %2035 = vmatpush2.bf16.msra.mxu0 %v1489
      %2036 = vmatprep.subr.bf16.mxu0 %v1488
      %2037 = vmatpush2.bf16.msra.mxu0 %v1487
      %2038 = vmatprep.subr.bf16.mxu0 %v1486
      %2039 = vmatpush2.bf16.msra.mxu0 %v1485
      %2040 = vmatprep.mubr.bf16.mxu0 %v580
      %2041 = vmatmul.mubr.bf16.gmra.mxu0 %v579
      %v2042 = vpop.f32.mrf.mxu0
      %v2043 = vadd.f32 %v2002, %v2042
      %v2044 = vpop.f32.mrf.mxu0
      %v2045 = vadd.f32 %v2004, %v2044
      %v2046 = vpop.f32.mrf.mxu0
      %v2047 = vpop.f32.mrf.mxu0
      %2048 = vdwg.mxu0
      %2049 = vmatprep.subr.bf16.mxu0 %v1516
      %2050 = vmatpush1.bf16.msra.mxu0 %v1515
      %2051 = vmatprep.subr.bf16.mxu0 %v1514
      %2052 = vmatpush1.bf16.msra.mxu0 %v1513
      %2053 = vmatprep.subr.bf16.mxu0 %v1512
      %2054 = vmatpush1.bf16.msra.mxu0 %v1511
      %2055 = vmatprep.subr.bf16.mxu0 %v1510
      %2056 = vmatpush1.bf16.msra.mxu0 %v1509
      %2057 = vmatprep.subr.bf16.mxu0 %v1508
      %2058 = vmatpush1.bf16.msra.mxu0 %v1507
      %2059 = vmatprep.subr.bf16.mxu0 %v1506
      %2060 = vmatpush1.bf16.msra.mxu0 %v1505
      %2061 = vmatprep.subr.bf16.mxu0 %v1504
      %2062 = vmatpush1.bf16.msra.mxu0 %v1503
      %2063 = vmatprep.subr.bf16.mxu0 %v1502
      %2064 = vmatpush1.bf16.msra.mxu0 %v1501
      %2065 = vmatprep.subr.bf16.mxu0 %v1532
      %2066 = vmatpush2.bf16.msra.mxu0 %v1531
      %2067 = vmatprep.subr.bf16.mxu0 %v1530
      %2068 = vmatpush2.bf16.msra.mxu0 %v1529
      %2069 = vmatprep.subr.bf16.mxu0 %v1528
      %2070 = vmatpush2.bf16.msra.mxu0 %v1527
      %2071 = vmatprep.subr.bf16.mxu0 %v1526
      %2072 = vmatpush2.bf16.msra.mxu0 %v1525
      %2073 = vmatprep.subr.bf16.mxu0 %v1524
      %2074 = vmatpush2.bf16.msra.mxu0 %v1523
      %2075 = vmatprep.subr.bf16.mxu0 %v1522
      %2076 = vmatpush2.bf16.msra.mxu0 %v1521
      %2077 = vmatprep.subr.bf16.mxu0 %v1520
      %2078 = vmatpush2.bf16.msra.mxu0 %v1519
      %2079 = vmatprep.subr.bf16.mxu0 %v1518
      %2080 = vmatpush2.bf16.msra.mxu0 %v1517
      %2081 = vmatprep.mubr.bf16.mxu0 %v582
      %2082 = vmatmul.mubr.bf16.gmra.mxu0 %v581
      %v2083 = vpop.f32.mrf.mxu0
      %v2084 = vadd.f32 %v2043, %v2083
      %v2085 = vpop.f32.mrf.mxu0
      %v2086 = vadd.f32 %v2045, %v2085
      %v2087 = vpop.f32.mrf.mxu0
      %v2088 = vpop.f32.mrf.mxu0
      %2089 = vdwg.mxu0
      %2090 = vmatprep.subr.bf16.mxu0 %v1548
      %2091 = vmatpush1.bf16.msra.mxu0 %v1547
      %2092 = vmatprep.subr.bf16.mxu0 %v1546
      %2093 = vmatpush1.bf16.msra.mxu0 %v1545
      %2094 = vmatprep.subr.bf16.mxu0 %v1544
      %2095 = vmatpush1.bf16.msra.mxu0 %v1543
      %2096 = vmatprep.subr.bf16.mxu0 %v1542
      %2097 = vmatpush1.bf16.msra.mxu0 %v1541
      %2098 = vmatprep.subr.bf16.mxu0 %v1540
      %2099 = vmatpush1.bf16.msra.mxu0 %v1539
      %2100 = vmatprep.subr.bf16.mxu0 %v1538
      %2101 = vmatpush1.bf16.msra.mxu0 %v1537
      %2102 = vmatprep.subr.bf16.mxu0 %v1536
      %2103 = vmatpush1.bf16.msra.mxu0 %v1535
      %2104 = vmatprep.subr.bf16.mxu0 %v1534
      %2105 = vmatpush1.bf16.msra.mxu0 %v1533
      %2106 = vmatprep.subr.bf16.mxu0 %v1564
      %2107 = vmatpush2.bf16.msra.mxu0 %v1563
      %2108 = vmatprep.subr.bf16.mxu0 %v1562
      %2109 = vmatpush2.bf16.msra.mxu0 %v1561
      %2110 = vmatprep.subr.bf16.mxu0 %v1560
      %2111 = vmatpush2.bf16.msra.mxu0 %v1559
      %2112 = vmatprep.subr.bf16.mxu0 %v1558
      %2113 = vmatpush2.bf16.msra.mxu0 %v1557
      %2114 = vmatprep.subr.bf16.mxu0 %v1556
      %2115 = vmatpush2.bf16.msra.mxu0 %v1555
      %2116 = vmatprep.subr.bf16.mxu0 %v1554
      %2117 = vmatpush2.bf16.msra.mxu0 %v1553
      %2118 = vmatprep.subr.bf16.mxu0 %v1552
      %2119 = vmatpush2.bf16.msra.mxu0 %v1551
      %2120 = vmatprep.subr.bf16.mxu0 %v1550
      %2121 = vmatpush2.bf16.msra.mxu0 %v1549
      %2122 = vmatprep.mubr.bf16.mxu0 %v584
      %2123 = vmatmul.mubr.bf16.gmra.mxu0 %v583
      %v2124 = vpop.f32.mrf.mxu0
      %v2125 = vadd.f32 %v2084, %v2124
      %v2126 = vpop.f32.mrf.mxu0
      %v2127 = vadd.f32 %v2086, %v2126
      %v2128 = vpop.f32.mrf.mxu0
      %v2129 = vpop.f32.mrf.mxu0
      %2130 = vdwg.mxu0
      %2131 = vmatprep.subr.bf16.mxu0 %v1580
      %2132 = vmatpush1.bf16.msra.mxu0 %v1579
      %2133 = vmatprep.subr.bf16.mxu0 %v1578
      %2134 = vmatpush1.bf16.msra.mxu0 %v1577
      %2135 = vmatprep.subr.bf16.mxu0 %v1576
      %2136 = vmatpush1.bf16.msra.mxu0 %v1575
      %2137 = vmatprep.subr.bf16.mxu0 %v1574
      %2138 = vmatpush1.bf16.msra.mxu0 %v1573
      %2139 = vmatprep.subr.bf16.mxu0 %v1572
      %2140 = vmatpush1.bf16.msra.mxu0 %v1571
      %2141 = vmatprep.subr.bf16.mxu0 %v1570
      %2142 = vmatpush1.bf16.msra.mxu0 %v1569
      %2143 = vmatprep.subr.bf16.mxu0 %v1568
      %2144 = vmatpush1.bf16.msra.mxu0 %v1567
      %2145 = vmatprep.subr.bf16.mxu0 %v1566
      %2146 = vmatpush1.bf16.msra.mxu0 %v1565
      %2147 = vmatprep.subr.bf16.mxu0 %v1596
      %2148 = vmatpush2.bf16.msra.mxu0 %v1595
      %2149 = vmatprep.subr.bf16.mxu0 %v1594
      %2150 = vmatpush2.bf16.msra.mxu0 %v1593
      %2151 = vmatprep.subr.bf16.mxu0 %v1592
      %2152 = vmatpush2.bf16.msra.mxu0 %v1591
      %2153 = vmatprep.subr.bf16.mxu0 %v1590
      %2154 = vmatpush2.bf16.msra.mxu0 %v1589
      %2155 = vmatprep.subr.bf16.mxu0 %v1588
      %2156 = vmatpush2.bf16.msra.mxu0 %v1587
      %2157 = vmatprep.subr.bf16.mxu0 %v1586
      %2158 = vmatpush2.bf16.msra.mxu0 %v1585
      %2159 = vmatprep.subr.bf16.mxu0 %v1584
      %2160 = vmatpush2.bf16.msra.mxu0 %v1583
      %2161 = vmatprep.subr.bf16.mxu0 %v1582
      %2162 = vmatpush2.bf16.msra.mxu0 %v1581
      %2163 = vmatprep.mubr.bf16.mxu0 %v586
      %2164 = vmatmul.mubr.bf16.gmra.mxu0 %v585
      %v2165 = vpop.f32.mrf.mxu0
      %v2166 = vadd.f32 %v2125, %v2165
      %v2167 = vpop.f32.mrf.mxu0
      %v2168 = vadd.f32 %v2127, %v2167
      %v2169 = vpop.f32.mrf.mxu0
      %v2170 = vpop.f32.mrf.mxu0
      %2171 = vdwg.mxu0
      %2172 = vmatprep.subr.bf16.mxu0 %v1612
      %2173 = vmatpush1.bf16.msra.mxu0 %v1611
      %2174 = vmatprep.subr.bf16.mxu0 %v1610
      %2175 = vmatpush1.bf16.msra.mxu0 %v1609
      %2176 = vmatprep.subr.bf16.mxu0 %v1608
      %2177 = vmatpush1.bf16.msra.mxu0 %v1607
      %2178 = vmatprep.subr.bf16.mxu0 %v1606
      %2179 = vmatpush1.bf16.msra.mxu0 %v1605
      %2180 = vmatprep.subr.bf16.mxu0 %v1604
      %2181 = vmatpush1.bf16.msra.mxu0 %v1603
      %2182 = vmatprep.subr.bf16.mxu0 %v1602
      %2183 = vmatpush1.bf16.msra.mxu0 %v1601
      %2184 = vmatprep.subr.bf16.mxu0 %v1600
      %2185 = vmatpush1.bf16.msra.mxu0 %v1599
      %2186 = vmatprep.subr.bf16.mxu0 %v1598
      %2187 = vmatpush1.bf16.msra.mxu0 %v1597
      %2188 = vmatprep.subr.bf16.mxu0 %v1628
      %2189 = vmatpush2.bf16.msra.mxu0 %v1627
      %2190 = vmatprep.subr.bf16.mxu0 %v1626
      %2191 = vmatpush2.bf16.msra.mxu0 %v1625
      %2192 = vmatprep.subr.bf16.mxu0 %v1624
      %2193 = vmatpush2.bf16.msra.mxu0 %v1623
      %2194 = vmatprep.subr.bf16.mxu0 %v1622
      %2195 = vmatpush2.bf16.msra.mxu0 %v1621
      %2196 = vmatprep.subr.bf16.mxu0 %v1620
      %2197 = vmatpush2.bf16.msra.mxu0 %v1619
      %2198 = vmatprep.subr.bf16.mxu0 %v1618
      %2199 = vmatpush2.bf16.msra.mxu0 %v1617
      %2200 = vmatprep.subr.bf16.mxu0 %v1616
      %2201 = vmatpush2.bf16.msra.mxu0 %v1615
      %2202 = vmatprep.subr.bf16.mxu0 %v1614
      %2203 = vmatpush2.bf16.msra.mxu0 %v1613
      %2204 = vmatprep.mubr.bf16.mxu0 %v588
      %2205 = vmatmul.mubr.bf16.gmra.mxu0 %v587
      %v2206 = vpop.f32.mrf.mxu0
      %v2207 = vadd.f32 %v2166, %v2206
      %v2208 = vpop.f32.mrf.mxu0
      %v2209 = vadd.f32 %v2168, %v2208
      %v2210 = vpop.f32.mrf.mxu0
      %v2211 = vpop.f32.mrf.mxu0
      %2212 = vdwg.mxu0
      %v2213 = vadd.f32 %v283, %v2207
      %v2214 = vadd.f32 %v284, %v2209
      %2215 = vst [vmem:[#allocation2] sm:$0xff] %v2213
      %2216 = vst [vmem:[#allocation2 + $0x8] sm:$0xff] %v2214
      %p2217 = scmp.eq.s32.totalorder %s21, 3
      // Predicated region
      $region45: #{discriminator_forward.7} parent=39 // pred_check
        %p2218 = pneg %p2217
      $region46: #{discriminator_forward.7} parent=39 // pred_check_branch
        %2220 = sbr.rel (%p2218) target = $region48
      $region47: #{discriminator_forward.7} parent=39 // pred_region
        %v2221 = vld [vmem:[#allocation2] sm:$0xff]
        %v2222 = vld [vmem:[#allocation2 + $0x8] sm:$0xff]
        %v2223 = vld [vmem:[%s2] sm:$0x3]
        %v2225 = vlaneseq
        %v2226 = vshrl.u32 %v2225, 7
        %v2227 = vsub.s32 0, %v2226
        %v2228 = vrot.slane %v2223, %v2227
        %v2229 = vlaneseq
        %v2230 = vshrl.u32 %v2229, 7
        %v2231 = vsub.s32 1, %v2230
        %v2232 = vrot.slane %v2223, %v2231
        %v2235 = vadd.f32 %v2221, %v2228
        %v2236 = vadd.f32 %v2222, %v2232
        %vm2237 = vcmp.ge.f32.partialorder %v2235, 0.0
        %vm2238 = vcmp.ge.f32.partialorder %v2236, 0.0
        %v2239 = vmul.f32 %v2235, 0.2
        %v2240 = vmul.f32 %v2236, 0.2
        %v2241 = vsel %vm2237, %v2235, %v2239
        %v2242 = vsel %vm2238, %v2236, %v2240
        %v2243 = vpack.c.bf16 %v2241, %v2241
        %v2244 = vpack.c.bf16 %v2242, %v2242
        %v2245 = vld [vmem:[%s3] sm:$0xf]
        %v2246 = vld [vmem:[%s3 + $0x4] sm:$0xf]
        %v2247 = vld [vmem:[%s3 + $0x8] sm:$0xf]
        %v2248 = vld [vmem:[%s3 + $0xc] sm:$0xf]
        %v2249 = vld [vmem:[%s3 + $0x10] sm:$0xf]
        %v2250 = vld [vmem:[%s3 + $0x14] sm:$0xf]
        %v2251 = vld [vmem:[%s3 + $0x18] sm:$0xf]
        %v2252 = vld [vmem:[%s3 + $0x1c] sm:$0xf]
        %v2253 = vld [vmem:[%s3 + $0x20] sm:$0xf]
        %v2254 = vld [vmem:[%s3 + $0x24] sm:$0xf]
        %v2255 = vld [vmem:[%s3 + $0x28] sm:$0xf]
        %v2256 = vld [vmem:[%s3 + $0x2c] sm:$0xf]
        %v2257 = vld [vmem:[%s3 + $0x30] sm:$0xf]
        %v2258 = vld [vmem:[%s3 + $0x34] sm:$0xf]
        %v2259 = vld [vmem:[%s3 + $0x38] sm:$0xf]
        %v2260 = vld [vmem:[%s3 + $0x3c] sm:$0xf]
        %v2261 = vld [vmem:[%s3 + $0x40] sm:$0xf]
        %v2262 = vld [vmem:[%s3 + $0x44] sm:$0xf]
        %v2263 = vld [vmem:[%s3 + $0x48] sm:$0xf]
        %v2264 = vld [vmem:[%s3 + $0x4c] sm:$0xf]
        %v2265 = vld [vmem:[%s3 + $0x50] sm:$0xf]
        %v2266 = vld [vmem:[%s3 + $0x54] sm:$0xf]
        %v2267 = vld [vmem:[%s3 + $0x58] sm:$0xf]
        %v2268 = vld [vmem:[%s3 + $0x5c] sm:$0xf]
        %v2269 = vld [vmem:[%s3 + $0x60] sm:$0xf]
        %v2270 = vld [vmem:[%s3 + $0x64] sm:$0xf]
        %v2271 = vld [vmem:[%s3 + $0x68] sm:$0xf]
        %v2272 = vld [vmem:[%s3 + $0x6c] sm:$0xf]
        %v2273 = vld [vmem:[%s3 + $0x70] sm:$0xf]
        %v2274 = vld [vmem:[%s3 + $0x74] sm:$0xf]
        %v2275 = vld [vmem:[%s3 + $0x78] sm:$0xf]
        %v2276 = vld [vmem:[%s3 + $0x7c] sm:$0xf]
        %v2277 = vld [vmem:[%s4] sm:$0x1]
        %v2279 = vlaneseq
        %v2280 = vshrl.u32 %v2279, 7
        %v2281 = vsub.s32 0, %v2280
        %v2282 = vrot.slane %v2277, %v2281
        %v2316 = vunpack.c.l.b16 %v2245
        %v2317 = vunpack.c.l.b16 %v2246
        %v2318 = vunpack.c.l.b16 %v2247
        %v2319 = vunpack.c.l.b16 %v2248
        %v2320 = vunpack.c.l.b16 %v2249
        %v2321 = vunpack.c.l.b16 %v2250
        %v2322 = vunpack.c.l.b16 %v2251
        %v2323 = vunpack.c.l.b16 %v2252
        %v2324 = vunpack.c.l.b16 %v2253
        %v2325 = vunpack.c.l.b16 %v2254
        %v2326 = vunpack.c.l.b16 %v2255
        %v2327 = vunpack.c.l.b16 %v2256
        %v2328 = vunpack.c.l.b16 %v2257
        %v2329 = vunpack.c.l.b16 %v2258
        %v2330 = vunpack.c.l.b16 %v2259
        %v2331 = vunpack.c.l.b16 %v2260
        %v2332 = vunpack.c.l.b16 %v2261
        %v2333 = vunpack.c.l.b16 %v2262
        %v2334 = vunpack.c.l.b16 %v2263
        %v2335 = vunpack.c.l.b16 %v2264
        %v2336 = vunpack.c.l.b16 %v2265
        %v2337 = vunpack.c.l.b16 %v2266
        %v2338 = vunpack.c.l.b16 %v2267
        %v2339 = vunpack.c.l.b16 %v2268
        %v2340 = vunpack.c.l.b16 %v2269
        %v2341 = vunpack.c.l.b16 %v2270
        %v2342 = vunpack.c.l.b16 %v2271
        %v2343 = vunpack.c.l.b16 %v2272
        %v2344 = vunpack.c.l.b16 %v2273
        %v2345 = vunpack.c.l.b16 %v2274
        %v2346 = vunpack.c.l.b16 %v2275
        %v2347 = vunpack.c.l.b16 %v2276
        %v2348 = vpack.c.b16 %v2317, %v2316
        %v2349 = vpack.c.b16 %v2319, %v2318
        %v2350 = vpack.c.b16 %v2321, %v2320
        %v2351 = vpack.c.b16 %v2323, %v2322
        %v2352 = vpack.c.b16 %v2325, %v2324
        %v2353 = vpack.c.b16 %v2327, %v2326
        %v2354 = vpack.c.b16 %v2329, %v2328
        %v2355 = vpack.c.b16 %v2331, %v2330
        %v2356 = vpack.c.b16 %v2333, %v2332
        %v2357 = vpack.c.b16 %v2335, %v2334
        %v2358 = vpack.c.b16 %v2337, %v2336
        %v2359 = vpack.c.b16 %v2339, %v2338
        %v2360 = vpack.c.b16 %v2341, %v2340
        %v2361 = vpack.c.b16 %v2343, %v2342
        %v2362 = vpack.c.b16 %v2345, %v2344
        %v2363 = vpack.c.b16 %v2347, %v2346
        %2380 = vmatprep.subr.bf16.mxu0 0
        %2381 = vmatpush1.bf16.msra.mxu0 %v2355
        %2382 = vmatprep.subr.bf16.mxu0 0
        %2383 = vmatpush1.bf16.msra.mxu0 %v2354
        %2384 = vmatprep.subr.bf16.mxu0 0
        %2385 = vmatpush1.bf16.msra.mxu0 %v2353
        %2386 = vmatprep.subr.bf16.mxu0 0
        %2387 = vmatpush1.bf16.msra.mxu0 %v2352
        %2388 = vmatprep.subr.bf16.mxu0 0
        %2389 = vmatpush1.bf16.msra.mxu0 %v2351
        %2390 = vmatprep.subr.bf16.mxu0 0
        %2391 = vmatpush1.bf16.msra.mxu0 %v2350
        %2392 = vmatprep.subr.bf16.mxu0 0
        %2393 = vmatpush1.bf16.msra.mxu0 %v2349
        %2394 = vmatprep.subr.bf16.mxu0 0
        %2395 = vmatpush1.bf16.msra.mxu0 %v2348
        %2396 = vmatprep.subr.bf16.mxu0 0
        %2397 = vmatpush2.bf16.msra.mxu0 %v2363
        %2398 = vmatprep.subr.bf16.mxu0 0
        %2399 = vmatpush2.bf16.msra.mxu0 %v2362
        %2400 = vmatprep.subr.bf16.mxu0 0
        %2401 = vmatpush2.bf16.msra.mxu0 %v2361
        %2402 = vmatprep.subr.bf16.mxu0 0
        %2403 = vmatpush2.bf16.msra.mxu0 %v2360
        %2404 = vmatprep.subr.bf16.mxu0 0
        %2405 = vmatpush2.bf16.msra.mxu0 %v2359
        %2406 = vmatprep.subr.bf16.mxu0 0
        %2407 = vmatpush2.bf16.msra.mxu0 %v2358
        %2408 = vmatprep.subr.bf16.mxu0 0
        %2409 = vmatpush2.bf16.msra.mxu0 %v2357
        %2410 = vmatprep.subr.bf16.mxu0 0
        %2411 = vmatpush2.bf16.msra.mxu0 %v2356
        %2412 = vmatprep.mubr.bf16.mxu0 %v2244
        %2413 = vmatmul.mubr.bf16.gmra.mxu0 %v2243
        %v2414 = vpop.f32.mrf.mxu0
        %v2415 = vadd.f32 %v2282, %v2414
        %v2416 = vpop.f32.mrf.mxu0
        %v2417 = vpop.f32.mrf.mxu0
        %v2418 = vpop.f32.mrf.mxu0
        %2419 = vdwg.mxu0
        %2420 = vst [vmem:[%s275] sm:$0xff] %v2415
      $region48: #{discriminator_forward.7} parent=39 // pred_fallthru
        _
      %p2421 = scmp.lt.s32.totalorder %s20, 0
      %s2422 = scalar_select %p2421, %s20, 0
      %s2423 = smul.addr %s2422, 8
      %s2424 = scalar_lea.vmem %s5, %s2423
      // Predicated region
      $region49: #{discriminator_forward.7} parent=39 // pred_check
        %p2425 = pneg %p163
      $region50: #{discriminator_forward.7} parent=39 // pred_check_branch
        %2427 = sbr.rel (%p2425) target = $region52
      $region51: #{discriminator_forward.7} parent=39 // pred_region
        _
      $region52: #{discriminator_forward.7} parent=39 // pred_fallthru
        _
      // Predicated region
      $region53: #{discriminator_forward.7} parent=39 // pred_check
        %p2428 = pneg %p163
      $region54: #{discriminator_forward.7} parent=39 // pred_check_branch
        %2430 = sbr.rel (%p2428) target = $region56
      $region55: #{discriminator_forward.7} parent=39 // pred_region
        %p2431 = scmp.lt.s32.totalorder %s20, 0
        %s2432 = scalar_select %p2431, %s20, 0
        %s2433 = smul.addr %s2432, 8
        %s2434 = scalar_lea.vmem %s5, %s2433
      $region56: #{discriminator_forward.7} parent=39 // pred_fallthru
        _
    $region40: #{discriminator_forward.7} parent=5 // pred_fallthru
      _
    %p2435 = scmp.le.s32.totalorder 2, %s11
    // Predicated region
    $region57: #{discriminator_forward.7} parent=5 // pred_check
      %p2436 = pneg %p2435
    $region58: #{discriminator_forward.7} parent=5 // pred_check_branch
      %2438 = sbr.rel (%p2436) target = $region60
    $region59: #{discriminator_forward.7} parent=5 // pred_region
      %s2439 = ssub.s32 %s11, 2
    $region60: #{discriminator_forward.7} parent=5 // pred_fallthru
      _
  $region6: #{discriminator_forward.7} parent=0 // loop_footer
    %s15 = sadd.s32 1, %s11
  $region7: #{discriminator_forward.7} parent=0 // loop_footer_branch
    %10 = sbr.rel target = $region3
  $region8: #{discriminator_forward.7} parent=0 // loop_exit
    _

</llo_original>
